<compile_context>
chip_gen: v5e
topology: v5e:2x2
jax: 0.10.0
libtpu: 0.0.40
codegen_flags: <defaults>
</compile_context>

<pallas_src>
import jax
import jax.numpy as jnp
from jax import lax
from jax.experimental import pallas as pl
from jax.experimental.pallas import tpu as pltpu

KSIZE = 5
CENTER = KSIZE // 2

# The 13 causal taps of PixelCNN mask-B (hidden=True -> center tap included),
# in kh-major order (shared by the weight packer and the kernel loop).
CAUSAL_TAPS = tuple(
    (kh, kw)
    for kh in range(KSIZE)
    for kw in range(KSIZE)
    if (kh < CENTER) or (kh == CENTER and kw <= CENTER)
)
NTAPS = len(CAUSAL_TAPS)  # 13


# ---------------------------- Pallas kernel ----------------------------

def _make_kernel(B_BLK, H, WC, C, T):
    """Fused kernel: conv1 -> PReLU -> conv2 -> PReLU -> + x, lane-packed."""
    M = B_BLK * H
    KTOT = T * WC

    def conv_prelu(x, w_ref, b_ref, a_ref, row_ids, xk_ref):
        # Build the (M, T*WC) tap matrix in a bf16 VMEM scratch: one lane roll
        # (+ one sublane roll / row mask per kh row) per causal tap, then a
        # SINGLE long-K MXU matmul replaces the 13 per-tap dots (no per-tap
        # accumulator adds, no 13 MXU result drains).
        xh = None
        prev_kh = None
        for t, (kh, kw) in enumerate(CAUSAL_TAPS):
            if kh != prev_kh:                  # one sublane roll + mask per kh row
                dh = kh - CENTER               # dh in {-2, -1, 0}
                if dh == 0:
                    xh = x
                else:
                    # rows whose per-image row index < -dh would read above the
                    # image (or, with batch stacking, leak rows from the
                    # previous image) -> zero them.
                    xh = jnp.where(row_ids >= -dh,
                                   pltpu.roll(x, shift=-dh, axis=0), 0.0)
                prev_kh = kh
            dw = kw - CENTER                   # dw in {-2..2}
            xw = xh if dw == 0 else pltpu.roll(xh, shift=(-dw * C) % WC, axis=1)
            xk_ref[:, t * WC:(t + 1) * WC] = xw.astype(jnp.bfloat16)
        # (M, 13*WC) @ (13*WC, WC): block-diagonal packed weight performs the
        # c_in -> c_out contraction per spatial column on the MXU; mask-B,
        # group structure and W-boundary zeroing are baked into w_ref.
        acc = jnp.dot(xk_ref[...], w_ref[...],
                      preferred_element_type=jnp.float32)
        acc = acc + b_ref[...]                 # single (M, WC) f32 bias add
        alpha = a_ref[...]                     # (1, WC) PReLU slope
        return jnp.where(acc >= 0.0, acc, alpha * acc)

    def kernel(x_ref, w1_ref, b1_ref, a1_ref, w2_ref, b2_ref, a2_ref, o_ref,
               xk_ref):
        # Per-image row index (iota % H): keeps the H-boundary mask correct
        # when B_BLK images are stacked into the matmul M dimension.
        row_ids = lax.broadcasted_iota(jnp.int32, (M, 1), 0) % H
        x = x_ref[...].reshape(M, WC).astype(jnp.float32)
        y = conv_prelu(x, w1_ref, b1_ref, a1_ref, row_ids, xk_ref)  # EntropyConv 1
        y = conv_prelu(y, w2_ref, b2_ref, a2_ref, row_ids, xk_ref)  # EntropyConv 2
        o_ref[...] = (y + x).astype(o_ref.dtype).reshape(B_BLK, H, WC)

    return kernel


def entropy_residual_block(x_nchw, packed_params, m_target=128):
    """x_nchw: (N, C, H, W) float32; packed_params from pack_conv_params."""
    N, C, H, W = x_nchw.shape
    WC = W * C
    assert WC % 128 == 0, "lane-packed layout assumes W*C is a multiple of 128"
    w1, b1, a1, w2, b2, a2 = packed_params
    T = NTAPS
    KTOT = T * WC

    # Batch-stack images into the matmul M dimension: largest divisor of N with
    # B_BLK*H <= m_target (128 saturates the v5e MXU; 256 is fine on v6e/v7x
    # given vreg/VMEM headroom).
    B_BLK = 1
    for cand in range(1, N + 1):
        if N % cand == 0 and cand * H <= m_target:
            B_BLK = cand
    M = B_BLK * H

    # NCHW -> lane-packed (N, H, W*C)
    x = jnp.transpose(x_nchw, (0, 2, 3, 1)).reshape(N, H, WC)

    kernel = _make_kernel(B_BLK, H, WC, C, T)
    grid_spec = pltpu.PrefetchScalarGridSpec(
        num_scalar_prefetch=0,
        grid=(N // B_BLK,),
        in_specs=[
            pl.BlockSpec((B_BLK, H, WC), lambda n: (n, 0, 0)),   # x
            pl.BlockSpec((KTOT, WC), lambda n: (0, 0)),          # w1 taps (bf16)
            pl.BlockSpec((1, WC), lambda n: (0, 0)),             # b1
            pl.BlockSpec((1, WC), lambda n: (0, 0)),             # alpha1
            pl.BlockSpec((KTOT, WC), lambda n: (0, 0)),          # w2 taps (bf16)
            pl.BlockSpec((1, WC), lambda n: (0, 0)),             # b2
            pl.BlockSpec((1, WC), lambda n: (0, 0)),             # alpha2
        ],
        out_specs=pl.BlockSpec((B_BLK, H, WC), lambda n: (n, 0, 0)),
        scratch_shapes=[pltpu.VMEM((M, KTOT), jnp.bfloat16)],    # tap matrix
    )
    out = pl.pallas_call(
        kernel,
        out_shape=jax.ShapeDtypeStruct((N, H, WC), x.dtype),
        grid_spec=grid_spec,
        compiler_params=pltpu.CompilerParams(
            dimension_semantics=("parallel",)),
    )(x, w1, b1, a1, w2, b2, a2)

    # lane-packed -> NCHW
    return jnp.transpose(out.reshape(N, H, W, C), (0, 3, 1, 2))


# ---------------- parameter construction (plain JAX glue) ----------------

def make_mask_b(ksize=KSIZE):
    kh = jnp.arange(ksize)[:, None]
    kw = jnp.arange(ksize)[None, :]
    return ((kh < CENTER) | ((kh == CENTER) & (kw <= CENTER))).astype(jnp.float32)


def init_conv_params(key, ngroups, cpn, ksize=KSIZE):
    C = ngroups * cpn
    k1, k2 = jax.random.split(key)
    # PyTorch grouped-conv weight layout: (C_out, C_in_per_group, kH, kW)
    w = jax.random.normal(k1, (C, cpn, ksize, ksize), jnp.float32) * 0.1
    b = jax.random.normal(k2, (C,), jnp.float32) * 0.1
    alpha = jnp.full((C,), 0.25, jnp.float32)      # nn.PReLU default init
    return w, b, alpha


def pack_conv_params(w, b, alpha, ngroups, cpn, W):
    """PyTorch grouped-conv params -> lane-packed Pallas params.

    Returns:
      w_taps:       (T*W*C, W*C) bf16 — the 13 causal taps' block-diagonal
                    packed weights stacked along K (mask-B, group structure and
                    W-boundary zeroing baked in)
      b_packed:     (1, W*C) f32
      alpha_packed: (1, W*C) f32
    """
    C = ngroups * cpn
    WC = W * C
    w_idx = jnp.arange(W)
    taps = []
    for kh, kw in CAUSAL_TAPS:
        wt = jnp.zeros((C, C), jnp.float32)                  # (C_in, C_out)
        for g in range(ngroups):
            blk = w[g * cpn:(g + 1) * cpn, :, kh, kw]        # (cout_pg, cin_pg)
            wt = wt.at[g * cpn:(g + 1) * cpn, g * cpn:(g + 1) * cpn].set(blk.T)
        dw = kw - CENTER
        valid = ((w_idx + dw >= 0) & (w_idx + dw < W)).astype(jnp.float32)
        taps.append(jnp.kron(jnp.diag(valid), wt))           # (W*C, W*C)
    w_taps = jnp.concatenate(taps, axis=0).astype(jnp.bfloat16)  # (T*WC, WC)
    b_packed = jnp.tile(b, W).reshape(1, WC)
    a_packed = jnp.tile(alpha, W).reshape(1, WC)
    return w_taps, b_packed, a_packed


# ---------------- pure-JAX reference (for validation) ----------------

def ref_forward(x_nchw, raw_params, ngroups):
    mask = make_mask_b()
    x = jnp.transpose(x_nchw, (0, 2, 3, 1))

    def conv_prelu(x, w, b, alpha):
        wm = w * mask[None, None, :, :]
        w_hwio = jnp.transpose(wm, (2, 3, 1, 0))
        y = lax.conv_general_dilated(
            x, w_hwio, (1, 1), ((CENTER, CENTER), (CENTER, CENTER)),
            dimension_numbers=('NHWC', 'HWIO', 'NHWC'),
            feature_group_count=ngroups)
        y = y + b[None, None, None, :]
        return jnp.where(y >= 0, y, alpha[None, None, None, :] * y)

    (w1, b1, a1), (w2, b2, a2) = raw_params
    y = conv_prelu(conv_prelu(x, w1, b1, a1), w2, b2, a2) + x
    return jnp.transpose(y, (0, 3, 1, 2))


if __name__ == "__main__":
    ngroups, cpn = 2, 4              # C = 8
    N, H, W = 2, 16, 16              # W * C = 128 -> exactly one lane-width
    C = ngroups * cpn

    key = jax.random.PRNGKey(0)
    kx, k1, k2 = jax.random.split(key, 3)
    x = jax.random.normal(kx, (N, C, H, W), jnp.float32)

    w1, b1, a1 = init_conv_params(k1, ngroups, cpn)
    w2, b2, a2 = init_conv_params(k2, ngroups, cpn)

    packed = (*pack_conv_params(w1, b1, a1, ngroups, cpn, W),
              *pack_conv_params(w2, b2, a2, ngroups, cpn, W))

    y = entropy_residual_block(x, packed)
    jax.block_until_ready(y)

    y_ref = ref_forward(x, ((w1, b1, a1), (w2, b2, a2)), ngroups)
    # Matmul operands are bf16 (f32 accumulation) per the perf review, so the
    # tolerance vs the f32 conv reference is correspondingly loosened.
    max_err = float(jnp.max(jnp.abs(y - y_ref)))
    assert jnp.allclose(y, y_ref, atol=5e-2, rtol=5e-2), max_err

    print("KERNEL_OK")
</pallas_src>

<mosaic_0001>
module attributes {stable_mosaic.version = 11 : i64} {
  func.func @kernel(%arg0: i32, %arg1: memref<2x16x128xf32, #tpu.memory_space<vmem>>, %arg2: memref<1664x128xbf16, #tpu.memory_space<vmem>>, %arg3: memref<1x128xf32, #tpu.memory_space<vmem>>, %arg4: memref<1x128xf32, #tpu.memory_space<vmem>>, %arg5: memref<1664x128xbf16, #tpu.memory_space<vmem>>, %arg6: memref<1x128xf32, #tpu.memory_space<vmem>>, %arg7: memref<1x128xf32, #tpu.memory_space<vmem>>, %arg8: memref<2x16x128xf32, #tpu.memory_space<vmem>>, %arg9: memref<32x1664xbf16, #tpu.memory_space<vmem>>) attributes {dimension_semantics = [#tpu.dimension_semantics<parallel>], iteration_bounds = array<i64: 1>, scalar_prefetch = 0 : i64, scratch_operands = 1 : i64, tpu.core_type = #tpu.core_type<tc>, window_params = [{transform_indices = @transform_0, window_bounds = array<i64: 2, 16, 128>}, {pipeline_mode = #tpu.pipeline_mode<synchronous>, transform_indices = @transform_1, window_bounds = array<i64: 1664, 128>}, {pipeline_mode = #tpu.pipeline_mode<synchronous>, transform_indices = @transform_2, window_bounds = array<i64: 1, 128>}, {pipeline_mode = #tpu.pipeline_mode<synchronous>, transform_indices = @transform_3, window_bounds = array<i64: 1, 128>}, {pipeline_mode = #tpu.pipeline_mode<synchronous>, transform_indices = @transform_4, window_bounds = array<i64: 1664, 128>}, {pipeline_mode = #tpu.pipeline_mode<synchronous>, transform_indices = @transform_5, window_bounds = array<i64: 1, 128>}, {pipeline_mode = #tpu.pipeline_mode<synchronous>, transform_indices = @transform_6, window_bounds = array<i64: 1, 128>}, {transform_indices = @transform_7, window_bounds = array<i64: 2, 16, 128>}]} {
    %0 = tpu.iota {dimensions = array<i32: 0>} : vector<32x1xi32>
    %c16_i32 = arith.constant 16 : i32
    %c0_i32 = arith.constant 0 : i32
    %1 = arith.cmpi eq, %c16_i32, %c0_i32 : i32
    %c1_i32 = arith.constant 1 : i32
    %2 = arith.select %1, %c1_i32, %c16_i32 : i32
    %3 = vector.broadcast %2 : i32 to vector<32x1xi32>
    %4 = arith.remsi %0, %3 : vector<32x1xi32>
    %c0_i32_0 = arith.constant 0 : i32
    %5 = vector.broadcast %c0_i32_0 : i32 to vector<32x1xi32>
    %6 = arith.cmpi ne, %4, %5 : vector<32x1xi32>
    %c0_i32_1 = arith.constant 0 : i32
    %7 = vector.broadcast %c0_i32_1 : i32 to vector<32x1xi32>
    %8 = arith.cmpi slt, %4, %7 : vector<32x1xi32>
    %c0_i32_2 = arith.constant 0 : i32
    %9 = arith.cmpi slt, %2, %c0_i32_2 : i32
    %10 = vector.broadcast %9 : i1 to vector<32x1xi1>
    %11 = vector.broadcast %10 : vector<32x1xi1> to vector<32x1xi1>
    %12 = arith.xori %8, %11 : vector<32x1xi1>
    %13 = arith.andi %12, %6 : vector<32x1xi1>
    %14 = vector.broadcast %2 : i32 to vector<32x1xi32>
    %15 = arith.addi %4, %14 : vector<32x1xi32>
    %16 = arith.select %13, %15, %4 : vector<32x1xi1>, vector<32x1xi32>
    %c0 = arith.constant 0 : index
    %c0_3 = arith.constant 0 : index
    %c0_4 = arith.constant 0 : index
    %17 = vector.load %arg1[%c0, %c0_3, %c0_4] : memref<2x16x128xf32, #tpu.memory_space<vmem>>, vector<2x16x128xf32>
    %18 = vector.shape_cast %17 : vector<2x16x128xf32> to vector<32x128xf32>
    %c2_i32 = arith.constant 2 : i32
    %19 = vector.broadcast %c2_i32 : i32 to vector<32x1xi32>
    %20 = arith.cmpi sge, %16, %19 : vector<32x1xi32>
    %c2_i32_5 = arith.constant 2 : i32
    %21 = tpu.dynamic_rotate %18 by %c2_i32_5 dim 0 : vector<32x128xf32>, i32 -> vector<32x128xf32>
    %cst = arith.constant 0.000000e+00 : f32
    %22 = vector.shape_cast %20 : vector<32x1xi1> to vector<32x1xi1>
    %23 = vector.broadcast %22 : vector<32x1xi1> to vector<32x128xi1>
    %24 = vector.broadcast %cst : f32 to vector<32x128xf32>
    %25 = arith.select %23, %21, %24 : vector<32x128xi1>, vector<32x128xf32>
    %c16_i32_6 = arith.constant 16 : i32
    %26 = tpu.dynamic_rotate %25 by %c16_i32_6 dim 1 : vector<32x128xf32>, i32 -> vector<32x128xf32>
    %27 = arith.truncf %26 : vector<32x128xf32> to vector<32x128xbf16>
    %c0_7 = arith.constant 0 : index
    %c0_8 = arith.constant 0 : index
    %28 = vector.load %arg9[%c0_7, %c0_8] : memref<32x1664xbf16, #tpu.memory_space<vmem>>, vector<32x128xbf16>
    tpu.vector_store %arg9[%c0_7, %c0_8], %27 {strides = array<i32>} : memref<32x1664xbf16, #tpu.memory_space<vmem>>, vector<32x128xbf16>,
    %c8_i32 = arith.constant 8 : i32
    %29 = tpu.dynamic_rotate %25 by %c8_i32 dim 1 : vector<32x128xf32>, i32 -> vector<32x128xf32>
    %30 = arith.truncf %29 : vector<32x128xf32> to vector<32x128xbf16>
    %c0_9 = arith.constant 0 : index
    %c128 = arith.constant 128 : index
    %31 = vector.load %arg9[%c0_9, %c128] : memref<32x1664xbf16, #tpu.memory_space<vmem>>, vector<32x128xbf16>
    tpu.vector_store %arg9[%c0_9, %c128], %30 {strides = array<i32>} : memref<32x1664xbf16, #tpu.memory_space<vmem>>, vector<32x128xbf16>,
    %32 = arith.truncf %25 : vector<32x128xf32> to vector<32x128xbf16>
    %c0_10 = arith.constant 0 : index
    %c256 = arith.constant 256 : index
    %33 = vector.load %arg9[%c0_10, %c256] : memref<32x1664xbf16, #tpu.memory_space<vmem>>, vector<32x128xbf16>
    tpu.vector_store %arg9[%c0_10, %c256], %32 {strides = array<i32>} : memref<32x1664xbf16, #tpu.memory_space<vmem>>, vector<32x128xbf16>,
    %c120_i32 = arith.constant 120 : i32
    %34 = tpu.dynamic_rotate %25 by %c120_i32 dim 1 : vector<32x128xf32>, i32 -> vector<32x128xf32>
    %35 = arith.truncf %34 : vector<32x128xf32> to vector<32x128xbf16>
    %c0_11 = arith.constant 0 : index
    %c384 = arith.constant 384 : index
    %36 = vector.load %arg9[%c0_11, %c384] : memref<32x1664xbf16, #tpu.memory_space<vmem>>, vector<32x128xbf16>
    tpu.vector_store %arg9[%c0_11, %c384], %35 {strides = array<i32>} : memref<32x1664xbf16, #tpu.memory_space<vmem>>, vector<32x128xbf16>,
    %c112_i32 = arith.constant 112 : i32
    %37 = tpu.dynamic_rotate %25 by %c112_i32 dim 1 : vector<32x128xf32>, i32 -> vector<32x128xf32>
    %38 = arith.truncf %37 : vector<32x128xf32> to vector<32x128xbf16>
    %c0_12 = arith.constant 0 : index
    %c512 = arith.constant 512 : index
    %39 = vector.load %arg9[%c0_12, %c512] : memref<32x1664xbf16, #tpu.memory_space<vmem>>, vector<32x128xbf16>
    tpu.vector_store %arg9[%c0_12, %c512], %38 {strides = array<i32>} : memref<32x1664xbf16, #tpu.memory_space<vmem>>, vector<32x128xbf16>,
    %c1_i32_13 = arith.constant 1 : i32
    %40 = vector.broadcast %c1_i32_13 : i32 to vector<32x1xi32>
    %41 = arith.cmpi sge, %16, %40 : vector<32x1xi32>
    %c1_i32_14 = arith.constant 1 : i32
    %42 = tpu.dynamic_rotate %18 by %c1_i32_14 dim 0 : vector<32x128xf32>, i32 -> vector<32x128xf32>
    %cst_15 = arith.constant 0.000000e+00 : f32
    %43 = vector.shape_cast %41 : vector<32x1xi1> to vector<32x1xi1>
    %44 = vector.broadcast %43 : vector<32x1xi1> to vector<32x128xi1>
    %45 = vector.broadcast %cst_15 : f32 to vector<32x128xf32>
    %46 = arith.select %44, %42, %45 : vector<32x128xi1>, vector<32x128xf32>
    %c16_i32_16 = arith.constant 16 : i32
    %47 = tpu.dynamic_rotate %46 by %c16_i32_16 dim 1 : vector<32x128xf32>, i32 -> vector<32x128xf32>
    %48 = arith.truncf %47 : vector<32x128xf32> to vector<32x128xbf16>
    %c0_17 = arith.constant 0 : index
    %c640 = arith.constant 640 : index
    %49 = vector.load %arg9[%c0_17, %c640] : memref<32x1664xbf16, #tpu.memory_space<vmem>>, vector<32x128xbf16>
    tpu.vector_store %arg9[%c0_17, %c640], %48 {strides = array<i32>} : memref<32x1664xbf16, #tpu.memory_space<vmem>>, vector<32x128xbf16>,
    %c8_i32_18 = arith.constant 8 : i32
    %50 = tpu.dynamic_rotate %46 by %c8_i32_18 dim 1 : vector<32x128xf32>, i32 -> vector<32x128xf32>
    %51 = arith.truncf %50 : vector<32x128xf32> to vector<32x128xbf16>
    %c0_19 = arith.constant 0 : index
    %c768 = arith.constant 768 : index
    %52 = vector.load %arg9[%c0_19, %c768] : memref<32x1664xbf16, #tpu.memory_space<vmem>>, vector<32x128xbf16>
    tpu.vector_store %arg9[%c0_19, %c768], %51 {strides = array<i32>} : memref<32x1664xbf16, #tpu.memory_space<vmem>>, vector<32x128xbf16>,
    %53 = arith.truncf %46 : vector<32x128xf32> to vector<32x128xbf16>
    %c0_20 = arith.constant 0 : index
    %c896 = arith.constant 896 : index
    %54 = vector.load %arg9[%c0_20, %c896] : memref<32x1664xbf16, #tpu.memory_space<vmem>>, vector<32x128xbf16>
    tpu.vector_store %arg9[%c0_20, %c896], %53 {strides = array<i32>} : memref<32x1664xbf16, #tpu.memory_space<vmem>>, vector<32x128xbf16>,
    %c120_i32_21 = arith.constant 120 : i32
    %55 = tpu.dynamic_rotate %46 by %c120_i32_21 dim 1 : vector<32x128xf32>, i32 -> vector<32x128xf32>
    %56 = arith.truncf %55 : vector<32x128xf32> to vector<32x128xbf16>
    %c0_22 = arith.constant 0 : index
    %c1024 = arith.constant 1024 : index
    %57 = vector.load %arg9[%c0_22, %c1024] : memref<32x1664xbf16, #tpu.memory_space<vmem>>, vector<32x128xbf16>
    tpu.vector_store %arg9[%c0_22, %c1024], %56 {strides = array<i32>} : memref<32x1664xbf16, #tpu.memory_space<vmem>>, vector<32x128xbf16>,
    %c112_i32_23 = arith.constant 112 : i32
    %58 = tpu.dynamic_rotate %46 by %c112_i32_23 dim 1 : vector<32x128xf32>, i32 -> vector<32x128xf32>
    %59 = arith.truncf %58 : vector<32x128xf32> to vector<32x128xbf16>
    %c0_24 = arith.constant 0 : index
    %c1152 = arith.constant 1152 : index
    %60 = vector.load %arg9[%c0_24, %c1152] : memref<32x1664xbf16, #tpu.memory_space<vmem>>, vector<32x128xbf16>
    tpu.vector_store %arg9[%c0_24, %c1152], %59 {strides = array<i32>} : memref<32x1664xbf16, #tpu.memory_space<vmem>>, vector<32x128xbf16>,
    %c16_i32_25 = arith.constant 16 : i32
    %61 = tpu.dynamic_rotate %18 by %c16_i32_25 dim 1 : vector<32x128xf32>, i32 -> vector<32x128xf32>
    %62 = arith.truncf %61 : vector<32x128xf32> to vector<32x128xbf16>
    %c0_26 = arith.constant 0 : index
    %c1280 = arith.constant 1280 : index
    %63 = vector.load %arg9[%c0_26, %c1280] : memref<32x1664xbf16, #tpu.memory_space<vmem>>, vector<32x128xbf16>
    tpu.vector_store %arg9[%c0_26, %c1280], %62 {strides = array<i32>} : memref<32x1664xbf16, #tpu.memory_space<vmem>>, vector<32x128xbf16>,
    %c8_i32_27 = arith.constant 8 : i32
    %64 = tpu.dynamic_rotate %18 by %c8_i32_27 dim 1 : vector<32x128xf32>, i32 -> vector<32x128xf32>
    %65 = arith.truncf %64 : vector<32x128xf32> to vector<32x128xbf16>
    %c0_28 = arith.constant 0 : index
    %c1408 = arith.constant 1408 : index
    %66 = vector.load %arg9[%c0_28, %c1408] : memref<32x1664xbf16, #tpu.memory_space<vmem>>, vector<32x128xbf16>
    tpu.vector_store %arg9[%c0_28, %c1408], %65 {strides = array<i32>} : memref<32x1664xbf16, #tpu.memory_space<vmem>>, vector<32x128xbf16>,
    %67 = arith.truncf %18 : vector<32x128xf32> to vector<32x128xbf16>
    %c0_29 = arith.constant 0 : index
    %c1536 = arith.constant 1536 : index
    %68 = vector.load %arg9[%c0_29, %c1536] : memref<32x1664xbf16, #tpu.memory_space<vmem>>, vector<32x128xbf16>
    tpu.vector_store %arg9[%c0_29, %c1536], %67 {strides = array<i32>} : memref<32x1664xbf16, #tpu.memory_space<vmem>>, vector<32x128xbf16>,
    %c0_30 = arith.constant 0 : index
    %c0_31 = arith.constant 0 : index
    %69 = vector.load %arg9[%c0_30, %c0_31] : memref<32x1664xbf16, #tpu.memory_space<vmem>>, vector<32x1664xbf16>
    %c0_32 = arith.constant 0 : index
    %c0_33 = arith.constant 0 : index
    %70 = vector.load %arg2[%c0_32, %c0_33] : memref<1664x128xbf16, #tpu.memory_space<vmem>>, vector<1664x128xbf16>
    %cst_34 = arith.constant dense<0.000000e+00> : vector<32x128xf32>
    %71 = tpu.matmul %69, %70, %cst_34 {dimension_numbers = #tpu.dot_dimension_numbers<[1], [0], [0], [1], [0, 0, 1, 1], [], []>} : vector<32x1664xbf16>, vector<1664x128xbf16>, vector<32x128xf32> -> vector<32x128xf32>
    %c0_35 = arith.constant 0 : index
    %c0_36 = arith.constant 0 : index
    %72 = vector.load %arg3[%c0_35, %c0_36] : memref<1x128xf32, #tpu.memory_space<vmem>>, vector<1x128xf32>
    %73 = vector.broadcast %72 : vector<1x128xf32> to vector<32x128xf32>
    %74 = arith.addf %71, %73 : vector<32x128xf32>
    %c0_37 = arith.constant 0 : index
    %c0_38 = arith.constant 0 : index
    %75 = vector.load %arg4[%c0_37, %c0_38] : memref<1x128xf32, #tpu.memory_space<vmem>>, vector<1x128xf32>
    %cst_39 = arith.constant 0.000000e+00 : f32
    %76 = vector.broadcast %cst_39 : f32 to vector<32x128xf32>
    %77 = arith.cmpf oge, %74, %76 : vector<32x128xf32>
    %78 = vector.broadcast %75 : vector<1x128xf32> to vector<32x128xf32>
    %79 = arith.mulf %78, %74 : vector<32x128xf32>
    %80 = arith.select %77, %74, %79 : vector<32x128xi1>, vector<32x128xf32>
    %c2_i32_40 = arith.constant 2 : i32
    %81 = vector.broadcast %c2_i32_40 : i32 to vector<32x1xi32>
    %82 = arith.cmpi sge, %16, %81 : vector<32x1xi32>
    %c2_i32_41 = arith.constant 2 : i32
    %83 = tpu.dynamic_rotate %80 by %c2_i32_41 dim 0 : vector<32x128xf32>, i32 -> vector<32x128xf32>
    %cst_42 = arith.constant 0.000000e+00 : f32
    %84 = vector.shape_cast %82 : vector<32x1xi1> to vector<32x1xi1>
    %85 = vector.broadcast %84 : vector<32x1xi1> to vector<32x128xi1>
    %86 = vector.broadcast %cst_42 : f32 to vector<32x128xf32>
    %87 = arith.select %85, %83, %86 : vector<32x128xi1>, vector<32x128xf32>
    %c16_i32_43 = arith.constant 16 : i32
    %88 = tpu.dynamic_rotate %87 by %c16_i32_43 dim 1 : vector<32x128xf32>, i32 -> vector<32x128xf32>
    %89 = arith.truncf %88 : vector<32x128xf32> to vector<32x128xbf16>
    %c0_44 = arith.constant 0 : index
    %c0_45 = arith.constant 0 : index
    %90 = vector.load %arg9[%c0_44, %c0_45] : memref<32x1664xbf16, #tpu.memory_space<vmem>>, vector<32x128xbf16>
    tpu.vector_store %arg9[%c0_44, %c0_45], %89 {strides = array<i32>} : memref<32x1664xbf16, #tpu.memory_space<vmem>>, vector<32x128xbf16>,
    %c8_i32_46 = arith.constant 8 : i32
    %91 = tpu.dynamic_rotate %87 by %c8_i32_46 dim 1 : vector<32x128xf32>, i32 -> vector<32x128xf32>
    %92 = arith.truncf %91 : vector<32x128xf32> to vector<32x128xbf16>
    %c0_47 = arith.constant 0 : index
    %c128_48 = arith.constant 128 : index
    %93 = vector.load %arg9[%c0_47, %c128_48] : memref<32x1664xbf16, #tpu.memory_space<vmem>>, vector<32x128xbf16>
    tpu.vector_store %arg9[%c0_47, %c128_48], %92 {strides = array<i32>} : memref<32x1664xbf16, #tpu.memory_space<vmem>>, vector<32x128xbf16>,
    %94 = arith.truncf %87 : vector<32x128xf32> to vector<32x128xbf16>
    %c0_49 = arith.constant 0 : index
    %c256_50 = arith.constant 256 : index
    %95 = vector.load %arg9[%c0_49, %c256_50] : memref<32x1664xbf16, #tpu.memory_space<vmem>>, vector<32x128xbf16>
    tpu.vector_store %arg9[%c0_49, %c256_50], %94 {strides = array<i32>} : memref<32x1664xbf16, #tpu.memory_space<vmem>>, vector<32x128xbf16>,
    %c120_i32_51 = arith.constant 120 : i32
    %96 = tpu.dynamic_rotate %87 by %c120_i32_51 dim 1 : vector<32x128xf32>, i32 -> vector<32x128xf32>
    %97 = arith.truncf %96 : vector<32x128xf32> to vector<32x128xbf16>
    %c0_52 = arith.constant 0 : index
    %c384_53 = arith.constant 384 : index
    %98 = vector.load %arg9[%c0_52, %c384_53] : memref<32x1664xbf16, #tpu.memory_space<vmem>>, vector<32x128xbf16>
    tpu.vector_store %arg9[%c0_52, %c384_53], %97 {strides = array<i32>} : memref<32x1664xbf16, #tpu.memory_space<vmem>>, vector<32x128xbf16>,
    %c112_i32_54 = arith.constant 112 : i32
    %99 = tpu.dynamic_rotate %87 by %c112_i32_54 dim 1 : vector<32x128xf32>, i32 -> vector<32x128xf32>
    %100 = arith.truncf %99 : vector<32x128xf32> to vector<32x128xbf16>
    %c0_55 = arith.constant 0 : index
    %c512_56 = arith.constant 512 : index
    %101 = vector.load %arg9[%c0_55, %c512_56] : memref<32x1664xbf16, #tpu.memory_space<vmem>>, vector<32x128xbf16>
    tpu.vector_store %arg9[%c0_55, %c512_56], %100 {strides = array<i32>} : memref<32x1664xbf16, #tpu.memory_space<vmem>>, vector<32x128xbf16>,
    %c1_i32_57 = arith.constant 1 : i32
    %102 = vector.broadcast %c1_i32_57 : i32 to vector<32x1xi32>
    %103 = arith.cmpi sge, %16, %102 : vector<32x1xi32>
    %c1_i32_58 = arith.constant 1 : i32
    %104 = tpu.dynamic_rotate %80 by %c1_i32_58 dim 0 : vector<32x128xf32>, i32 -> vector<32x128xf32>
    %cst_59 = arith.constant 0.000000e+00 : f32
    %105 = vector.shape_cast %103 : vector<32x1xi1> to vector<32x1xi1>
    %106 = vector.broadcast %105 : vector<32x1xi1> to vector<32x128xi1>
    %107 = vector.broadcast %cst_59 : f32 to vector<32x128xf32>
    %108 = arith.select %106, %104, %107 : vector<32x128xi1>, vector<32x128xf32>
    %c16_i32_60 = arith.constant 16 : i32
    %109 = tpu.dynamic_rotate %108 by %c16_i32_60 dim 1 : vector<32x128xf32>, i32 -> vector<32x128xf32>
    %110 = arith.truncf %109 : vector<32x128xf32> to vector<32x128xbf16>
    %c0_61 = arith.constant 0 : index
    %c640_62 = arith.constant 640 : index
    %111 = vector.load %arg9[%c0_61, %c640_62] : memref<32x1664xbf16, #tpu.memory_space<vmem>>, vector<32x128xbf16>
    tpu.vector_store %arg9[%c0_61, %c640_62], %110 {strides = array<i32>} : memref<32x1664xbf16, #tpu.memory_space<vmem>>, vector<32x128xbf16>,
    %c8_i32_63 = arith.constant 8 : i32
    %112 = tpu.dynamic_rotate %108 by %c8_i32_63 dim 1 : vector<32x128xf32>, i32 -> vector<32x128xf32>
    %113 = arith.truncf %112 : vector<32x128xf32> to vector<32x128xbf16>
    %c0_64 = arith.constant 0 : index
    %c768_65 = arith.constant 768 : index
    %114 = vector.load %arg9[%c0_64, %c768_65] : memref<32x1664xbf16, #tpu.memory_space<vmem>>, vector<32x128xbf16>
    tpu.vector_store %arg9[%c0_64, %c768_65], %113 {strides = array<i32>} : memref<32x1664xbf16, #tpu.memory_space<vmem>>, vector<32x128xbf16>,
    %115 = arith.truncf %108 : vector<32x128xf32> to vector<32x128xbf16>
    %c0_66 = arith.constant 0 : index
    %c896_67 = arith.constant 896 : index
    %116 = vector.load %arg9[%c0_66, %c896_67] : memref<32x1664xbf16, #tpu.memory_space<vmem>>, vector<32x128xbf16>
    tpu.vector_store %arg9[%c0_66, %c896_67], %115 {strides = array<i32>} : memref<32x1664xbf16, #tpu.memory_space<vmem>>, vector<32x128xbf16>,
    %c120_i32_68 = arith.constant 120 : i32
    %117 = tpu.dynamic_rotate %108 by %c120_i32_68 dim 1 : vector<32x128xf32>, i32 -> vector<32x128xf32>
    %118 = arith.truncf %117 : vector<32x128xf32> to vector<32x128xbf16>
    %c0_69 = arith.constant 0 : index
    %c1024_70 = arith.constant 1024 : index
    %119 = vector.load %arg9[%c0_69, %c1024_70] : memref<32x1664xbf16, #tpu.memory_space<vmem>>, vector<32x128xbf16>
    tpu.vector_store %arg9[%c0_69, %c1024_70], %118 {strides = array<i32>} : memref<32x1664xbf16, #tpu.memory_space<vmem>>, vector<32x128xbf16>,
    %c112_i32_71 = arith.constant 112 : i32
    %120 = tpu.dynamic_rotate %108 by %c112_i32_71 dim 1 : vector<32x128xf32>, i32 -> vector<32x128xf32>
    %121 = arith.truncf %120 : vector<32x128xf32> to vector<32x128xbf16>
    %c0_72 = arith.constant 0 : index
    %c1152_73 = arith.constant 1152 : index
    %122 = vector.load %arg9[%c0_72, %c1152_73] : memref<32x1664xbf16, #tpu.memory_space<vmem>>, vector<32x128xbf16>
    tpu.vector_store %arg9[%c0_72, %c1152_73], %121 {strides = array<i32>} : memref<32x1664xbf16, #tpu.memory_space<vmem>>, vector<32x128xbf16>,
    %c16_i32_74 = arith.constant 16 : i32
    %123 = tpu.dynamic_rotate %80 by %c16_i32_74 dim 1 : vector<32x128xf32>, i32 -> vector<32x128xf32>
    %124 = arith.truncf %123 : vector<32x128xf32> to vector<32x128xbf16>
    %c0_75 = arith.constant 0 : index
    %c1280_76 = arith.constant 1280 : index
    %125 = vector.load %arg9[%c0_75, %c1280_76] : memref<32x1664xbf16, #tpu.memory_space<vmem>>, vector<32x128xbf16>
    tpu.vector_store %arg9[%c0_75, %c1280_76], %124 {strides = array<i32>} : memref<32x1664xbf16, #tpu.memory_space<vmem>>, vector<32x128xbf16>,
    %c8_i32_77 = arith.constant 8 : i32
    %126 = tpu.dynamic_rotate %80 by %c8_i32_77 dim 1 : vector<32x128xf32>, i32 -> vector<32x128xf32>
    %127 = arith.truncf %126 : vector<32x128xf32> to vector<32x128xbf16>
    %c0_78 = arith.constant 0 : index
    %c1408_79 = arith.constant 1408 : index
    %128 = vector.load %arg9[%c0_78, %c1408_79] : memref<32x1664xbf16, #tpu.memory_space<vmem>>, vector<32x128xbf16>
    tpu.vector_store %arg9[%c0_78, %c1408_79], %127 {strides = array<i32>} : memref<32x1664xbf16, #tpu.memory_space<vmem>>, vector<32x128xbf16>,
    %129 = arith.truncf %80 : vector<32x128xf32> to vector<32x128xbf16>
    %c0_80 = arith.constant 0 : index
    %c1536_81 = arith.constant 1536 : index
    %130 = vector.load %arg9[%c0_80, %c1536_81] : memref<32x1664xbf16, #tpu.memory_space<vmem>>, vector<32x128xbf16>
    tpu.vector_store %arg9[%c0_80, %c1536_81], %129 {strides = array<i32>} : memref<32x1664xbf16, #tpu.memory_space<vmem>>, vector<32x128xbf16>,
    %c0_82 = arith.constant 0 : index
    %c0_83 = arith.constant 0 : index
    %131 = vector.load %arg9[%c0_82, %c0_83] : memref<32x1664xbf16, #tpu.memory_space<vmem>>, vector<32x1664xbf16>
    %c0_84 = arith.constant 0 : index
    %c0_85 = arith.constant 0 : index
    %132 = vector.load %arg5[%c0_84, %c0_85] : memref<1664x128xbf16, #tpu.memory_space<vmem>>, vector<1664x128xbf16>
    %cst_86 = arith.constant dense<0.000000e+00> : vector<32x128xf32>
    %133 = tpu.matmul %131, %132, %cst_86 {dimension_numbers = #tpu.dot_dimension_numbers<[1], [0], [0], [1], [0, 0, 1, 1], [], []>} : vector<32x1664xbf16>, vector<1664x128xbf16>, vector<32x128xf32> -> vector<32x128xf32>
    %c0_87 = arith.constant 0 : index
    %c0_88 = arith.constant 0 : index
    %134 = vector.load %arg6[%c0_87, %c0_88] : memref<1x128xf32, #tpu.memory_space<vmem>>, vector<1x128xf32>
    %135 = vector.broadcast %134 : vector<1x128xf32> to vector<32x128xf32>
    %136 = arith.addf %133, %135 : vector<32x128xf32>
    %c0_89 = arith.constant 0 : index
    %c0_90 = arith.constant 0 : index
    %137 = vector.load %arg7[%c0_89, %c0_90] : memref<1x128xf32, #tpu.memory_space<vmem>>, vector<1x128xf32>
    %cst_91 = arith.constant 0.000000e+00 : f32
    %138 = vector.broadcast %cst_91 : f32 to vector<32x128xf32>
    %139 = arith.cmpf oge, %136, %138 : vector<32x128xf32>
    %140 = vector.broadcast %137 : vector<1x128xf32> to vector<32x128xf32>
    %141 = arith.mulf %140, %136 : vector<32x128xf32>
    %142 = arith.select %139, %136, %141 : vector<32x128xi1>, vector<32x128xf32>
    %143 = arith.addf %142, %18 : vector<32x128xf32>
    %144 = vector.shape_cast %143 : vector<32x128xf32> to vector<2x16x128xf32>
    %c0_92 = arith.constant 0 : index
    %c0_93 = arith.constant 0 : index
    %c0_94 = arith.constant 0 : index
    %145 = vector.load %arg8[%c0_92, %c0_93, %c0_94] : memref<2x16x128xf32, #tpu.memory_space<vmem>>, vector<2x16x128xf32>
    tpu.vector_store %arg8[%c0_92, %c0_93, %c0_94], %144 {strides = array<i32>} : memref<2x16x128xf32, #tpu.memory_space<vmem>>, vector<2x16x128xf32>,
    return
  }
  func.func @transform_0(%arg0: i32) -> (i32, i32, i32) {
    %c0_i32 = arith.constant 0 : i32
    %c0_i32_0 = arith.constant 0 : i32
    %c0_i32_1 = arith.constant 0 : i32
    return %arg0, %c0_i32, %c0_i32_0 : i32, i32, i32
  }
  func.func @transform_1(%arg0: i32) -> (i32, i32) {
    %c0_i32 = arith.constant 0 : i32
    %c0_i32_0 = arith.constant 0 : i32
    %c0_i32_1 = arith.constant 0 : i32
    return %c0_i32, %c0_i32_0 : i32, i32
  }
  func.func @transform_2(%arg0: i32) -> (i32, i32) {
    %c0_i32 = arith.constant 0 : i32
    %c0_i32_0 = arith.constant 0 : i32
    %c0_i32_1 = arith.constant 0 : i32
    return %c0_i32, %c0_i32_0 : i32, i32
  }
  func.func @transform_3(%arg0: i32) -> (i32, i32) {
    %c0_i32 = arith.constant 0 : i32
    %c0_i32_0 = arith.constant 0 : i32
    %c0_i32_1 = arith.constant 0 : i32
    return %c0_i32, %c0_i32_0 : i32, i32
  }
  func.func @transform_4(%arg0: i32) -> (i32, i32) {
    %c0_i32 = arith.constant 0 : i32
    %c0_i32_0 = arith.constant 0 : i32
    %c0_i32_1 = arith.constant 0 : i32
    return %c0_i32, %c0_i32_0 : i32, i32
  }
  func.func @transform_5(%arg0: i32) -> (i32, i32) {
    %c0_i32 = arith.constant 0 : i32
    %c0_i32_0 = arith.constant 0 : i32
    %c0_i32_1 = arith.constant 0 : i32
    return %c0_i32, %c0_i32_0 : i32, i32
  }
  func.func @transform_6(%arg0: i32) -> (i32, i32) {
    %c0_i32 = arith.constant 0 : i32
    %c0_i32_0 = arith.constant 0 : i32
    %c0_i32_1 = arith.constant 0 : i32
    return %c0_i32, %c0_i32_0 : i32, i32
  }
  func.func @transform_7(%arg0: i32) -> (i32, i32, i32) {
    %c0_i32 = arith.constant 0 : i32
    %c0_i32_0 = arith.constant 0 : i32
    %c0_i32_1 = arith.constant 0 : i32
    return %arg0, %c0_i32, %c0_i32_0 : i32, i32, i32
  }
}

</mosaic_0001>

<llo_original>
// kernel: tpu_custom_call.1
$region0: #{tpu_custom_call.1}
  #allocation0 [shape = 'u32[]', space=smem, size = 0x4, offset = 0x4, fixed_abs, tag = 'smem constant byte address 0x4 - core index']
  #allocation1 [shape = 'u32[72,128]{1,0:T(1,128)}', space=vmem, size = 0x9000, scoped, tag = 'internal scratch']
  #allocation2 [shape = 'bf16[32,1664]{1,0:T(8,128)(2,1)}', space=vmem, size = 0x1a000, scoped, tag = 'scratch operand']
  %s0 = inlined_call_operand.hbm [shape: f32[2,16,128], index: 0, kind: input, shape index: {}]
  %s1 = inlined_call_operand.hbm [shape: bf16[1664,128], index: 1, kind: input, shape index: {}]
  %s2 = inlined_call_operand.vmem [shape: f32[1,128], index: 2, kind: input, shape index: {}]
  %s3 = inlined_call_operand.vmem [shape: f32[1,128], index: 3, kind: input, shape index: {}]
  %s4 = inlined_call_operand.hbm [shape: bf16[1664,128], index: 4, kind: input, shape index: {}]
  %s5 = inlined_call_operand.vmem [shape: f32[1,128], index: 5, kind: input, shape index: {}]
  %s6 = inlined_call_operand.vmem [shape: f32[1,128], index: 6, kind: input, shape index: {}]
  %s7 = inlined_call_operand.hbm [shape: f32[2,16,128], index: 7, kind: output, shape index: {}]
  %s8 = sld [smem:[#allocation0]]
  $region50: #{tpu_custom_call.1} parent=0
    _
  %s10 = ssub.s32 1, %s8
  %s11 = scalar_select 0, %s10, %s8
  $region1: #{tpu_custom_call.1} parent=0
    #allocation3 [shape = 'u8[16384]{0}', space=vmem, size = 0x4000, scoped, tag = 'input window, operand 0, single buffered']
    #allocation4 [shape = 's32[1]{0}', space=sflag, size = 0x4, scoped, tag = 'scoped memory for tpu_custom_call.1']
    #allocation5 [shape = 's32[1]{0}', space=sflag, size = 0x4, scoped, tag = 'scoped memory for tpu_custom_call.1']
    #allocation6 [shape = 'u8[425984]{0}', space=vmem, size = 0x68000, scoped, tag = 'input window, operand 1, single buffered']
    #allocation7 [shape = 's32[1]{0}', space=sflag, size = 0x4, scoped, tag = 'scoped memory for tpu_custom_call.1']
    #allocation8 [shape = 'u8[425984]{0}', space=vmem, size = 0x68000, scoped, tag = 'input window, operand 4, single buffered']
    #allocation9 [shape = 'u8[16384]{0}', space=vmem, size = 0x4000, scoped, tag = 'output window, operand 0, single buffered']
    %12 = vsyncpa [#allocation4], 0
    %13 = vsyncpa [#allocation7], 0
    %14 = vsyncpa [#allocation5], 0
    // Predicated region
    $region2: #{tpu_custom_call.1} parent=1 // pred_check
      _
    $region3: #{tpu_custom_call.1} parent=1 // pred_check_branch
      %16 = sbr.rel (0) target = $region5
    $region4: #{tpu_custom_call.1} parent=1 // pred_region
      %18 = vsyncadd [#allocation4], 0
      %s19 = sshll.u32 %s0, 4
      %s20 = int_to_ptr.hbm [resolvable:$true] %s19
      %s21 = sshll.u32 [#allocation3], 4
      %s22 = int_to_ptr.vmem [resolvable:$true] %s21
      %27 = dma.hbm_to_vmem [thread:$0]  %s20, 512, %s22, [#allocation4], 128, 128, 8
    $region5: #{tpu_custom_call.1} parent=1 // pred_fallthru
      _
    // Predicated region
    $region6: #{tpu_custom_call.1} parent=1 // pred_check
      _
    $region7: #{tpu_custom_call.1} parent=1 // pred_check_branch
      %29 = sbr.rel (0) target = $region9
    $region8: #{tpu_custom_call.1} parent=1 // pred_region
      %31 = vsyncadd [#allocation7], 0
      %s32 = sshll.u32 %s1, 4
      %s33 = int_to_ptr.hbm [resolvable:$true] %s32
      %s34 = sshll.u32 [#allocation6], 4
      %s35 = int_to_ptr.vmem [resolvable:$true] %s34
      %40 = dma.hbm_to_vmem [thread:$0]  %s33, 13312, %s35, [#allocation7], 64, 64, 4
    $region9: #{tpu_custom_call.1} parent=1 // pred_fallthru
      _
    // Predicated region
    $region10: #{tpu_custom_call.1} parent=1 // pred_check
      _
    $region11: #{tpu_custom_call.1} parent=1 // pred_check_branch
      %42 = sbr.rel (0) target = $region13
    $region12: #{tpu_custom_call.1} parent=1 // pred_region
      _
    $region13: #{tpu_custom_call.1} parent=1 // pred_fallthru
      _
    // Predicated region
    $region14: #{tpu_custom_call.1} parent=1 // pred_check
      _
    $region15: #{tpu_custom_call.1} parent=1 // pred_check_branch
      %44 = sbr.rel (0) target = $region17
    $region16: #{tpu_custom_call.1} parent=1 // pred_region
      _
    $region17: #{tpu_custom_call.1} parent=1 // pred_fallthru
      _
    // Predicated region
    $region18: #{tpu_custom_call.1} parent=1 // pred_check
      _
    $region19: #{tpu_custom_call.1} parent=1 // pred_check_branch
      %46 = sbr.rel (0) target = $region21
    $region20: #{tpu_custom_call.1} parent=1 // pred_region
      %48 = vsyncadd [#allocation7], 0
      %s49 = sshll.u32 %s4, 4
      %s50 = int_to_ptr.hbm [resolvable:$true] %s49
      %s51 = sshll.u32 [#allocation8], 4
      %s52 = int_to_ptr.vmem [resolvable:$true] %s51
      %57 = dma.hbm_to_vmem [thread:$0]  %s50, 13312, %s52, [#allocation7], 64, 64, 4
    $region21: #{tpu_custom_call.1} parent=1 // pred_fallthru
      _
    // Predicated region
    $region22: #{tpu_custom_call.1} parent=1 // pred_check
      _
    $region23: #{tpu_custom_call.1} parent=1 // pred_check_branch
      %59 = sbr.rel (0) target = $region25
    $region24: #{tpu_custom_call.1} parent=1 // pred_region
      _
    $region25: #{tpu_custom_call.1} parent=1 // pred_fallthru
      _
    // Predicated region
    $region26: #{tpu_custom_call.1} parent=1 // pred_check
      _
    $region27: #{tpu_custom_call.1} parent=1 // pred_check_branch
      %61 = sbr.rel (0) target = $region29
    $region28: #{tpu_custom_call.1} parent=1 // pred_region
      _
    $region29: #{tpu_custom_call.1} parent=1 // pred_fallthru
      _
    // Predicated region
    $region30: #{tpu_custom_call.1} parent=1 // pred_check
      _
    $region31: #{tpu_custom_call.1} parent=1 // pred_check_branch
      %63 = sbr.rel (0) target = $region33
    $region32: #{tpu_custom_call.1} parent=1 // pred_region
      %65 = dma.done [#allocation4], 512
    $region33: #{tpu_custom_call.1} parent=1 // pred_fallthru
      _
    // Predicated region
    $region34: #{tpu_custom_call.1} parent=1 // pred_check
      _
    $region35: #{tpu_custom_call.1} parent=1 // pred_check_branch
      %67 = sbr.rel (0) target = $region37
    $region36: #{tpu_custom_call.1} parent=1 // pred_region
      %69 = dma.done [#allocation7], 13312
    $region37: #{tpu_custom_call.1} parent=1 // pred_fallthru
      _
    // Predicated region
    $region38: #{tpu_custom_call.1} parent=1 // pred_check
      _
    $region39: #{tpu_custom_call.1} parent=1 // pred_check_branch
      %71 = sbr.rel (0) target = $region41
    $region40: #{tpu_custom_call.1} parent=1 // pred_region
      %73 = dma.done [#allocation7], 13312
    $region41: #{tpu_custom_call.1} parent=1 // pred_fallthru
      _
    %v74 = vlaneseq
    %v75 = vshrl.u32 %v74, 7
    %v76 = vadd.s32 %v75, 8
    %v77 = vadd.s32 %v75, 16
    %v78 = vadd.s32 %v75, 24
    %vm79 = vcmp.lt.s32.totalorder %v75, 0
    %v80 = vsub.s32 0, %v75
    %v81 = vsel %vm79, %v80, %v75
    %v82 = vshrl.u32 %v81, 4
    %v83 = vand.u32 %v81, 15
    %v84 = vsub.s32 0, %v83
    %v85 = vsel %vm79, %v84, %v83
    %vm86 = vcmp.lt.s32.totalorder %v76, 0
    %v87 = vsub.s32 0, %v76
    %v88 = vsel %vm86, %v87, %v76
    %v89 = vshrl.u32 %v88, 4
    %v90 = vand.u32 %v88, 15
    %v91 = vsub.s32 0, %v90
    %v92 = vsel %vm86, %v91, %v90
    %vm93 = vcmp.lt.s32.totalorder %v77, 0
    %v94 = vsub.s32 0, %v77
    %v95 = vsel %vm93, %v94, %v77
    %v96 = vshrl.u32 %v95, 4
    %v97 = vand.u32 %v95, 15
    %v98 = vsub.s32 0, %v97
    %v99 = vsel %vm93, %v98, %v97
    %vm100 = vcmp.lt.s32.totalorder %v78, 0
    %v101 = vsub.s32 0, %v78
    %v102 = vsel %vm100, %v101, %v78
    %v103 = vshrl.u32 %v102, 4
    %v104 = vand.u32 %v102, 15
    %v105 = vsub.s32 0, %v104
    %v106 = vsel %vm100, %v105, %v104
    %vm107 = vcmp.ne.s32.totalorder %v85, 0
    %vm108 = vcmp.ne.s32.totalorder %v92, 0
    %vm109 = vcmp.ne.s32.totalorder %v99, 0
    %vm110 = vcmp.ne.s32.totalorder %v106, 0
    %vm111 = vcmp.lt.s32.totalorder %v85, 0
    %vm112 = vcmp.lt.s32.totalorder %v92, 0
    %vm113 = vcmp.lt.s32.totalorder %v99, 0
    %vm114 = vcmp.lt.s32.totalorder %v106, 0
    %vm115 = vmand %vm111, %vm107
    %vm116 = vmand %vm112, %vm108
    %vm117 = vmand %vm113, %vm109
    %vm118 = vmand %vm114, %vm110
    %v119 = vadd.s32 %v85, 16
    %v120 = vadd.s32 %v92, 16
    %v121 = vadd.s32 %v99, 16
    %v122 = vadd.s32 %v106, 16
    %v123 = vsel %vm115, %v119, %v85
    %v124 = vsel %vm116, %v120, %v92
    %v125 = vsel %vm117, %v121, %v99
    %v126 = vsel %vm118, %v122, %v106
    %v127 = vld [vmem:[#allocation3] sm:$0xff]
    %v128 = vld [vmem:[#allocation3 + $0x8] sm:$0xff]
    %v129 = vld [vmem:[#allocation3 + $0x10] sm:$0xff]
    %v130 = vld [vmem:[#allocation3 + $0x18] sm:$0xff]
    %vm131 = vcmp.ge.s32.totalorder %v123, 2
    %vm132 = vcmp.ge.s32.totalorder %v124, 2
    %vm133 = vcmp.ge.s32.totalorder %v125, 2
    %vm134 = vcmp.ge.s32.totalorder %v126, 2
    %v135 = vrot.slane %v127, 6
    %v136 = vrot.slane %v128, 6
    %v137 = vrot.slane %v129, 6
    %v138 = vrot.slane %v130, 6
    %vm139 = vcmp.lt.s32.totalorder %v75, 2
    %v140 = vsel %vm139, %v137, %v138
    %v141 = vsel %vm139, %v136, %v137
    %v142 = vsel %vm139, %v135, %v136
    %v143 = vsel %vm139, %v138, %v135
    %v144 = vsel %vm131, 1, 0
    %v145 = vsel %vm132, 1, 0
    %v146 = vsel %vm133, 1, 0
    %v147 = vsel %vm134, 1, 0
    %vm148 = vcmp.eq.s32.totalorder %v144, 1
    %vm149 = vcmp.eq.s32.totalorder %v145, 1
    %vm150 = vcmp.eq.s32.totalorder %v146, 1
    %vm151 = vcmp.eq.s32.totalorder %v147, 1
    %v152 = vsel %vm148, %v143, 0.0
    %v153 = vsel %vm149, %v142, 0.0
    %v154 = vsel %vm150, %v141, 0.0
    %v155 = vsel %vm151, %v140, 0.0
    %156 = vrot.lane.b32.xlu0 %v152, 16
    %v157 = vpop.permute.xlu0 %156
    %158 = vrot.lane.b32.xlu0 %v153, 16
    %v159 = vpop.permute.xlu0 %158
    %160 = vrot.lane.b32.xlu0 %v154, 16
    %v161 = vpop.permute.xlu0 %160
    %162 = vrot.lane.b32.xlu0 %v155, 16
    %v163 = vpop.permute.xlu0 %162
    %v164 = vpack.c.bf16 %v157, %v157
    %v165 = vpack.c.bf16 %v159, %v159
    %v166 = vpack.c.bf16 %v161, %v161
    %v167 = vpack.c.bf16 %v163, %v163
    %168 = vst [vmem:[#allocation2] sm:$0xf] %v164
    %169 = vst [vmem:[#allocation2 + $0x34] sm:$0xf] %v165
    %170 = vst [vmem:[#allocation2 + $0x68] sm:$0xf] %v166
    %171 = vst [vmem:[#allocation2 + $0x9c] sm:$0xf] %v167
    %172 = vrot.lane.b32.xlu0 %v152, 8
    %v173 = vpop.permute.xlu0 %172
    %174 = vrot.lane.b32.xlu0 %v153, 8
    %v175 = vpop.permute.xlu0 %174
    %176 = vrot.lane.b32.xlu0 %v154, 8
    %v177 = vpop.permute.xlu0 %176
    %178 = vrot.lane.b32.xlu0 %v155, 8
    %v179 = vpop.permute.xlu0 %178
    %v180 = vpack.c.bf16 %v173, %v173
    %v181 = vpack.c.bf16 %v175, %v175
    %v182 = vpack.c.bf16 %v177, %v177
    %v183 = vpack.c.bf16 %v179, %v179
    %184 = vst [vmem:[#allocation2 + $0x4] sm:$0xf] %v180
    %185 = vst [vmem:[#allocation2 + $0x38] sm:$0xf] %v181
    %186 = vst [vmem:[#allocation2 + $0x6c] sm:$0xf] %v182
    %187 = vst [vmem:[#allocation2 + $0xa0] sm:$0xf] %v183
    %v188 = vpack.c.bf16 %v152, %v152
    %v189 = vpack.c.bf16 %v153, %v153
    %v190 = vpack.c.bf16 %v154, %v154
    %v191 = vpack.c.bf16 %v155, %v155
    %192 = vst [vmem:[#allocation2 + $0x8] sm:$0xf] %v188
    %193 = vst [vmem:[#allocation2 + $0x3c] sm:$0xf] %v189
    %194 = vst [vmem:[#allocation2 + $0x70] sm:$0xf] %v190
    %195 = vst [vmem:[#allocation2 + $0xa4] sm:$0xf] %v191
    %196 = vrot.lane.b32.xlu0 %v152, 120
    %v197 = vpop.permute.xlu0 %196
    %198 = vrot.lane.b32.xlu0 %v153, 120
    %v199 = vpop.permute.xlu0 %198
    %200 = vrot.lane.b32.xlu0 %v154, 120
    %v201 = vpop.permute.xlu0 %200
    %202 = vrot.lane.b32.xlu0 %v155, 120
    %v203 = vpop.permute.xlu0 %202
    %v204 = vpack.c.bf16 %v197, %v197
    %v205 = vpack.c.bf16 %v199, %v199
    %v206 = vpack.c.bf16 %v201, %v201
    %v207 = vpack.c.bf16 %v203, %v203
    %208 = vst [vmem:[#allocation2 + $0xc] sm:$0xf] %v204
    %209 = vst [vmem:[#allocation2 + $0x40] sm:$0xf] %v205
    %210 = vst [vmem:[#allocation2 + $0x74] sm:$0xf] %v206
    %211 = vst [vmem:[#allocation2 + $0xa8] sm:$0xf] %v207
    %212 = vrot.lane.b32.xlu0 %v152, 112
    %v213 = vpop.permute.xlu0 %212
    %214 = vrot.lane.b32.xlu0 %v153, 112
    %v215 = vpop.permute.xlu0 %214
    %216 = vrot.lane.b32.xlu0 %v154, 112
    %v217 = vpop.permute.xlu0 %216
    %218 = vrot.lane.b32.xlu0 %v155, 112
    %v219 = vpop.permute.xlu0 %218
    %v220 = vpack.c.bf16 %v213, %v213
    %v221 = vpack.c.bf16 %v215, %v215
    %v222 = vpack.c.bf16 %v217, %v217
    %v223 = vpack.c.bf16 %v219, %v219
    %224 = vst [vmem:[#allocation2 + $0x10] sm:$0xf] %v220
    %225 = vst [vmem:[#allocation2 + $0x44] sm:$0xf] %v221
    %226 = vst [vmem:[#allocation2 + $0x78] sm:$0xf] %v222
    %227 = vst [vmem:[#allocation2 + $0xac] sm:$0xf] %v223
    %vm228 = vcmp.ge.s32.totalorder %v123, 1
    %vm229 = vcmp.ge.s32.totalorder %v124, 1
    %vm230 = vcmp.ge.s32.totalorder %v125, 1
    %vm231 = vcmp.ge.s32.totalorder %v126, 1
    %v232 = vrot.slane %v127, 7
    %v233 = vrot.slane %v128, 7
    %v234 = vrot.slane %v129, 7
    %v235 = vrot.slane %v130, 7
    %vm236 = vcmp.lt.s32.totalorder %v75, 1
    %v237 = vsel %vm236, %v234, %v235
    %v238 = vsel %vm236, %v233, %v234
    %v239 = vsel %vm236, %v232, %v233
    %v240 = vsel %vm236, %v235, %v232
    %v241 = vsel %vm228, 1, 0
    %v242 = vsel %vm229, 1, 0
    %v243 = vsel %vm230, 1, 0
    %v244 = vsel %vm231, 1, 0
    %vm245 = vcmp.eq.s32.totalorder %v241, 1
    %vm246 = vcmp.eq.s32.totalorder %v242, 1
    %vm247 = vcmp.eq.s32.totalorder %v243, 1
    %vm248 = vcmp.eq.s32.totalorder %v244, 1
    %v249 = vsel %vm245, %v240, 0.0
    %v250 = vsel %vm246, %v239, 0.0
    %v251 = vsel %vm247, %v238, 0.0
    %v252 = vsel %vm248, %v237, 0.0
    %253 = vrot.lane.b32.xlu0 %v249, 16
    %v254 = vpop.permute.xlu0 %253
    %255 = vrot.lane.b32.xlu0 %v250, 16
    %v256 = vpop.permute.xlu0 %255
    %257 = vrot.lane.b32.xlu0 %v251, 16
    %v258 = vpop.permute.xlu0 %257
    %259 = vrot.lane.b32.xlu0 %v252, 16
    %v260 = vpop.permute.xlu0 %259
    %v261 = vpack.c.bf16 %v254, %v254
    %v262 = vpack.c.bf16 %v256, %v256
    %v263 = vpack.c.bf16 %v258, %v258
    %v264 = vpack.c.bf16 %v260, %v260
    %265 = vst [vmem:[#allocation2 + $0x14] sm:$0xf] %v261
    %266 = vst [vmem:[#allocation2 + $0x48] sm:$0xf] %v262
    %267 = vst [vmem:[#allocation2 + $0x7c] sm:$0xf] %v263
    %268 = vst [vmem:[#allocation2 + $0xb0] sm:$0xf] %v264
    %269 = vrot.lane.b32.xlu0 %v249, 8
    %v270 = vpop.permute.xlu0 %269
    %271 = vrot.lane.b32.xlu0 %v250, 8
    %v272 = vpop.permute.xlu0 %271
    %273 = vrot.lane.b32.xlu0 %v251, 8
    %v274 = vpop.permute.xlu0 %273
    %275 = vrot.lane.b32.xlu0 %v252, 8
    %v276 = vpop.permute.xlu0 %275
    %v277 = vpack.c.bf16 %v270, %v270
    %v278 = vpack.c.bf16 %v272, %v272
    %v279 = vpack.c.bf16 %v274, %v274
    %v280 = vpack.c.bf16 %v276, %v276
    %281 = vst [vmem:[#allocation2 + $0x18] sm:$0xf] %v277
    %282 = vst [vmem:[#allocation2 + $0x4c] sm:$0xf] %v278
    %283 = vst [vmem:[#allocation2 + $0x80] sm:$0xf] %v279
    %284 = vst [vmem:[#allocation2 + $0xb4] sm:$0xf] %v280
    %v285 = vpack.c.bf16 %v249, %v249
    %v286 = vpack.c.bf16 %v250, %v250
    %v287 = vpack.c.bf16 %v251, %v251
    %v288 = vpack.c.bf16 %v252, %v252
    %289 = vst [vmem:[#allocation2 + $0x1c] sm:$0xf] %v285
    %290 = vst [vmem:[#allocation2 + $0x50] sm:$0xf] %v286
    %291 = vst [vmem:[#allocation2 + $0x84] sm:$0xf] %v287
    %292 = vst [vmem:[#allocation2 + $0xb8] sm:$0xf] %v288
    %293 = vrot.lane.b32.xlu0 %v249, 120
    %v294 = vpop.permute.xlu0 %293
    %295 = vrot.lane.b32.xlu0 %v250, 120
    %v296 = vpop.permute.xlu0 %295
    %297 = vrot.lane.b32.xlu0 %v251, 120
    %v298 = vpop.permute.xlu0 %297
    %299 = vrot.lane.b32.xlu0 %v252, 120
    %v300 = vpop.permute.xlu0 %299
    %v301 = vpack.c.bf16 %v294, %v294
    %v302 = vpack.c.bf16 %v296, %v296
    %v303 = vpack.c.bf16 %v298, %v298
    %v304 = vpack.c.bf16 %v300, %v300
    %305 = vst [vmem:[#allocation2 + $0x20] sm:$0xf] %v301
    %306 = vst [vmem:[#allocation2 + $0x54] sm:$0xf] %v302
    %307 = vst [vmem:[#allocation2 + $0x88] sm:$0xf] %v303
    %308 = vst [vmem:[#allocation2 + $0xbc] sm:$0xf] %v304
    %309 = vrot.lane.b32.xlu0 %v249, 112
    %v310 = vpop.permute.xlu0 %309
    %311 = vrot.lane.b32.xlu0 %v250, 112
    %v312 = vpop.permute.xlu0 %311
    %313 = vrot.lane.b32.xlu0 %v251, 112
    %v314 = vpop.permute.xlu0 %313
    %315 = vrot.lane.b32.xlu0 %v252, 112
    %v316 = vpop.permute.xlu0 %315
    %v317 = vpack.c.bf16 %v310, %v310
    %v318 = vpack.c.bf16 %v312, %v312
    %v319 = vpack.c.bf16 %v314, %v314
    %v320 = vpack.c.bf16 %v316, %v316
    %321 = vst [vmem:[#allocation2 + $0x24] sm:$0xf] %v317
    %322 = vst [vmem:[#allocation2 + $0x58] sm:$0xf] %v318
    %323 = vst [vmem:[#allocation2 + $0x8c] sm:$0xf] %v319
    %324 = vst [vmem:[#allocation2 + $0xc0] sm:$0xf] %v320
    %325 = vrot.lane.b32.xlu0 %v127, 16
    %v326 = vpop.permute.xlu0 %325
    %327 = vrot.lane.b32.xlu0 %v128, 16
    %v328 = vpop.permute.xlu0 %327
    %329 = vrot.lane.b32.xlu0 %v129, 16
    %v330 = vpop.permute.xlu0 %329
    %331 = vrot.lane.b32.xlu0 %v130, 16
    %v332 = vpop.permute.xlu0 %331
    %v333 = vpack.c.bf16 %v326, %v326
    %v334 = vpack.c.bf16 %v328, %v328
    %v335 = vpack.c.bf16 %v330, %v330
    %v336 = vpack.c.bf16 %v332, %v332
    %337 = vst [vmem:[#allocation2 + $0x28] sm:$0xf] %v333
    %338 = vst [vmem:[#allocation2 + $0x5c] sm:$0xf] %v334
    %339 = vst [vmem:[#allocation2 + $0x90] sm:$0xf] %v335
    %340 = vst [vmem:[#allocation2 + $0xc4] sm:$0xf] %v336
    %341 = vrot.lane.b32.xlu0 %v127, 8
    %v342 = vpop.permute.xlu0 %341
    %343 = vrot.lane.b32.xlu0 %v128, 8
    %v344 = vpop.permute.xlu0 %343
    %345 = vrot.lane.b32.xlu0 %v129, 8
    %v346 = vpop.permute.xlu0 %345
    %347 = vrot.lane.b32.xlu0 %v130, 8
    %v348 = vpop.permute.xlu0 %347
    %v349 = vpack.c.bf16 %v342, %v342
    %v350 = vpack.c.bf16 %v344, %v344
    %v351 = vpack.c.bf16 %v346, %v346
    %v352 = vpack.c.bf16 %v348, %v348
    %353 = vst [vmem:[#allocation2 + $0x2c] sm:$0xf] %v349
    %354 = vst [vmem:[#allocation2 + $0x60] sm:$0xf] %v350
    %355 = vst [vmem:[#allocation2 + $0x94] sm:$0xf] %v351
    %356 = vst [vmem:[#allocation2 + $0xc8] sm:$0xf] %v352
    %v357 = vpack.c.bf16 %v127, %v127
    %v358 = vpack.c.bf16 %v128, %v128
    %v359 = vpack.c.bf16 %v129, %v129
    %v360 = vpack.c.bf16 %v130, %v130
    %361 = vst [vmem:[#allocation2 + $0x30] sm:$0xf] %v357
    %362 = vst [vmem:[#allocation2 + $0x64] sm:$0xf] %v358
    %363 = vst [vmem:[#allocation2 + $0x98] sm:$0xf] %v359
    %364 = vst [vmem:[#allocation2 + $0xcc] sm:$0xf] %v360
    %v365 = vld [vmem:[#allocation2] sm:$0xff]
    %v366 = vld [vmem:[#allocation2 + $0x8] sm:$0xff]
    %v367 = vld [vmem:[#allocation2 + $0x10] sm:$0xff]
    %v368 = vld [vmem:[#allocation2 + $0x18] sm:$0xff]
    %v369 = vld [vmem:[#allocation2 + $0x20] sm:$0xff]
    %v370 = vld [vmem:[#allocation2 + $0x28] sm:$0xff]
    %v371 = vld [vmem:[#allocation2 + $0x30] sm:$0xf]
    %v372 = vld [vmem:[#allocation2 + $0x34] sm:$0xff]
    %v373 = vld [vmem:[#allocation2 + $0x3c] sm:$0xff]
    %v374 = vld [vmem:[#allocation2 + $0x44] sm:$0xff]
    %v375 = vld [vmem:[#allocation2 + $0x4c] sm:$0xff]
    %v376 = vld [vmem:[#allocation2 + $0x54] sm:$0xff]
    %v377 = vld [vmem:[#allocation2 + $0x5c] sm:$0xff]
    %v378 = vld [vmem:[#allocation2 + $0x64] sm:$0xf]
    %v379 = vld [vmem:[#allocation2 + $0x68] sm:$0xff]
    %v380 = vld [vmem:[#allocation2 + $0x70] sm:$0xff]
    %v381 = vld [vmem:[#allocation2 + $0x78] sm:$0xff]
    %v382 = vld [vmem:[#allocation2 + $0x80] sm:$0xff]
    %v383 = vld [vmem:[#allocation2 + $0x88] sm:$0xff]
    %v384 = vld [vmem:[#allocation2 + $0x90] sm:$0xff]
    %v385 = vld [vmem:[#allocation2 + $0x98] sm:$0xf]
    %v386 = vld [vmem:[#allocation2 + $0x9c] sm:$0xff]
    %v387 = vld [vmem:[#allocation2 + $0xa4] sm:$0xff]
    %v388 = vld [vmem:[#allocation2 + $0xac] sm:$0xff]
    %v389 = vld [vmem:[#allocation2 + $0xb4] sm:$0xff]
    %v390 = vld [vmem:[#allocation2 + $0xbc] sm:$0xff]
    %v391 = vld [vmem:[#allocation2 + $0xc4] sm:$0xff]
    %v392 = vld [vmem:[#allocation2 + $0xcc] sm:$0xf]
    %v393 = vld [vmem:[#allocation6] sm:$0xf]
    %v394 = vld [vmem:[#allocation6 + $0x4] sm:$0xf]
    %v395 = vld [vmem:[#allocation6 + $0x8] sm:$0xf]
    %v396 = vld [vmem:[#allocation6 + $0xc] sm:$0xf]
    %v397 = vld [vmem:[#allocation6 + $0x10] sm:$0xf]
    %v398 = vld [vmem:[#allocation6 + $0x14] sm:$0xf]
    %v399 = vld [vmem:[#allocation6 + $0x18] sm:$0xf]
    %v400 = vld [vmem:[#allocation6 + $0x1c] sm:$0xf]
    %v401 = vld [vmem:[#allocation6 + $0x20] sm:$0xf]
    %v402 = vld [vmem:[#allocation6 + $0x24] sm:$0xf]
    %v403 = vld [vmem:[#allocation6 + $0x28] sm:$0xf]
    %v404 = vld [vmem:[#allocation6 + $0x2c] sm:$0xf]
    %v405 = vld [vmem:[#allocation6 + $0x30] sm:$0xf]
    %v406 = vld [vmem:[#allocation6 + $0x34] sm:$0xf]
    %v407 = vld [vmem:[#allocation6 + $0x38] sm:$0xf]
    %v408 = vld [vmem:[#allocation6 + $0x3c] sm:$0xf]
    %v409 = vld [vmem:[#allocation6 + $0x40] sm:$0xf]
    %v410 = vld [vmem:[#allocation6 + $0x44] sm:$0xf]
    %v411 = vld [vmem:[#allocation6 + $0x48] sm:$0xf]
    %v412 = vld [vmem:[#allocation6 + $0x4c] sm:$0xf]
    %v413 = vld [vmem:[#allocation6 + $0x50] sm:$0xf]
    %v414 = vld [vmem:[#allocation6 + $0x54] sm:$0xf]
    %v415 = vld [vmem:[#allocation6 + $0x58] sm:$0xf]
    %v416 = vld [vmem:[#allocation6 + $0x5c] sm:$0xf]
    %v417 = vld [vmem:[#allocation6 + $0x60] sm:$0xf]
    %v418 = vld [vmem:[#allocation6 + $0x64] sm:$0xf]
    %v419 = vld [vmem:[#allocation6 + $0x68] sm:$0xf]
    %v420 = vld [vmem:[#allocation6 + $0x6c] sm:$0xf]
    %v421 = vld [vmem:[#allocation6 + $0x70] sm:$0xf]
    %v422 = vld [vmem:[#allocation6 + $0x74] sm:$0xf]
    %v423 = vld [vmem:[#allocation6 + $0x78] sm:$0xf]
    %v424 = vld [vmem:[#allocation6 + $0x7c] sm:$0xf]
    %v425 = vld [vmem:[#allocation6 + $0x80] sm:$0xf]
    %v426 = vld [vmem:[#allocation6 + $0x84] sm:$0xf]
    %v427 = vld [vmem:[#allocation6 + $0x88] sm:$0xf]
    %v428 = vld [vmem:[#allocation6 + $0x8c] sm:$0xf]
    %v429 = vld [vmem:[#allocation6 + $0x90] sm:$0xf]
    %v430 = vld [vmem:[#allocation6 + $0x94] sm:$0xf]
    %v431 = vld [vmem:[#allocation6 + $0x98] sm:$0xf]
    %v432 = vld [vmem:[#allocation6 + $0x9c] sm:$0xf]
    %v433 = vld [vmem:[#allocation6 + $0xa0] sm:$0xf]
    %v434 = vld [vmem:[#allocation6 + $0xa4] sm:$0xf]
    %v435 = vld [vmem:[#allocation6 + $0xa8] sm:$0xf]
    %v436 = vld [vmem:[#allocation6 + $0xac] sm:$0xf]
    %v437 = vld [vmem:[#allocation6 + $0xb0] sm:$0xf]
    %v438 = vld [vmem:[#allocation6 + $0xb4] sm:$0xf]
    %v439 = vld [vmem:[#allocation6 + $0xb8] sm:$0xf]
    %v440 = vld [vmem:[#allocation6 + $0xbc] sm:$0xf]
    %v441 = vld [vmem:[#allocation6 + $0xc0] sm:$0xf]
    %v442 = vld [vmem:[#allocation6 + $0xc4] sm:$0xf]
    %v443 = vld [vmem:[#allocation6 + $0xc8] sm:$0xf]
    %v444 = vld [vmem:[#allocation6 + $0xcc] sm:$0xf]
    %v445 = vld [vmem:[#allocation6 + $0xd0] sm:$0xf]
    %v446 = vld [vmem:[#allocation6 + $0xd4] sm:$0xf]
    %v447 = vld [vmem:[#allocation6 + $0xd8] sm:$0xf]
    %v448 = vld [vmem:[#allocation6 + $0xdc] sm:$0xf]
    %v449 = vld [vmem:[#allocation6 + $0xe0] sm:$0xf]
    %v450 = vld [vmem:[#allocation6 + $0xe4] sm:$0xf]
    %v451 = vld [vmem:[#allocation6 + $0xe8] sm:$0xf]
    %v452 = vld [vmem:[#allocation6 + $0xec] sm:$0xf]
    %v453 = vld [vmem:[#allocation6 + $0xf0] sm:$0xf]
    %v454 = vld [vmem:[#allocation6 + $0xf4] sm:$0xf]
    %v455 = vld [vmem:[#allocation6 + $0xf8] sm:$0xf]
    %v456 = vld [vmem:[#allocation6 + $0xfc] sm:$0xf]
    %v457 = vld [vmem:[#allocation6 + $0x100] sm:$0xf]
    %v458 = vld [vmem:[#allocation6 + $0x104] sm:$0xf]
    %v459 = vld [vmem:[#allocation6 + $0x108] sm:$0xf]
    %v460 = vld [vmem:[#allocation6 + $0x10c] sm:$0xf]
    %v461 = vld [vmem:[#allocation6 + $0x110] sm:$0xf]
    %v462 = vld [vmem:[#allocation6 + $0x114] sm:$0xf]
    %v463 = vld [vmem:[#allocation6 + $0x118] sm:$0xf]
    %v464 = vld [vmem:[#allocation6 + $0x11c] sm:$0xf]
    %v465 = vld [vmem:[#allocation6 + $0x120] sm:$0xf]
    %v466 = vld [vmem:[#allocation6 + $0x124] sm:$0xf]
    %v467 = vld [vmem:[#allocation6 + $0x128] sm:$0xf]
    %v468 = vld [vmem:[#allocation6 + $0x12c] sm:$0xf]
    %v469 = vld [vmem:[#allocation6 + $0x130] sm:$0xf]
    %v470 = vld [vmem:[#allocation6 + $0x134] sm:$0xf]
    %v471 = vld [vmem:[#allocation6 + $0x138] sm:$0xf]
    %v472 = vld [vmem:[#allocation6 + $0x13c] sm:$0xf]
    %v473 = vld [vmem:[#allocation6 + $0x140] sm:$0xf]
    %v474 = vld [vmem:[#allocation6 + $0x144] sm:$0xf]
    %v475 = vld [vmem:[#allocation6 + $0x148] sm:$0xf]
    %v476 = vld [vmem:[#allocation6 + $0x14c] sm:$0xf]
    %v477 = vld [vmem:[#allocation6 + $0x150] sm:$0xf]
    %v478 = vld [vmem:[#allocation6 + $0x154] sm:$0xf]
    %v479 = vld [vmem:[#allocation6 + $0x158] sm:$0xf]
    %v480 = vld [vmem:[#allocation6 + $0x15c] sm:$0xf]
    %v481 = vld [vmem:[#allocation6 + $0x160] sm:$0xf]
    %v482 = vld [vmem:[#allocation6 + $0x164] sm:$0xf]
    %v483 = vld [vmem:[#allocation6 + $0x168] sm:$0xf]
    %v484 = vld [vmem:[#allocation6 + $0x16c] sm:$0xf]
    %v485 = vld [vmem:[#allocation6 + $0x170] sm:$0xf]
    %v486 = vld [vmem:[#allocation6 + $0x174] sm:$0xf]
    %v487 = vld [vmem:[#allocation6 + $0x178] sm:$0xf]
    %v488 = vld [vmem:[#allocation6 + $0x17c] sm:$0xf]
    %v489 = vld [vmem:[#allocation6 + $0x180] sm:$0xf]
    %v490 = vld [vmem:[#allocation6 + $0x184] sm:$0xf]
    %v491 = vld [vmem:[#allocation6 + $0x188] sm:$0xf]
    %v492 = vld [vmem:[#allocation6 + $0x18c] sm:$0xf]
    %v493 = vld [vmem:[#allocation6 + $0x190] sm:$0xf]
    %v494 = vld [vmem:[#allocation6 + $0x194] sm:$0xf]
    %v495 = vld [vmem:[#allocation6 + $0x198] sm:$0xf]
    %v496 = vld [vmem:[#allocation6 + $0x19c] sm:$0xf]
    %v497 = vld [vmem:[#allocation6 + $0x1a0] sm:$0xf]
    %v498 = vld [vmem:[#allocation6 + $0x1a4] sm:$0xf]
    %v499 = vld [vmem:[#allocation6 + $0x1a8] sm:$0xf]
    %v500 = vld [vmem:[#allocation6 + $0x1ac] sm:$0xf]
    %v501 = vld [vmem:[#allocation6 + $0x1b0] sm:$0xf]
    %v502 = vld [vmem:[#allocation6 + $0x1b4] sm:$0xf]
    %v503 = vld [vmem:[#allocation6 + $0x1b8] sm:$0xf]
    %v504 = vld [vmem:[#allocation6 + $0x1bc] sm:$0xf]
    %v505 = vld [vmem:[#allocation6 + $0x1c0] sm:$0xf]
    %v506 = vld [vmem:[#allocation6 + $0x1c4] sm:$0xf]
    %v507 = vld [vmem:[#allocation6 + $0x1c8] sm:$0xf]
    %v508 = vld [vmem:[#allocation6 + $0x1cc] sm:$0xf]
    %v509 = vld [vmem:[#allocation6 + $0x1d0] sm:$0xf]
    %v510 = vld [vmem:[#allocation6 + $0x1d4] sm:$0xf]
    %v511 = vld [vmem:[#allocation6 + $0x1d8] sm:$0xf]
    %v512 = vld [vmem:[#allocation6 + $0x1dc] sm:$0xf]
    %v513 = vld [vmem:[#allocation6 + $0x1e0] sm:$0xf]
    %v514 = vld [vmem:[#allocation6 + $0x1e4] sm:$0xf]
    %v515 = vld [vmem:[#allocation6 + $0x1e8] sm:$0xf]
    %v516 = vld [vmem:[#allocation6 + $0x1ec] sm:$0xf]
    %v517 = vld [vmem:[#allocation6 + $0x1f0] sm:$0xf]
    %v518 = vld [vmem:[#allocation6 + $0x1f4] sm:$0xf]
    %v519 = vld [vmem:[#allocation6 + $0x1f8] sm:$0xf]
    %v520 = vld [vmem:[#allocation6 + $0x1fc] sm:$0xf]
    %v521 = vld [vmem:[#allocation6 + $0x200] sm:$0xf]
    %v522 = vld [vmem:[#allocation6 + $0x204] sm:$0xf]
    %v523 = vld [vmem:[#allocation6 + $0x208] sm:$0xf]
    %v524 = vld [vmem:[#allocation6 + $0x20c] sm:$0xf]
    %v525 = vld [vmem:[#allocation6 + $0x210] sm:$0xf]
    %v526 = vld [vmem:[#allocation6 + $0x214] sm:$0xf]
    %v527 = vld [vmem:[#allocation6 + $0x218] sm:$0xf]
    %v528 = vld [vmem:[#allocation6 + $0x21c] sm:$0xf]
    %v529 = vld [vmem:[#allocation6 + $0x220] sm:$0xf]
    %v530 = vld [vmem:[#allocation6 + $0x224] sm:$0xf]
    %v531 = vld [vmem:[#allocation6 + $0x228] sm:$0xf]
    %v532 = vld [vmem:[#allocation6 + $0x22c] sm:$0xf]
    %v533 = vld [vmem:[#allocation6 + $0x230] sm:$0xf]
    %v534 = vld [vmem:[#allocation6 + $0x234] sm:$0xf]
    %v535 = vld [vmem:[#allocation6 + $0x238] sm:$0xf]
    %v536 = vld [vmem:[#allocation6 + $0x23c] sm:$0xf]
    %v537 = vld [vmem:[#allocation6 + $0x240] sm:$0xf]
    %v538 = vld [vmem:[#allocation6 + $0x244] sm:$0xf]
    %v539 = vld [vmem:[#allocation6 + $0x248] sm:$0xf]
    %v540 = vld [vmem:[#allocation6 + $0x24c] sm:$0xf]
    %v541 = vld [vmem:[#allocation6 + $0x250] sm:$0xf]
    %v542 = vld [vmem:[#allocation6 + $0x254] sm:$0xf]
    %v543 = vld [vmem:[#allocation6 + $0x258] sm:$0xf]
    %v544 = vld [vmem:[#allocation6 + $0x25c] sm:$0xf]
    %v545 = vld [vmem:[#allocation6 + $0x260] sm:$0xf]
    %v546 = vld [vmem:[#allocation6 + $0x264] sm:$0xf]
    %v547 = vld [vmem:[#allocation6 + $0x268] sm:$0xf]
    %v548 = vld [vmem:[#allocation6 + $0x26c] sm:$0xf]
    %v549 = vld [vmem:[#allocation6 + $0x270] sm:$0xf]
    %v550 = vld [vmem:[#allocation6 + $0x274] sm:$0xf]
    %v551 = vld [vmem:[#allocation6 + $0x278] sm:$0xf]
    %v552 = vld [vmem:[#allocation6 + $0x27c] sm:$0xf]
    %v553 = vld [vmem:[#allocation6 + $0x280] sm:$0xf]
    %v554 = vld [vmem:[#allocation6 + $0x284] sm:$0xf]
    %v555 = vld [vmem:[#allocation6 + $0x288] sm:$0xf]
    %v556 = vld [vmem:[#allocation6 + $0x28c] sm:$0xf]
    %v557 = vld [vmem:[#allocation6 + $0x290] sm:$0xf]
    %v558 = vld [vmem:[#allocation6 + $0x294] sm:$0xf]
    %v559 = vld [vmem:[#allocation6 + $0x298] sm:$0xf]
    %v560 = vld [vmem:[#allocation6 + $0x29c] sm:$0xf]
    %v561 = vld [vmem:[#allocation6 + $0x2a0] sm:$0xf]
    %v562 = vld [vmem:[#allocation6 + $0x2a4] sm:$0xf]
    %v563 = vld [vmem:[#allocation6 + $0x2a8] sm:$0xf]
    %v564 = vld [vmem:[#allocation6 + $0x2ac] sm:$0xf]
    %v565 = vld [vmem:[#allocation6 + $0x2b0] sm:$0xf]
    %v566 = vld [vmem:[#allocation6 + $0x2b4] sm:$0xf]
    %v567 = vld [vmem:[#allocation6 + $0x2b8] sm:$0xf]
    %v568 = vld [vmem:[#allocation6 + $0x2bc] sm:$0xf]
    %v569 = vld [vmem:[#allocation6 + $0x2c0] sm:$0xf]
    %v570 = vld [vmem:[#allocation6 + $0x2c4] sm:$0xf]
    %v571 = vld [vmem:[#allocation6 + $0x2c8] sm:$0xf]
    %v572 = vld [vmem:[#allocation6 + $0x2cc] sm:$0xf]
    %v573 = vld [vmem:[#allocation6 + $0x2d0] sm:$0xf]
    %v574 = vld [vmem:[#allocation6 + $0x2d4] sm:$0xf]
    %v575 = vld [vmem:[#allocation6 + $0x2d8] sm:$0xf]
    %v576 = vld [vmem:[#allocation6 + $0x2dc] sm:$0xf]
    %v577 = vld [vmem:[#allocation6 + $0x2e0] sm:$0xf]
    %v578 = vld [vmem:[#allocation6 + $0x2e4] sm:$0xf]
    %v579 = vld [vmem:[#allocation6 + $0x2e8] sm:$0xf]
    %v580 = vld [vmem:[#allocation6 + $0x2ec] sm:$0xf]
    %v581 = vld [vmem:[#allocation6 + $0x2f0] sm:$0xf]
    %v582 = vld [vmem:[#allocation6 + $0x2f4] sm:$0xf]
    %v583 = vld [vmem:[#allocation6 + $0x2f8] sm:$0xf]
    %v584 = vld [vmem:[#allocation6 + $0x2fc] sm:$0xf]
    %v585 = vld [vmem:[#allocation6 + $0x300] sm:$0xf]
    %v586 = vld [vmem:[#allocation6 + $0x304] sm:$0xf]
    %v587 = vld [vmem:[#allocation6 + $0x308] sm:$0xf]
    %v588 = vld [vmem:[#allocation6 + $0x30c] sm:$0xf]
    %v589 = vld [vmem:[#allocation6 + $0x310] sm:$0xf]
    %v590 = vld [vmem:[#allocation6 + $0x314] sm:$0xf]
    %v591 = vld [vmem:[#allocation6 + $0x318] sm:$0xf]
    %v592 = vld [vmem:[#allocation6 + $0x31c] sm:$0xf]
    %v593 = vld [vmem:[#allocation6 + $0x320] sm:$0xf]
    %v594 = vld [vmem:[#allocation6 + $0x324] sm:$0xf]
    %v595 = vld [vmem:[#allocation6 + $0x328] sm:$0xf]
    %v596 = vld [vmem:[#allocation6 + $0x32c] sm:$0xf]
    %v597 = vld [vmem:[#allocation6 + $0x330] sm:$0xf]
    %v598 = vld [vmem:[#allocation6 + $0x334] sm:$0xf]
    %v599 = vld [vmem:[#allocation6 + $0x338] sm:$0xf]
    %v600 = vld [vmem:[#allocation6 + $0x33c] sm:$0xf]
    %v601 = vld [vmem:[%s2] sm:$0x1]
    %v603 = vperm.slane %v601, 0
    %v633 = vunpack.c.l.b16 %v365
    %v634 = vunpack.c.h.b16 %v365
    %v635 = vunpack.c.l.b16 %v366
    %v636 = vunpack.c.h.b16 %v366
    %v637 = vunpack.c.l.b16 %v367
    %v638 = vunpack.c.h.b16 %v367
    %v639 = vunpack.c.l.b16 %v368
    %v640 = vunpack.c.h.b16 %v368
    %v641 = vunpack.c.l.b16 %v369
    %v642 = vunpack.c.h.b16 %v369
    %v643 = vunpack.c.l.b16 %v370
    %v644 = vunpack.c.h.b16 %v370
    %v645 = vunpack.c.l.b16 %v371
    %v646 = vunpack.c.l.b16 %v372
    %v647 = vunpack.c.h.b16 %v372
    %v648 = vunpack.c.l.b16 %v373
    %v649 = vunpack.c.h.b16 %v373
    %v650 = vunpack.c.l.b16 %v374
    %v651 = vunpack.c.h.b16 %v374
    %v652 = vunpack.c.l.b16 %v375
    %v653 = vunpack.c.h.b16 %v375
    %v654 = vunpack.c.l.b16 %v376
    %v655 = vunpack.c.h.b16 %v376
    %v656 = vunpack.c.l.b16 %v377
    %v657 = vunpack.c.h.b16 %v377
    %v658 = vunpack.c.l.b16 %v378
    %v659 = vunpack.c.l.b16 %v379
    %v660 = vunpack.c.h.b16 %v379
    %v661 = vunpack.c.l.b16 %v380
    %v662 = vunpack.c.h.b16 %v380
    %v663 = vunpack.c.l.b16 %v381
    %v664 = vunpack.c.h.b16 %v381
    %v665 = vunpack.c.l.b16 %v382
    %v666 = vunpack.c.h.b16 %v382
    %v667 = vunpack.c.l.b16 %v383
    %v668 = vunpack.c.h.b16 %v383
    %v669 = vunpack.c.l.b16 %v384
    %v670 = vunpack.c.h.b16 %v384
    %v671 = vunpack.c.l.b16 %v385
    %v672 = vunpack.c.l.b16 %v386
    %v673 = vunpack.c.h.b16 %v386
    %v674 = vunpack.c.l.b16 %v387
    %v675 = vunpack.c.h.b16 %v387
    %v676 = vunpack.c.l.b16 %v388
    %v677 = vunpack.c.h.b16 %v388
    %v678 = vunpack.c.l.b16 %v389
    %v679 = vunpack.c.h.b16 %v389
    %v680 = vunpack.c.l.b16 %v390
    %v681 = vunpack.c.h.b16 %v390
    %v682 = vunpack.c.l.b16 %v391
    %v683 = vunpack.c.h.b16 %v391
    %v684 = vunpack.c.l.b16 %v392
    %v685 = vpack.c.b16 %v646, %v633
    %v686 = vpack.c.b16 %v647, %v634
    %v687 = vpack.c.b16 %v648, %v635
    %v688 = vpack.c.b16 %v649, %v636
    %v689 = vpack.c.b16 %v650, %v637
    %v690 = vpack.c.b16 %v651, %v638
    %v691 = vpack.c.b16 %v652, %v639
    %v692 = vpack.c.b16 %v653, %v640
    %v693 = vpack.c.b16 %v654, %v641
    %v694 = vpack.c.b16 %v655, %v642
    %v695 = vpack.c.b16 %v656, %v643
    %v696 = vpack.c.b16 %v657, %v644
    %v697 = vpack.c.b16 %v658, %v645
    %v698 = vpack.c.b16 %v672, %v659
    %v699 = vpack.c.b16 %v673, %v660
    %v700 = vpack.c.b16 %v674, %v661
    %v701 = vpack.c.b16 %v675, %v662
    %v702 = vpack.c.b16 %v676, %v663
    %v703 = vpack.c.b16 %v677, %v664
    %v704 = vpack.c.b16 %v678, %v665
    %v705 = vpack.c.b16 %v679, %v666
    %v706 = vpack.c.b16 %v680, %v667
    %v707 = vpack.c.b16 %v681, %v668
    %v708 = vpack.c.b16 %v682, %v669
    %v709 = vpack.c.b16 %v683, %v670
    %v710 = vpack.c.b16 %v684, %v671
    %v945 = vunpack.c.l.b16 %v393
    %v946 = vunpack.c.l.b16 %v394
    %v947 = vunpack.c.l.b16 %v395
    %v948 = vunpack.c.l.b16 %v396
    %v949 = vunpack.c.l.b16 %v397
    %v950 = vunpack.c.l.b16 %v398
    %v951 = vunpack.c.l.b16 %v399
    %v952 = vunpack.c.l.b16 %v400
    %v953 = vunpack.c.l.b16 %v401
    %v954 = vunpack.c.l.b16 %v402
    %v955 = vunpack.c.l.b16 %v403
    %v956 = vunpack.c.l.b16 %v404
    %v957 = vunpack.c.l.b16 %v405
    %v958 = vunpack.c.l.b16 %v406
    %v959 = vunpack.c.l.b16 %v407
    %v960 = vunpack.c.l.b16 %v408
    %v961 = vunpack.c.l.b16 %v409
    %v962 = vunpack.c.l.b16 %v410
    %v963 = vunpack.c.l.b16 %v411
    %v964 = vunpack.c.l.b16 %v412
    %v965 = vunpack.c.l.b16 %v413
    %v966 = vunpack.c.l.b16 %v414
    %v967 = vunpack.c.l.b16 %v415
    %v968 = vunpack.c.l.b16 %v416
    %v969 = vunpack.c.l.b16 %v417
    %v970 = vunpack.c.l.b16 %v418
    %v971 = vunpack.c.l.b16 %v419
    %v972 = vunpack.c.l.b16 %v420
    %v973 = vunpack.c.l.b16 %v421
    %v974 = vunpack.c.l.b16 %v422
    %v975 = vunpack.c.l.b16 %v423
    %v976 = vunpack.c.l.b16 %v424
    %v977 = vunpack.c.l.b16 %v425
    %v978 = vunpack.c.l.b16 %v426
    %v979 = vunpack.c.l.b16 %v427
    %v980 = vunpack.c.l.b16 %v428
    %v981 = vunpack.c.l.b16 %v429
    %v982 = vunpack.c.l.b16 %v430
    %v983 = vunpack.c.l.b16 %v431
    %v984 = vunpack.c.l.b16 %v432
    %v985 = vunpack.c.l.b16 %v433
    %v986 = vunpack.c.l.b16 %v434
    %v987 = vunpack.c.l.b16 %v435
    %v988 = vunpack.c.l.b16 %v436
    %v989 = vunpack.c.l.b16 %v437
    %v990 = vunpack.c.l.b16 %v438
    %v991 = vunpack.c.l.b16 %v439
    %v992 = vunpack.c.l.b16 %v440
    %v993 = vunpack.c.l.b16 %v441
    %v994 = vunpack.c.l.b16 %v442
    %v995 = vunpack.c.l.b16 %v443
    %v996 = vunpack.c.l.b16 %v444
    %v997 = vunpack.c.l.b16 %v445
    %v998 = vunpack.c.l.b16 %v446
    %v999 = vunpack.c.l.b16 %v447
    %v1000 = vunpack.c.l.b16 %v448
    %v1001 = vunpack.c.l.b16 %v449
    %v1002 = vunpack.c.l.b16 %v450
    %v1003 = vunpack.c.l.b16 %v451
    %v1004 = vunpack.c.l.b16 %v452
    %v1005 = vunpack.c.l.b16 %v453
    %v1006 = vunpack.c.l.b16 %v454
    %v1007 = vunpack.c.l.b16 %v455
    %v1008 = vunpack.c.l.b16 %v456
    %v1009 = vunpack.c.l.b16 %v457
    %v1010 = vunpack.c.l.b16 %v458
    %v1011 = vunpack.c.l.b16 %v459
    %v1012 = vunpack.c.l.b16 %v460
    %v1013 = vunpack.c.l.b16 %v461
    %v1014 = vunpack.c.l.b16 %v462
    %v1015 = vunpack.c.l.b16 %v463
    %v1016 = vunpack.c.l.b16 %v464
    %v1017 = vunpack.c.l.b16 %v465
    %v1018 = vunpack.c.l.b16 %v466
    %v1019 = vunpack.c.l.b16 %v467
    %v1020 = vunpack.c.l.b16 %v468
    %v1021 = vunpack.c.l.b16 %v469
    %v1022 = vunpack.c.l.b16 %v470
    %v1023 = vunpack.c.l.b16 %v471
    %v1024 = vunpack.c.l.b16 %v472
    %v1025 = vunpack.c.l.b16 %v473
    %v1026 = vunpack.c.l.b16 %v474
    %v1027 = vunpack.c.l.b16 %v475
    %v1028 = vunpack.c.l.b16 %v476
    %v1029 = vunpack.c.l.b16 %v477
    %v1030 = vunpack.c.l.b16 %v478
    %v1031 = vunpack.c.l.b16 %v479
    %v1032 = vunpack.c.l.b16 %v480
    %v1033 = vunpack.c.l.b16 %v481
    %v1034 = vunpack.c.l.b16 %v482
    %v1035 = vunpack.c.l.b16 %v483
    %v1036 = vunpack.c.l.b16 %v484
    %v1037 = vunpack.c.l.b16 %v485
    %v1038 = vunpack.c.l.b16 %v486
    %v1039 = vunpack.c.l.b16 %v487
    %v1040 = vunpack.c.l.b16 %v488
    %v1041 = vunpack.c.l.b16 %v489
    %v1042 = vunpack.c.l.b16 %v490
    %v1043 = vunpack.c.l.b16 %v491
    %v1044 = vunpack.c.l.b16 %v492
    %v1045 = vunpack.c.l.b16 %v493
    %v1046 = vunpack.c.l.b16 %v494
    %v1047 = vunpack.c.l.b16 %v495
    %v1048 = vunpack.c.l.b16 %v496
    %v1049 = vunpack.c.l.b16 %v497
    %v1050 = vunpack.c.l.b16 %v498
    %v1051 = vunpack.c.l.b16 %v499
    %v1052 = vunpack.c.l.b16 %v500
    %v1053 = vunpack.c.l.b16 %v501
    %v1054 = vunpack.c.l.b16 %v502
    %v1055 = vunpack.c.l.b16 %v503
    %v1056 = vunpack.c.l.b16 %v504
    %v1057 = vunpack.c.l.b16 %v505
    %v1058 = vunpack.c.l.b16 %v506
    %v1059 = vunpack.c.l.b16 %v507
    %v1060 = vunpack.c.l.b16 %v508
    %v1061 = vunpack.c.l.b16 %v509
    %v1062 = vunpack.c.l.b16 %v510
    %v1063 = vunpack.c.l.b16 %v511
    %v1064 = vunpack.c.l.b16 %v512
    %v1065 = vunpack.c.l.b16 %v513
    %v1066 = vunpack.c.l.b16 %v514
    %v1067 = vunpack.c.l.b16 %v515
    %v1068 = vunpack.c.l.b16 %v516
    %v1069 = vunpack.c.l.b16 %v517
    %v1070 = vunpack.c.l.b16 %v518
    %v1071 = vunpack.c.l.b16 %v519
    %v1072 = vunpack.c.l.b16 %v520
    %v1073 = vunpack.c.l.b16 %v521
    %v1074 = vunpack.c.l.b16 %v522
    %v1075 = vunpack.c.l.b16 %v523
    %v1076 = vunpack.c.l.b16 %v524
    %v1077 = vunpack.c.l.b16 %v525
    %v1078 = vunpack.c.l.b16 %v526
    %v1079 = vunpack.c.l.b16 %v527
    %v1080 = vunpack.c.l.b16 %v528
    %v1081 = vunpack.c.l.b16 %v529
    %v1082 = vunpack.c.l.b16 %v530
    %v1083 = vunpack.c.l.b16 %v531
    %v1084 = vunpack.c.l.b16 %v532
    %v1085 = vunpack.c.l.b16 %v533
    %v1086 = vunpack.c.l.b16 %v534
    %v1087 = vunpack.c.l.b16 %v535
    %v1088 = vunpack.c.l.b16 %v536
    %v1089 = vunpack.c.l.b16 %v537
    %v1090 = vunpack.c.l.b16 %v538
    %v1091 = vunpack.c.l.b16 %v539
    %v1092 = vunpack.c.l.b16 %v540
    %v1093 = vunpack.c.l.b16 %v541
    %v1094 = vunpack.c.l.b16 %v542
    %v1095 = vunpack.c.l.b16 %v543
    %v1096 = vunpack.c.l.b16 %v544
    %v1097 = vunpack.c.l.b16 %v545
    %v1098 = vunpack.c.l.b16 %v546
    %v1099 = vunpack.c.l.b16 %v547
    %v1100 = vunpack.c.l.b16 %v548
    %v1101 = vunpack.c.l.b16 %v549
    %v1102 = vunpack.c.l.b16 %v550
    %v1103 = vunpack.c.l.b16 %v551
    %v1104 = vunpack.c.l.b16 %v552
    %v1105 = vunpack.c.l.b16 %v553
    %v1106 = vunpack.c.l.b16 %v554
    %v1107 = vunpack.c.l.b16 %v555
    %v1108 = vunpack.c.l.b16 %v556
    %v1109 = vunpack.c.l.b16 %v557
    %v1110 = vunpack.c.l.b16 %v558
    %v1111 = vunpack.c.l.b16 %v559
    %v1112 = vunpack.c.l.b16 %v560
    %v1113 = vunpack.c.l.b16 %v561
    %v1114 = vunpack.c.l.b16 %v562
    %v1115 = vunpack.c.l.b16 %v563
    %v1116 = vunpack.c.l.b16 %v564
    %v1117 = vunpack.c.l.b16 %v565
    %v1118 = vunpack.c.l.b16 %v566
    %v1119 = vunpack.c.l.b16 %v567
    %v1120 = vunpack.c.l.b16 %v568
    %v1121 = vunpack.c.l.b16 %v569
    %v1122 = vunpack.c.l.b16 %v570
    %v1123 = vunpack.c.l.b16 %v571
    %v1124 = vunpack.c.l.b16 %v572
    %v1125 = vunpack.c.l.b16 %v573
    %v1126 = vunpack.c.l.b16 %v574
    %v1127 = vunpack.c.l.b16 %v575
    %v1128 = vunpack.c.l.b16 %v576
    %v1129 = vunpack.c.l.b16 %v577
    %v1130 = vunpack.c.l.b16 %v578
    %v1131 = vunpack.c.l.b16 %v579
    %v1132 = vunpack.c.l.b16 %v580
    %v1133 = vunpack.c.l.b16 %v581
    %v1134 = vunpack.c.l.b16 %v582
    %v1135 = vunpack.c.l.b16 %v583
    %v1136 = vunpack.c.l.b16 %v584
    %v1137 = vunpack.c.l.b16 %v585
    %v1138 = vunpack.c.l.b16 %v586
    %v1139 = vunpack.c.l.b16 %v587
    %v1140 = vunpack.c.l.b16 %v588
    %v1141 = vunpack.c.l.b16 %v589
    %v1142 = vunpack.c.l.b16 %v590
    %v1143 = vunpack.c.l.b16 %v591
    %v1144 = vunpack.c.l.b16 %v592
    %v1145 = vunpack.c.l.b16 %v593
    %v1146 = vunpack.c.l.b16 %v594
    %v1147 = vunpack.c.l.b16 %v595
    %v1148 = vunpack.c.l.b16 %v596
    %v1149 = vunpack.c.l.b16 %v597
    %v1150 = vunpack.c.l.b16 %v598
    %v1151 = vunpack.c.l.b16 %v599
    %v1152 = vunpack.c.l.b16 %v600
    %v1153 = vpack.c.b16 %v946, %v945
    %v1154 = vpack.c.b16 %v948, %v947
    %v1155 = vpack.c.b16 %v950, %v949
    %v1156 = vpack.c.b16 %v952, %v951
    %v1157 = vpack.c.b16 %v954, %v953
    %v1158 = vpack.c.b16 %v956, %v955
    %v1159 = vpack.c.b16 %v958, %v957
    %v1160 = vpack.c.b16 %v960, %v959
    %v1161 = vpack.c.b16 %v962, %v961
    %v1162 = vpack.c.b16 %v964, %v963
    %v1163 = vpack.c.b16 %v966, %v965
    %v1164 = vpack.c.b16 %v968, %v967
    %v1165 = vpack.c.b16 %v970, %v969
    %v1166 = vpack.c.b16 %v972, %v971
    %v1167 = vpack.c.b16 %v974, %v973
    %v1168 = vpack.c.b16 %v976, %v975
    %v1169 = vpack.c.b16 %v978, %v977
    %v1170 = vpack.c.b16 %v980, %v979
    %v1171 = vpack.c.b16 %v982, %v981
    %v1172 = vpack.c.b16 %v984, %v983
    %v1173 = vpack.c.b16 %v986, %v985
    %v1174 = vpack.c.b16 %v988, %v987
    %v1175 = vpack.c.b16 %v990, %v989
    %v1176 = vpack.c.b16 %v992, %v991
    %v1177 = vpack.c.b16 %v994, %v993
    %v1178 = vpack.c.b16 %v996, %v995
    %v1179 = vpack.c.b16 %v998, %v997
    %v1180 = vpack.c.b16 %v1000, %v999
    %v1181 = vpack.c.b16 %v1002, %v1001
    %v1182 = vpack.c.b16 %v1004, %v1003
    %v1183 = vpack.c.b16 %v1006, %v1005
    %v1184 = vpack.c.b16 %v1008, %v1007
    %v1185 = vpack.c.b16 %v1010, %v1009
    %v1186 = vpack.c.b16 %v1012, %v1011
    %v1187 = vpack.c.b16 %v1014, %v1013
    %v1188 = vpack.c.b16 %v1016, %v1015
    %v1189 = vpack.c.b16 %v1018, %v1017
    %v1190 = vpack.c.b16 %v1020, %v1019
    %v1191 = vpack.c.b16 %v1022, %v1021
    %v1192 = vpack.c.b16 %v1024, %v1023
    %v1193 = vpack.c.b16 %v1026, %v1025
    %v1194 = vpack.c.b16 %v1028, %v1027
    %v1195 = vpack.c.b16 %v1030, %v1029
    %v1196 = vpack.c.b16 %v1032, %v1031
    %v1197 = vpack.c.b16 %v1034, %v1033
    %v1198 = vpack.c.b16 %v1036, %v1035
    %v1199 = vpack.c.b16 %v1038, %v1037
    %v1200 = vpack.c.b16 %v1040, %v1039
    %v1201 = vpack.c.b16 %v1042, %v1041
    %v1202 = vpack.c.b16 %v1044, %v1043
    %v1203 = vpack.c.b16 %v1046, %v1045
    %v1204 = vpack.c.b16 %v1048, %v1047
    %v1205 = vpack.c.b16 %v1050, %v1049
    %v1206 = vpack.c.b16 %v1052, %v1051
    %v1207 = vpack.c.b16 %v1054, %v1053
    %v1208 = vpack.c.b16 %v1056, %v1055
    %v1209 = vpack.c.b16 %v1058, %v1057
    %v1210 = vpack.c.b16 %v1060, %v1059
    %v1211 = vpack.c.b16 %v1062, %v1061
    %v1212 = vpack.c.b16 %v1064, %v1063
    %v1213 = vpack.c.b16 %v1066, %v1065
    %v1214 = vpack.c.b16 %v1068, %v1067
    %v1215 = vpack.c.b16 %v1070, %v1069
    %v1216 = vpack.c.b16 %v1072, %v1071
    %v1217 = vpack.c.b16 %v1074, %v1073
    %v1218 = vpack.c.b16 %v1076, %v1075
    %v1219 = vpack.c.b16 %v1078, %v1077
    %v1220 = vpack.c.b16 %v1080, %v1079
    %v1221 = vpack.c.b16 %v1082, %v1081
    %v1222 = vpack.c.b16 %v1084, %v1083
    %v1223 = vpack.c.b16 %v1086, %v1085
    %v1224 = vpack.c.b16 %v1088, %v1087
    %v1225 = vpack.c.b16 %v1090, %v1089
    %v1226 = vpack.c.b16 %v1092, %v1091
    %v1227 = vpack.c.b16 %v1094, %v1093
    %v1228 = vpack.c.b16 %v1096, %v1095
    %v1229 = vpack.c.b16 %v1098, %v1097
    %v1230 = vpack.c.b16 %v1100, %v1099
    %v1231 = vpack.c.b16 %v1102, %v1101
    %v1232 = vpack.c.b16 %v1104, %v1103
    %v1233 = vpack.c.b16 %v1106, %v1105
    %v1234 = vpack.c.b16 %v1108, %v1107
    %v1235 = vpack.c.b16 %v1110, %v1109
    %v1236 = vpack.c.b16 %v1112, %v1111
    %v1237 = vpack.c.b16 %v1114, %v1113
    %v1238 = vpack.c.b16 %v1116, %v1115
    %v1239 = vpack.c.b16 %v1118, %v1117
    %v1240 = vpack.c.b16 %v1120, %v1119
    %v1241 = vpack.c.b16 %v1122, %v1121
    %v1242 = vpack.c.b16 %v1124, %v1123
    %v1243 = vpack.c.b16 %v1126, %v1125
    %v1244 = vpack.c.b16 %v1128, %v1127
    %v1245 = vpack.c.b16 %v1130, %v1129
    %v1246 = vpack.c.b16 %v1132, %v1131
    %v1247 = vpack.c.b16 %v1134, %v1133
    %v1248 = vpack.c.b16 %v1136, %v1135
    %v1249 = vpack.c.b16 %v1138, %v1137
    %v1250 = vpack.c.b16 %v1140, %v1139
    %v1251 = vpack.c.b16 %v1142, %v1141
    %v1252 = vpack.c.b16 %v1144, %v1143
    %v1253 = vpack.c.b16 %v1146, %v1145
    %v1254 = vpack.c.b16 %v1148, %v1147
    %v1255 = vpack.c.b16 %v1150, %v1149
    %v1256 = vpack.c.b16 %v1152, %v1151
    %1361 = vmatpush.bf16.msra.mxu0 %v1160
    %1362 = vmatpush.bf16.msra.mxu0 %v1159
    %1363 = vmatpush.bf16.msra.mxu0 %v1158
    %1364 = vmatpush.bf16.msra.mxu0 %v1157
    %1365 = vmatpush.bf16.msra.mxu0 %v1156
    %1366 = vmatpush.bf16.msra.mxu0 %v1155
    %1367 = vmatpush.bf16.msra.mxu0 %v1154
    %1368 = vmatpush.bf16.msra.mxu0 %v1153
    %1369 = vmatmul.bf16.gmra.mxu0 %v685
    %v1370 = vpop.f32.mrf.mxu0
    %v1371 = vadd.f32 %v603, %v1370
    %v1372 = vpop.f32.mrf.mxu0
    %v1373 = vadd.f32 %v603, %v1372
    %1374 = vmatmul.bf16.gmra.mxu0 %v698
    %v1375 = vpop.f32.mrf.mxu0
    %v1376 = vadd.f32 %v603, %v1375
    %v1377 = vpop.f32.mrf.mxu0
    %v1378 = vadd.f32 %v603, %v1377
    %1379 = vdwg.mxu0
    %1380 = vmatpush.bf16.msra.mxu0 %v1168
    %1381 = vmatpush.bf16.msra.mxu0 %v1167
    %1382 = vmatpush.bf16.msra.mxu0 %v1166
    %1383 = vmatpush.bf16.msra.mxu0 %v1165
    %1384 = vmatpush.bf16.msra.mxu0 %v1164
    %1385 = vmatpush.bf16.msra.mxu0 %v1163
    %1386 = vmatpush.bf16.msra.mxu0 %v1162
    %1387 = vmatpush.bf16.msra.mxu0 %v1161
    %1388 = vmatmul.bf16.gmra.mxu0 %v686
    %v1389 = vpop.f32.mrf.mxu0
    %v1390 = vadd.f32 %v1371, %v1389
    %v1391 = vpop.f32.mrf.mxu0
    %v1392 = vadd.f32 %v1373, %v1391
    %1393 = vmatmul.bf16.gmra.mxu0 %v699
    %v1394 = vpop.f32.mrf.mxu0
    %v1395 = vadd.f32 %v1376, %v1394
    %v1396 = vpop.f32.mrf.mxu0
    %v1397 = vadd.f32 %v1378, %v1396
    %1398 = vdwg.mxu0
    %1399 = vmatpush.bf16.msra.mxu0 %v1176
    %1400 = vmatpush.bf16.msra.mxu0 %v1175
    %1401 = vmatpush.bf16.msra.mxu0 %v1174
    %1402 = vmatpush.bf16.msra.mxu0 %v1173
    %1403 = vmatpush.bf16.msra.mxu0 %v1172
    %1404 = vmatpush.bf16.msra.mxu0 %v1171
    %1405 = vmatpush.bf16.msra.mxu0 %v1170
    %1406 = vmatpush.bf16.msra.mxu0 %v1169
    %1407 = vmatmul.bf16.gmra.mxu0 %v687
    %v1408 = vpop.f32.mrf.mxu0
    %v1409 = vadd.f32 %v1390, %v1408
    %v1410 = vpop.f32.mrf.mxu0
    %v1411 = vadd.f32 %v1392, %v1410
    %1412 = vmatmul.bf16.gmra.mxu0 %v700
    %v1413 = vpop.f32.mrf.mxu0
    %v1414 = vadd.f32 %v1395, %v1413
    %v1415 = vpop.f32.mrf.mxu0
    %v1416 = vadd.f32 %v1397, %v1415
    %1417 = vdwg.mxu0
    %1418 = vmatpush.bf16.msra.mxu0 %v1184
    %1419 = vmatpush.bf16.msra.mxu0 %v1183
    %1420 = vmatpush.bf16.msra.mxu0 %v1182
    %1421 = vmatpush.bf16.msra.mxu0 %v1181
    %1422 = vmatpush.bf16.msra.mxu0 %v1180
    %1423 = vmatpush.bf16.msra.mxu0 %v1179
    %1424 = vmatpush.bf16.msra.mxu0 %v1178
    %1425 = vmatpush.bf16.msra.mxu0 %v1177
    %1426 = vmatmul.bf16.gmra.mxu0 %v688
    %v1427 = vpop.f32.mrf.mxu0
    %v1428 = vadd.f32 %v1409, %v1427
    %v1429 = vpop.f32.mrf.mxu0
    %v1430 = vadd.f32 %v1411, %v1429
    %1431 = vmatmul.bf16.gmra.mxu0 %v701
    %v1432 = vpop.f32.mrf.mxu0
    %v1433 = vadd.f32 %v1414, %v1432
    %v1434 = vpop.f32.mrf.mxu0
    %v1435 = vadd.f32 %v1416, %v1434
    %1436 = vdwg.mxu0
    %1437 = vmatpush.bf16.msra.mxu0 %v1192
    %1438 = vmatpush.bf16.msra.mxu0 %v1191
    %1439 = vmatpush.bf16.msra.mxu0 %v1190
    %1440 = vmatpush.bf16.msra.mxu0 %v1189
    %1441 = vmatpush.bf16.msra.mxu0 %v1188
    %1442 = vmatpush.bf16.msra.mxu0 %v1187
    %1443 = vmatpush.bf16.msra.mxu0 %v1186
    %1444 = vmatpush.bf16.msra.mxu0 %v1185
    %1445 = vmatmul.bf16.gmra.mxu0 %v689
    %v1446 = vpop.f32.mrf.mxu0
    %v1447 = vadd.f32 %v1428, %v1446
    %v1448 = vpop.f32.mrf.mxu0
    %v1449 = vadd.f32 %v1430, %v1448
    %1450 = vmatmul.bf16.gmra.mxu0 %v702
    %v1451 = vpop.f32.mrf.mxu0
    %v1452 = vadd.f32 %v1433, %v1451
    %v1453 = vpop.f32.mrf.mxu0
    %v1454 = vadd.f32 %v1435, %v1453
    %1455 = vdwg.mxu0
    %1456 = vmatpush.bf16.msra.mxu0 %v1200
    %1457 = vmatpush.bf16.msra.mxu0 %v1199
    %1458 = vmatpush.bf16.msra.mxu0 %v1198
    %1459 = vmatpush.bf16.msra.mxu0 %v1197
    %1460 = vmatpush.bf16.msra.mxu0 %v1196
    %1461 = vmatpush.bf16.msra.mxu0 %v1195
    %1462 = vmatpush.bf16.msra.mxu0 %v1194
    %1463 = vmatpush.bf16.msra.mxu0 %v1193
    %1464 = vmatmul.bf16.gmra.mxu0 %v690
    %v1465 = vpop.f32.mrf.mxu0
    %v1466 = vadd.f32 %v1447, %v1465
    %v1467 = vpop.f32.mrf.mxu0
    %v1468 = vadd.f32 %v1449, %v1467
    %1469 = vmatmul.bf16.gmra.mxu0 %v703
    %v1470 = vpop.f32.mrf.mxu0
    %v1471 = vadd.f32 %v1452, %v1470
    %v1472 = vpop.f32.mrf.mxu0
    %v1473 = vadd.f32 %v1454, %v1472
    %1474 = vdwg.mxu0
    %1475 = vmatpush.bf16.msra.mxu0 %v1208
    %1476 = vmatpush.bf16.msra.mxu0 %v1207
    %1477 = vmatpush.bf16.msra.mxu0 %v1206
    %1478 = vmatpush.bf16.msra.mxu0 %v1205
    %1479 = vmatpush.bf16.msra.mxu0 %v1204
    %1480 = vmatpush.bf16.msra.mxu0 %v1203
    %1481 = vmatpush.bf16.msra.mxu0 %v1202
    %1482 = vmatpush.bf16.msra.mxu0 %v1201
    %1483 = vmatmul.bf16.gmra.mxu0 %v691
    %v1484 = vpop.f32.mrf.mxu0
    %v1485 = vadd.f32 %v1466, %v1484
    %v1486 = vpop.f32.mrf.mxu0
    %v1487 = vadd.f32 %v1468, %v1486
    %1488 = vmatmul.bf16.gmra.mxu0 %v704
    %v1489 = vpop.f32.mrf.mxu0
    %v1490 = vadd.f32 %v1471, %v1489
    %v1491 = vpop.f32.mrf.mxu0
    %v1492 = vadd.f32 %v1473, %v1491
    %1493 = vdwg.mxu0
    %1494 = vmatpush.bf16.msra.mxu0 %v1216
    %1495 = vmatpush.bf16.msra.mxu0 %v1215
    %1496 = vmatpush.bf16.msra.mxu0 %v1214
    %1497 = vmatpush.bf16.msra.mxu0 %v1213
    %1498 = vmatpush.bf16.msra.mxu0 %v1212
    %1499 = vmatpush.bf16.msra.mxu0 %v1211
    %1500 = vmatpush.bf16.msra.mxu0 %v1210
    %1501 = vmatpush.bf16.msra.mxu0 %v1209
    %1502 = vmatmul.bf16.gmra.mxu0 %v692
    %v1503 = vpop.f32.mrf.mxu0
    %v1504 = vadd.f32 %v1485, %v1503
    %v1505 = vpop.f32.mrf.mxu0
    %v1506 = vadd.f32 %v1487, %v1505
    %1507 = vmatmul.bf16.gmra.mxu0 %v705
    %v1508 = vpop.f32.mrf.mxu0
    %v1509 = vadd.f32 %v1490, %v1508
    %v1510 = vpop.f32.mrf.mxu0
    %v1511 = vadd.f32 %v1492, %v1510
    %1512 = vdwg.mxu0
    %1513 = vmatpush.bf16.msra.mxu0 %v1224
    %1514 = vmatpush.bf16.msra.mxu0 %v1223
    %1515 = vmatpush.bf16.msra.mxu0 %v1222
    %1516 = vmatpush.bf16.msra.mxu0 %v1221
    %1517 = vmatpush.bf16.msra.mxu0 %v1220
    %1518 = vmatpush.bf16.msra.mxu0 %v1219
    %1519 = vmatpush.bf16.msra.mxu0 %v1218
    %1520 = vmatpush.bf16.msra.mxu0 %v1217
    %1521 = vmatmul.bf16.gmra.mxu0 %v693
    %v1522 = vpop.f32.mrf.mxu0
    %v1523 = vadd.f32 %v1504, %v1522
    %v1524 = vpop.f32.mrf.mxu0
    %v1525 = vadd.f32 %v1506, %v1524
    %1526 = vmatmul.bf16.gmra.mxu0 %v706
    %v1527 = vpop.f32.mrf.mxu0
    %v1528 = vadd.f32 %v1509, %v1527
    %v1529 = vpop.f32.mrf.mxu0
    %v1530 = vadd.f32 %v1511, %v1529
    %1531 = vdwg.mxu0
    %1532 = vmatpush.bf16.msra.mxu0 %v1232
    %1533 = vmatpush.bf16.msra.mxu0 %v1231
    %1534 = vmatpush.bf16.msra.mxu0 %v1230
    %1535 = vmatpush.bf16.msra.mxu0 %v1229
    %1536 = vmatpush.bf16.msra.mxu0 %v1228
    %1537 = vmatpush.bf16.msra.mxu0 %v1227
    %1538 = vmatpush.bf16.msra.mxu0 %v1226
    %1539 = vmatpush.bf16.msra.mxu0 %v1225
    %1540 = vmatmul.bf16.gmra.mxu0 %v694
    %v1541 = vpop.f32.mrf.mxu0
    %v1542 = vadd.f32 %v1523, %v1541
    %v1543 = vpop.f32.mrf.mxu0
    %v1544 = vadd.f32 %v1525, %v1543
    %1545 = vmatmul.bf16.gmra.mxu0 %v707
    %v1546 = vpop.f32.mrf.mxu0
    %v1547 = vadd.f32 %v1528, %v1546
    %v1548 = vpop.f32.mrf.mxu0
    %v1549 = vadd.f32 %v1530, %v1548
    %1550 = vdwg.mxu0
    %1551 = vmatpush.bf16.msra.mxu0 %v1240
    %1552 = vmatpush.bf16.msra.mxu0 %v1239
    %1553 = vmatpush.bf16.msra.mxu0 %v1238
    %1554 = vmatpush.bf16.msra.mxu0 %v1237
    %1555 = vmatpush.bf16.msra.mxu0 %v1236
    %1556 = vmatpush.bf16.msra.mxu0 %v1235
    %1557 = vmatpush.bf16.msra.mxu0 %v1234
    %1558 = vmatpush.bf16.msra.mxu0 %v1233
    %1559 = vmatmul.bf16.gmra.mxu0 %v695
    %v1560 = vpop.f32.mrf.mxu0
    %v1561 = vadd.f32 %v1542, %v1560
    %v1562 = vpop.f32.mrf.mxu0
    %v1563 = vadd.f32 %v1544, %v1562
    %1564 = vmatmul.bf16.gmra.mxu0 %v708
    %v1565 = vpop.f32.mrf.mxu0
    %v1566 = vadd.f32 %v1547, %v1565
    %v1567 = vpop.f32.mrf.mxu0
    %v1568 = vadd.f32 %v1549, %v1567
    %1569 = vdwg.mxu0
    %1570 = vmatpush.bf16.msra.mxu0 %v1248
    %1571 = vmatpush.bf16.msra.mxu0 %v1247
    %1572 = vmatpush.bf16.msra.mxu0 %v1246
    %1573 = vmatpush.bf16.msra.mxu0 %v1245
    %1574 = vmatpush.bf16.msra.mxu0 %v1244
    %1575 = vmatpush.bf16.msra.mxu0 %v1243
    %1576 = vmatpush.bf16.msra.mxu0 %v1242
    %1577 = vmatpush.bf16.msra.mxu0 %v1241
    %1578 = vmatmul.bf16.gmra.mxu0 %v696
    %v1579 = vpop.f32.mrf.mxu0
    %v1580 = vadd.f32 %v1561, %v1579
    %v1581 = vpop.f32.mrf.mxu0
    %v1582 = vadd.f32 %v1563, %v1581
    %1583 = vmatmul.bf16.gmra.mxu0 %v709
    %v1584 = vpop.f32.mrf.mxu0
    %v1585 = vadd.f32 %v1566, %v1584
    %v1586 = vpop.f32.mrf.mxu0
    %v1587 = vadd.f32 %v1568, %v1586
    %1588 = vdwg.mxu0
    %1589 = vmatpush.bf16.msra.mxu0 %v1256
    %1590 = vmatpush.bf16.msra.mxu0 %v1255
    %1591 = vmatpush.bf16.msra.mxu0 %v1254
    %1592 = vmatpush.bf16.msra.mxu0 %v1253
    %1593 = vmatpush.bf16.msra.mxu0 %v1252
    %1594 = vmatpush.bf16.msra.mxu0 %v1251
    %1595 = vmatpush.bf16.msra.mxu0 %v1250
    %1596 = vmatpush.bf16.msra.mxu0 %v1249
    %1597 = vmatmul.bf16.gmra.mxu0 %v697
    %v1598 = vpop.f32.mrf.mxu0
    %v1599 = vadd.f32 %v1580, %v1598
    %v1600 = vpop.f32.mrf.mxu0
    %v1601 = vadd.f32 %v1582, %v1600
    %1602 = vmatmul.bf16.gmra.mxu0 %v710
    %v1603 = vpop.f32.mrf.mxu0
    %v1604 = vadd.f32 %v1585, %v1603
    %v1605 = vpop.f32.mrf.mxu0
    %v1606 = vadd.f32 %v1587, %v1605
    %1607 = vdwg.mxu0
    %v1608 = vld [vmem:[%s3] sm:$0x1]
    %vm1609 = vcmp.ge.f32.partialorder %v1599, 0.0
    %vm1610 = vcmp.ge.f32.partialorder %v1601, 0.0
    %vm1611 = vcmp.ge.f32.partialorder %v1604, 0.0
    %vm1612 = vcmp.ge.f32.partialorder %v1606, 0.0
    %v1614 = vperm.slane %v1608, 0
    %v1616 = vmul.f32 %v1614, %v1599
    %v1617 = vmul.f32 %v1614, %v1601
    %v1618 = vmul.f32 %v1614, %v1604
    %v1619 = vmul.f32 %v1614, %v1606
    %v1620 = vsel %vm1609, %v1599, %v1616
    %v1621 = vsel %vm1610, %v1601, %v1617
    %v1622 = vsel %vm1611, %v1604, %v1618
    %v1623 = vsel %vm1612, %v1606, %v1619
    %v1624 = vrot.slane %v1620, 6
    %v1625 = vrot.slane %v1621, 6
    %v1626 = vrot.slane %v1622, 6
    %v1627 = vrot.slane %v1623, 6
    %v1628 = vsel %vm139, %v1626, %v1627
    %v1629 = vsel %vm139, %v1625, %v1626
    %v1630 = vsel %vm139, %v1624, %v1625
    %v1631 = vsel %vm139, %v1627, %v1624
    %v1632 = vsel %vm148, %v1631, 0.0
    %v1633 = vsel %vm149, %v1630, 0.0
    %v1634 = vsel %vm150, %v1629, 0.0
    %v1635 = vsel %vm151, %v1628, 0.0
    %1636 = vrot.lane.b32.xlu0 %v1632, 16
    %v1637 = vpop.permute.xlu0 %1636
    %1638 = vrot.lane.b32.xlu0 %v1633, 16
    %v1639 = vpop.permute.xlu0 %1638
    %1640 = vrot.lane.b32.xlu0 %v1634, 16
    %v1641 = vpop.permute.xlu0 %1640
    %1642 = vrot.lane.b32.xlu0 %v1635, 16
    %v1643 = vpop.permute.xlu0 %1642
    %v1644 = vpack.c.bf16 %v1637, %v1637
    %v1645 = vpack.c.bf16 %v1639, %v1639
    %v1646 = vpack.c.bf16 %v1641, %v1641
    %v1647 = vpack.c.bf16 %v1643, %v1643
    %1648 = vst [vmem:[#allocation2] sm:$0xf] %v1644
    %1649 = vst [vmem:[#allocation2 + $0x34] sm:$0xf] %v1645
    %1650 = vst [vmem:[#allocation2 + $0x68] sm:$0xf] %v1646
    %1651 = vst [vmem:[#allocation2 + $0x9c] sm:$0xf] %v1647
    %1652 = vrot.lane.b32.xlu0 %v1632, 8
    %v1653 = vpop.permute.xlu0 %1652
    %1654 = vrot.lane.b32.xlu0 %v1633, 8
    %v1655 = vpop.permute.xlu0 %1654
    %1656 = vrot.lane.b32.xlu0 %v1634, 8
    %v1657 = vpop.permute.xlu0 %1656
    %1658 = vrot.lane.b32.xlu0 %v1635, 8
    %v1659 = vpop.permute.xlu0 %1658
    %v1660 = vpack.c.bf16 %v1653, %v1653
    %v1661 = vpack.c.bf16 %v1655, %v1655
    %v1662 = vpack.c.bf16 %v1657, %v1657
    %v1663 = vpack.c.bf16 %v1659, %v1659
    %1664 = vst [vmem:[#allocation2 + $0x4] sm:$0xf] %v1660
    %1665 = vst [vmem:[#allocation2 + $0x38] sm:$0xf] %v1661
    %1666 = vst [vmem:[#allocation2 + $0x6c] sm:$0xf] %v1662
    %1667 = vst [vmem:[#allocation2 + $0xa0] sm:$0xf] %v1663
    %v1668 = vpack.c.bf16 %v1632, %v1632
    %v1669 = vpack.c.bf16 %v1633, %v1633
    %v1670 = vpack.c.bf16 %v1634, %v1634
    %v1671 = vpack.c.bf16 %v1635, %v1635
    %1672 = vst [vmem:[#allocation2 + $0x8] sm:$0xf] %v1668
    %1673 = vst [vmem:[#allocation2 + $0x3c] sm:$0xf] %v1669
    %1674 = vst [vmem:[#allocation2 + $0x70] sm:$0xf] %v1670
    %1675 = vst [vmem:[#allocation2 + $0xa4] sm:$0xf] %v1671
    %1676 = vrot.lane.b32.xlu0 %v1632, 120
    %v1677 = vpop.permute.xlu0 %1676
    %1678 = vrot.lane.b32.xlu0 %v1633, 120
    %v1679 = vpop.permute.xlu0 %1678
    %1680 = vrot.lane.b32.xlu0 %v1634, 120
    %v1681 = vpop.permute.xlu0 %1680
    %1682 = vrot.lane.b32.xlu0 %v1635, 120
    %v1683 = vpop.permute.xlu0 %1682
    %v1684 = vpack.c.bf16 %v1677, %v1677
    %v1685 = vpack.c.bf16 %v1679, %v1679
    %v1686 = vpack.c.bf16 %v1681, %v1681
    %v1687 = vpack.c.bf16 %v1683, %v1683
    %1688 = vst [vmem:[#allocation2 + $0xc] sm:$0xf] %v1684
    %1689 = vst [vmem:[#allocation2 + $0x40] sm:$0xf] %v1685
    %1690 = vst [vmem:[#allocation2 + $0x74] sm:$0xf] %v1686
    %1691 = vst [vmem:[#allocation2 + $0xa8] sm:$0xf] %v1687
    %1692 = vrot.lane.b32.xlu0 %v1632, 112
    %v1693 = vpop.permute.xlu0 %1692
    %1694 = vrot.lane.b32.xlu0 %v1633, 112
    %v1695 = vpop.permute.xlu0 %1694
    %1696 = vrot.lane.b32.xlu0 %v1634, 112
    %v1697 = vpop.permute.xlu0 %1696
    %1698 = vrot.lane.b32.xlu0 %v1635, 112
    %v1699 = vpop.permute.xlu0 %1698
    %v1700 = vpack.c.bf16 %v1693, %v1693
    %v1701 = vpack.c.bf16 %v1695, %v1695
    %v1702 = vpack.c.bf16 %v1697, %v1697
    %v1703 = vpack.c.bf16 %v1699, %v1699
    %1704 = vst [vmem:[#allocation2 + $0x10] sm:$0xf] %v1700
    %1705 = vst [vmem:[#allocation2 + $0x44] sm:$0xf] %v1701
    %1706 = vst [vmem:[#allocation2 + $0x78] sm:$0xf] %v1702
    %1707 = vst [vmem:[#allocation2 + $0xac] sm:$0xf] %v1703
    %v1708 = vrot.slane %v1620, 7
    %v1709 = vrot.slane %v1621, 7
    %v1710 = vrot.slane %v1622, 7
    %v1711 = vrot.slane %v1623, 7
    %v1712 = vsel %vm236, %v1710, %v1711
    %v1713 = vsel %vm236, %v1709, %v1710
    %v1714 = vsel %vm236, %v1708, %v1709
    %v1715 = vsel %vm236, %v1711, %v1708
    %v1716 = vsel %vm245, %v1715, 0.0
    %v1717 = vsel %vm246, %v1714, 0.0
    %v1718 = vsel %vm247, %v1713, 0.0
    %v1719 = vsel %vm248, %v1712, 0.0
    %1720 = vrot.lane.b32.xlu0 %v1716, 16
    %v1721 = vpop.permute.xlu0 %1720
    %1722 = vrot.lane.b32.xlu0 %v1717, 16
    %v1723 = vpop.permute.xlu0 %1722
    %1724 = vrot.lane.b32.xlu0 %v1718, 16
    %v1725 = vpop.permute.xlu0 %1724
    %1726 = vrot.lane.b32.xlu0 %v1719, 16
    %v1727 = vpop.permute.xlu0 %1726
    %v1728 = vpack.c.bf16 %v1721, %v1721
    %v1729 = vpack.c.bf16 %v1723, %v1723
    %v1730 = vpack.c.bf16 %v1725, %v1725
    %v1731 = vpack.c.bf16 %v1727, %v1727
    %1732 = vst [vmem:[#allocation2 + $0x14] sm:$0xf] %v1728
    %1733 = vst [vmem:[#allocation2 + $0x48] sm:$0xf] %v1729
    %1734 = vst [vmem:[#allocation2 + $0x7c] sm:$0xf] %v1730
    %1735 = vst [vmem:[#allocation2 + $0xb0] sm:$0xf] %v1731
    %1736 = vrot.lane.b32.xlu0 %v1716, 8
    %v1737 = vpop.permute.xlu0 %1736
    %1738 = vrot.lane.b32.xlu0 %v1717, 8
    %v1739 = vpop.permute.xlu0 %1738
    %1740 = vrot.lane.b32.xlu0 %v1718, 8
    %v1741 = vpop.permute.xlu0 %1740
    %1742 = vrot.lane.b32.xlu0 %v1719, 8
    %v1743 = vpop.permute.xlu0 %1742
    %v1744 = vpack.c.bf16 %v1737, %v1737
    %v1745 = vpack.c.bf16 %v1739, %v1739
    %v1746 = vpack.c.bf16 %v1741, %v1741
    %v1747 = vpack.c.bf16 %v1743, %v1743
    %1748 = vst [vmem:[#allocation2 + $0x18] sm:$0xf] %v1744
    %1749 = vst [vmem:[#allocation2 + $0x4c] sm:$0xf] %v1745
    %1750 = vst [vmem:[#allocation2 + $0x80] sm:$0xf] %v1746
    %1751 = vst [vmem:[#allocation2 + $0xb4] sm:$0xf] %v1747
    %v1752 = vpack.c.bf16 %v1716, %v1716
    %v1753 = vpack.c.bf16 %v1717, %v1717
    %v1754 = vpack.c.bf16 %v1718, %v1718
    %v1755 = vpack.c.bf16 %v1719, %v1719
    %1756 = vst [vmem:[#allocation2 + $0x1c] sm:$0xf] %v1752
    %1757 = vst [vmem:[#allocation2 + $0x50] sm:$0xf] %v1753
    %1758 = vst [vmem:[#allocation2 + $0x84] sm:$0xf] %v1754
    %1759 = vst [vmem:[#allocation2 + $0xb8] sm:$0xf] %v1755
    %1760 = vrot.lane.b32.xlu0 %v1716, 120
    %v1761 = vpop.permute.xlu0 %1760
    %1762 = vrot.lane.b32.xlu0 %v1717, 120
    %v1763 = vpop.permute.xlu0 %1762
    %1764 = vrot.lane.b32.xlu0 %v1718, 120
    %v1765 = vpop.permute.xlu0 %1764
    %1766 = vrot.lane.b32.xlu0 %v1719, 120
    %v1767 = vpop.permute.xlu0 %1766
    %v1768 = vpack.c.bf16 %v1761, %v1761
    %v1769 = vpack.c.bf16 %v1763, %v1763
    %v1770 = vpack.c.bf16 %v1765, %v1765
    %v1771 = vpack.c.bf16 %v1767, %v1767
    %1772 = vst [vmem:[#allocation2 + $0x20] sm:$0xf] %v1768
    %1773 = vst [vmem:[#allocation2 + $0x54] sm:$0xf] %v1769
    %1774 = vst [vmem:[#allocation2 + $0x88] sm:$0xf] %v1770
    %1775 = vst [vmem:[#allocation2 + $0xbc] sm:$0xf] %v1771
    %1776 = vrot.lane.b32.xlu0 %v1716, 112
    %v1777 = vpop.permute.xlu0 %1776
    %1778 = vrot.lane.b32.xlu0 %v1717, 112
    %v1779 = vpop.permute.xlu0 %1778
    %1780 = vrot.lane.b32.xlu0 %v1718, 112
    %v1781 = vpop.permute.xlu0 %1780
    %1782 = vrot.lane.b32.xlu0 %v1719, 112
    %v1783 = vpop.permute.xlu0 %1782
    %v1784 = vpack.c.bf16 %v1777, %v1777
    %v1785 = vpack.c.bf16 %v1779, %v1779
    %v1786 = vpack.c.bf16 %v1781, %v1781
    %v1787 = vpack.c.bf16 %v1783, %v1783
    %1788 = vst [vmem:[#allocation2 + $0x24] sm:$0xf] %v1784
    %1789 = vst [vmem:[#allocation2 + $0x58] sm:$0xf] %v1785
    %1790 = vst [vmem:[#allocation2 + $0x8c] sm:$0xf] %v1786
    %1791 = vst [vmem:[#allocation2 + $0xc0] sm:$0xf] %v1787
    %1792 = vrot.lane.b32.xlu0 %v1620, 16
    %v1793 = vpop.permute.xlu0 %1792
    %1794 = vrot.lane.b32.xlu0 %v1621, 16
    %v1795 = vpop.permute.xlu0 %1794
    %1796 = vrot.lane.b32.xlu0 %v1622, 16
    %v1797 = vpop.permute.xlu0 %1796
    %1798 = vrot.lane.b32.xlu0 %v1623, 16
    %v1799 = vpop.permute.xlu0 %1798
    %v1800 = vpack.c.bf16 %v1793, %v1793
    %v1801 = vpack.c.bf16 %v1795, %v1795
    %v1802 = vpack.c.bf16 %v1797, %v1797
    %v1803 = vpack.c.bf16 %v1799, %v1799
    %1804 = vst [vmem:[#allocation2 + $0x28] sm:$0xf] %v1800
    %1805 = vst [vmem:[#allocation2 + $0x5c] sm:$0xf] %v1801
    %1806 = vst [vmem:[#allocation2 + $0x90] sm:$0xf] %v1802
    %1807 = vst [vmem:[#allocation2 + $0xc4] sm:$0xf] %v1803
    %1808 = vrot.lane.b32.xlu0 %v1620, 8
    %v1809 = vpop.permute.xlu0 %1808
    %1810 = vrot.lane.b32.xlu0 %v1621, 8
    %v1811 = vpop.permute.xlu0 %1810
    %1812 = vrot.lane.b32.xlu0 %v1622, 8
    %v1813 = vpop.permute.xlu0 %1812
    %1814 = vrot.lane.b32.xlu0 %v1623, 8
    %v1815 = vpop.permute.xlu0 %1814
    %v1816 = vpack.c.bf16 %v1809, %v1809
    %v1817 = vpack.c.bf16 %v1811, %v1811
    %v1818 = vpack.c.bf16 %v1813, %v1813
    %v1819 = vpack.c.bf16 %v1815, %v1815
    %1820 = vst [vmem:[#allocation2 + $0x2c] sm:$0xf] %v1816
    %1821 = vst [vmem:[#allocation2 + $0x60] sm:$0xf] %v1817
    %1822 = vst [vmem:[#allocation2 + $0x94] sm:$0xf] %v1818
    %1823 = vst [vmem:[#allocation2 + $0xc8] sm:$0xf] %v1819
    %v1824 = vpack.c.bf16 %v1620, %v1620
    %v1825 = vpack.c.bf16 %v1621, %v1621
    %v1826 = vpack.c.bf16 %v1622, %v1622
    %v1827 = vpack.c.bf16 %v1623, %v1623
    %1828 = vst [vmem:[#allocation2 + $0x30] sm:$0xf] %v1824
    %1829 = vst [vmem:[#allocation2 + $0x64] sm:$0xf] %v1825
    %1830 = vst [vmem:[#allocation2 + $0x98] sm:$0xf] %v1826
    %1831 = vst [vmem:[#allocation2 + $0xcc] sm:$0xf] %v1827
    %v1832 = vld [vmem:[#allocation2] sm:$0xff]
    %v1833 = vld [vmem:[#allocation2 + $0x8] sm:$0xff]
    %v1834 = vld [vmem:[#allocation2 + $0x10] sm:$0xff]
    %v1835 = vld [vmem:[#allocation2 + $0x18] sm:$0xff]
    %v1836 = vld [vmem:[#allocation2 + $0x20] sm:$0xff]
    %v1837 = vld [vmem:[#allocation2 + $0x28] sm:$0xff]
    %v1838 = vld [vmem:[#allocation2 + $0x30] sm:$0xf]
    %v1839 = vld [vmem:[#allocation2 + $0x34] sm:$0xff]
    %v1840 = vld [vmem:[#allocation2 + $0x3c] sm:$0xff]
    %v1841 = vld [vmem:[#allocation2 + $0x44] sm:$0xff]
    %v1842 = vld [vmem:[#allocation2 + $0x4c] sm:$0xff]
    %v1843 = vld [vmem:[#allocation2 + $0x54] sm:$0xff]
    %v1844 = vld [vmem:[#allocation2 + $0x5c] sm:$0xff]
    %v1845 = vld [vmem:[#allocation2 + $0x64] sm:$0xf]
    %v1846 = vld [vmem:[#allocation2 + $0x68] sm:$0xff]
    %v1847 = vld [vmem:[#allocation2 + $0x70] sm:$0xff]
    %v1848 = vld [vmem:[#allocation2 + $0x78] sm:$0xff]
    %v1849 = vld [vmem:[#allocation2 + $0x80] sm:$0xff]
    %v1850 = vld [vmem:[#allocation2 + $0x88] sm:$0xff]
    %v1851 = vld [vmem:[#allocation2 + $0x90] sm:$0xff]
    %v1852 = vld [vmem:[#allocation2 + $0x98] sm:$0xf]
    %v1853 = vld [vmem:[#allocation2 + $0x9c] sm:$0xff]
    %v1854 = vld [vmem:[#allocation2 + $0xa4] sm:$0xff]
    %v1855 = vld [vmem:[#allocation2 + $0xac] sm:$0xff]
    %v1856 = vld [vmem:[#allocation2 + $0xb4] sm:$0xff]
    %v1857 = vld [vmem:[#allocation2 + $0xbc] sm:$0xff]
    %v1858 = vld [vmem:[#allocation2 + $0xc4] sm:$0xff]
    %v1859 = vld [vmem:[#allocation2 + $0xcc] sm:$0xf]
    %v1860 = vld [vmem:[#allocation8] sm:$0xf]
    %v1861 = vld [vmem:[#allocation8 + $0x4] sm:$0xf]
    %v1862 = vld [vmem:[#allocation8 + $0x8] sm:$0xf]
    %v1863 = vld [vmem:[#allocation8 + $0xc] sm:$0xf]
    %v1864 = vld [vmem:[#allocation8 + $0x10] sm:$0xf]
    %v1865 = vld [vmem:[#allocation8 + $0x14] sm:$0xf]
    %v1866 = vld [vmem:[#allocation8 + $0x18] sm:$0xf]
    %v1867 = vld [vmem:[#allocation8 + $0x1c] sm:$0xf]
    %v1868 = vld [vmem:[#allocation8 + $0x20] sm:$0xf]
    %v1869 = vld [vmem:[#allocation8 + $0x24] sm:$0xf]
    %v1870 = vld [vmem:[#allocation8 + $0x28] sm:$0xf]
    %v1871 = vld [vmem:[#allocation8 + $0x2c] sm:$0xf]
    %v1872 = vld [vmem:[#allocation8 + $0x30] sm:$0xf]
    %v1873 = vld [vmem:[#allocation8 + $0x34] sm:$0xf]
    %v1874 = vld [vmem:[#allocation8 + $0x38] sm:$0xf]
    %v1875 = vld [vmem:[#allocation8 + $0x3c] sm:$0xf]
    %v1876 = vld [vmem:[#allocation8 + $0x40] sm:$0xf]
    %v1877 = vld [vmem:[#allocation8 + $0x44] sm:$0xf]
    %v1878 = vld [vmem:[#allocation8 + $0x48] sm:$0xf]
    %v1879 = vld [vmem:[#allocation8 + $0x4c] sm:$0xf]
    %v1880 = vld [vmem:[#allocation8 + $0x50] sm:$0xf]
    %v1881 = vld [vmem:[#allocation8 + $0x54] sm:$0xf]
    %v1882 = vld [vmem:[#allocation8 + $0x58] sm:$0xf]
    %v1883 = vld [vmem:[#allocation8 + $0x5c] sm:$0xf]
    %v1884 = vld [vmem:[#allocation8 + $0x60] sm:$0xf]
    %v1885 = vld [vmem:[#allocation8 + $0x64] sm:$0xf]
    %v1886 = vld [vmem:[#allocation8 + $0x68] sm:$0xf]
    %v1887 = vld [vmem:[#allocation8 + $0x6c] sm:$0xf]
    %v1888 = vld [vmem:[#allocation8 + $0x70] sm:$0xf]
    %v1889 = vld [vmem:[#allocation8 + $0x74] sm:$0xf]
    %v1890 = vld [vmem:[#allocation8 + $0x78] sm:$0xf]
    %v1891 = vld [vmem:[#allocation8 + $0x7c] sm:$0xf]
    %v1892 = vld [vmem:[#allocation8 + $0x80] sm:$0xf]
    %v1893 = vld [vmem:[#allocation8 + $0x84] sm:$0xf]
    %v1894 = vld [vmem:[#allocation8 + $0x88] sm:$0xf]
    %v1895 = vld [vmem:[#allocation8 + $0x8c] sm:$0xf]
    %v1896 = vld [vmem:[#allocation8 + $0x90] sm:$0xf]
    %v1897 = vld [vmem:[#allocation8 + $0x94] sm:$0xf]
    %v1898 = vld [vmem:[#allocation8 + $0x98] sm:$0xf]
    %v1899 = vld [vmem:[#allocation8 + $0x9c] sm:$0xf]
    %v1900 = vld [vmem:[#allocation8 + $0xa0] sm:$0xf]
    %v1901 = vld [vmem:[#allocation8 + $0xa4] sm:$0xf]
    %v1902 = vld [vmem:[#allocation8 + $0xa8] sm:$0xf]
    %v1903 = vld [vmem:[#allocation8 + $0xac] sm:$0xf]
    %v1904 = vld [vmem:[#allocation8 + $0xb0] sm:$0xf]
    %v1905 = vld [vmem:[#allocation8 + $0xb4] sm:$0xf]
    %v1906 = vld [vmem:[#allocation8 + $0xb8] sm:$0xf]
    %v1907 = vld [vmem:[#allocation8 + $0xbc] sm:$0xf]
    %v1908 = vld [vmem:[#allocation8 + $0xc0] sm:$0xf]
    %v1909 = vld [vmem:[#allocation8 + $0xc4] sm:$0xf]
    %v1910 = vld [vmem:[#allocation8 + $0xc8] sm:$0xf]
    %v1911 = vld [vmem:[#allocation8 + $0xcc] sm:$0xf]
    %v1912 = vld [vmem:[#allocation8 + $0xd0] sm:$0xf]
    %v1913 = vld [vmem:[#allocation8 + $0xd4] sm:$0xf]
    %v1914 = vld [vmem:[#allocation8 + $0xd8] sm:$0xf]
    %v1915 = vld [vmem:[#allocation8 + $0xdc] sm:$0xf]
    %v1916 = vld [vmem:[#allocation8 + $0xe0] sm:$0xf]
    %v1917 = vld [vmem:[#allocation8 + $0xe4] sm:$0xf]
    %v1918 = vld [vmem:[#allocation8 + $0xe8] sm:$0xf]
    %v1919 = vld [vmem:[#allocation8 + $0xec] sm:$0xf]
    %v1920 = vld [vmem:[#allocation8 + $0xf0] sm:$0xf]
    %v1921 = vld [vmem:[#allocation8 + $0xf4] sm:$0xf]
    %v1922 = vld [vmem:[#allocation8 + $0xf8] sm:$0xf]
    %v1923 = vld [vmem:[#allocation8 + $0xfc] sm:$0xf]
    %v1924 = vld [vmem:[#allocation8 + $0x100] sm:$0xf]
    %v1925 = vld [vmem:[#allocation8 + $0x104] sm:$0xf]
    %v1926 = vld [vmem:[#allocation8 + $0x108] sm:$0xf]
    %v1927 = vld [vmem:[#allocation8 + $0x10c] sm:$0xf]
    %v1928 = vld [vmem:[#allocation8 + $0x110] sm:$0xf]
    %v1929 = vld [vmem:[#allocation8 + $0x114] sm:$0xf]
    %v1930 = vld [vmem:[#allocation8 + $0x118] sm:$0xf]
    %v1931 = vld [vmem:[#allocation8 + $0x11c] sm:$0xf]
    %v1932 = vld [vmem:[#allocation8 + $0x120] sm:$0xf]
    %v1933 = vld [vmem:[#allocation8 + $0x124] sm:$0xf]
    %v1934 = vld [vmem:[#allocation8 + $0x128] sm:$0xf]
    %v1935 = vld [vmem:[#allocation8 + $0x12c] sm:$0xf]
    %v1936 = vld [vmem:[#allocation8 + $0x130] sm:$0xf]
    %v1937 = vld [vmem:[#allocation8 + $0x134] sm:$0xf]
    %v1938 = vld [vmem:[#allocation8 + $0x138] sm:$0xf]
    %v1939 = vld [vmem:[#allocation8 + $0x13c] sm:$0xf]
    %v1940 = vld [vmem:[#allocation8 + $0x140] sm:$0xf]
    %v1941 = vld [vmem:[#allocation8 + $0x144] sm:$0xf]
    %v1942 = vld [vmem:[#allocation8 + $0x148] sm:$0xf]
    %v1943 = vld [vmem:[#allocation8 + $0x14c] sm:$0xf]
    %v1944 = vld [vmem:[#allocation8 + $0x150] sm:$0xf]
    %v1945 = vld [vmem:[#allocation8 + $0x154] sm:$0xf]
    %v1946 = vld [vmem:[#allocation8 + $0x158] sm:$0xf]
    %v1947 = vld [vmem:[#allocation8 + $0x15c] sm:$0xf]
    %v1948 = vld [vmem:[#allocation8 + $0x160] sm:$0xf]
    %v1949 = vld [vmem:[#allocation8 + $0x164] sm:$0xf]
    %v1950 = vld [vmem:[#allocation8 + $0x168] sm:$0xf]
    %v1951 = vld [vmem:[#allocation8 + $0x16c] sm:$0xf]
    %v1952 = vld [vmem:[#allocation8 + $0x170] sm:$0xf]
    %v1953 = vld [vmem:[#allocation8 + $0x174] sm:$0xf]
    %v1954 = vld [vmem:[#allocation8 + $0x178] sm:$0xf]
    %v1955 = vld [vmem:[#allocation8 + $0x17c] sm:$0xf]
    %v1956 = vld [vmem:[#allocation8 + $0x180] sm:$0xf]
    %v1957 = vld [vmem:[#allocation8 + $0x184] sm:$0xf]
    %v1958 = vld [vmem:[#allocation8 + $0x188] sm:$0xf]
    %v1959 = vld [vmem:[#allocation8 + $0x18c] sm:$0xf]
    %v1960 = vld [vmem:[#allocation8 + $0x190] sm:$0xf]
    %v1961 = vld [vmem:[#allocation8 + $0x194] sm:$0xf]
    %v1962 = vld [vmem:[#allocation8 + $0x198] sm:$0xf]
    %v1963 = vld [vmem:[#allocation8 + $0x19c] sm:$0xf]
    %v1964 = vld [vmem:[#allocation8 + $0x1a0] sm:$0xf]
    %v1965 = vld [vmem:[#allocation8 + $0x1a4] sm:$0xf]
    %v1966 = vld [vmem:[#allocation8 + $0x1a8] sm:$0xf]
    %v1967 = vld [vmem:[#allocation8 + $0x1ac] sm:$0xf]
    %v1968 = vld [vmem:[#allocation8 + $0x1b0] sm:$0xf]
    %v1969 = vld [vmem:[#allocation8 + $0x1b4] sm:$0xf]
    %v1970 = vld [vmem:[#allocation8 + $0x1b8] sm:$0xf]
    %v1971 = vld [vmem:[#allocation8 + $0x1bc] sm:$0xf]
    %v1972 = vld [vmem:[#allocation8 + $0x1c0] sm:$0xf]
    %v1973 = vld [vmem:[#allocation8 + $0x1c4] sm:$0xf]
    %v1974 = vld [vmem:[#allocation8 + $0x1c8] sm:$0xf]
    %v1975 = vld [vmem:[#allocation8 + $0x1cc] sm:$0xf]
    %v1976 = vld [vmem:[#allocation8 + $0x1d0] sm:$0xf]
    %v1977 = vld [vmem:[#allocation8 + $0x1d4] sm:$0xf]
    %v1978 = vld [vmem:[#allocation8 + $0x1d8] sm:$0xf]
    %v1979 = vld [vmem:[#allocation8 + $0x1dc] sm:$0xf]
    %v1980 = vld [vmem:[#allocation8 + $0x1e0] sm:$0xf]
    %v1981 = vld [vmem:[#allocation8 + $0x1e4] sm:$0xf]
    %v1982 = vld [vmem:[#allocation8 + $0x1e8] sm:$0xf]
    %v1983 = vld [vmem:[#allocation8 + $0x1ec] sm:$0xf]
    %v1984 = vld [vmem:[#allocation8 + $0x1f0] sm:$0xf]
    %v1985 = vld [vmem:[#allocation8 + $0x1f4] sm:$0xf]
    %v1986 = vld [vmem:[#allocation8 + $0x1f8] sm:$0xf]
    %v1987 = vld [vmem:[#allocation8 + $0x1fc] sm:$0xf]
    %v1988 = vld [vmem:[#allocation8 + $0x200] sm:$0xf]
    %v1989 = vld [vmem:[#allocation8 + $0x204] sm:$0xf]
    %v1990 = vld [vmem:[#allocation8 + $0x208] sm:$0xf]
    %v1991 = vld [vmem:[#allocation8 + $0x20c] sm:$0xf]
    %v1992 = vld [vmem:[#allocation8 + $0x210] sm:$0xf]
    %v1993 = vld [vmem:[#allocation8 + $0x214] sm:$0xf]
    %v1994 = vld [vmem:[#allocation8 + $0x218] sm:$0xf]
    %v1995 = vld [vmem:[#allocation8 + $0x21c] sm:$0xf]
    %v1996 = vld [vmem:[#allocation8 + $0x220] sm:$0xf]
    %v1997 = vld [vmem:[#allocation8 + $0x224] sm:$0xf]
    %v1998 = vld [vmem:[#allocation8 + $0x228] sm:$0xf]
    %v1999 = vld [vmem:[#allocation8 + $0x22c] sm:$0xf]
    %v2000 = vld [vmem:[#allocation8 + $0x230] sm:$0xf]
    %v2001 = vld [vmem:[#allocation8 + $0x234] sm:$0xf]
    %v2002 = vld [vmem:[#allocation8 + $0x238] sm:$0xf]
    %v2003 = vld [vmem:[#allocation8 + $0x23c] sm:$0xf]
    %v2004 = vld [vmem:[#allocation8 + $0x240] sm:$0xf]
    %v2005 = vld [vmem:[#allocation8 + $0x244] sm:$0xf]
    %v2006 = vld [vmem:[#allocation8 + $0x248] sm:$0xf]
    %v2007 = vld [vmem:[#allocation8 + $0x24c] sm:$0xf]
    %v2008 = vld [vmem:[#allocation8 + $0x250] sm:$0xf]
    %v2009 = vld [vmem:[#allocation8 + $0x254] sm:$0xf]
    %v2010 = vld [vmem:[#allocation8 + $0x258] sm:$0xf]
    %v2011 = vld [vmem:[#allocation8 + $0x25c] sm:$0xf]
    %v2012 = vld [vmem:[#allocation8 + $0x260] sm:$0xf]
    %v2013 = vld [vmem:[#allocation8 + $0x264] sm:$0xf]
    %v2014 = vld [vmem:[#allocation8 + $0x268] sm:$0xf]
    %v2015 = vld [vmem:[#allocation8 + $0x26c] sm:$0xf]
    %v2016 = vld [vmem:[#allocation8 + $0x270] sm:$0xf]
    %v2017 = vld [vmem:[#allocation8 + $0x274] sm:$0xf]
    %v2018 = vld [vmem:[#allocation8 + $0x278] sm:$0xf]
    %v2019 = vld [vmem:[#allocation8 + $0x27c] sm:$0xf]
    %v2020 = vld [vmem:[#allocation8 + $0x280] sm:$0xf]
    %v2021 = vld [vmem:[#allocation8 + $0x284] sm:$0xf]
    %v2022 = vld [vmem:[#allocation8 + $0x288] sm:$0xf]
    %v2023 = vld [vmem:[#allocation8 + $0x28c] sm:$0xf]
    %v2024 = vld [vmem:[#allocation8 + $0x290] sm:$0xf]
    %v2025 = vld [vmem:[#allocation8 + $0x294] sm:$0xf]
    %v2026 = vld [vmem:[#allocation8 + $0x298] sm:$0xf]
    %v2027 = vld [vmem:[#allocation8 + $0x29c] sm:$0xf]
    %v2028 = vld [vmem:[#allocation8 + $0x2a0] sm:$0xf]
    %v2029 = vld [vmem:[#allocation8 + $0x2a4] sm:$0xf]
    %v2030 = vld [vmem:[#allocation8 + $0x2a8] sm:$0xf]
    %v2031 = vld [vmem:[#allocation8 + $0x2ac] sm:$0xf]
    %v2032 = vld [vmem:[#allocation8 + $0x2b0] sm:$0xf]
    %v2033 = vld [vmem:[#allocation8 + $0x2b4] sm:$0xf]
    %v2034 = vld [vmem:[#allocation8 + $0x2b8] sm:$0xf]
    %v2035 = vld [vmem:[#allocation8 + $0x2bc] sm:$0xf]
    %v2036 = vld [vmem:[#allocation8 + $0x2c0] sm:$0xf]
    %v2037 = vld [vmem:[#allocation8 + $0x2c4] sm:$0xf]
    %v2038 = vld [vmem:[#allocation8 + $0x2c8] sm:$0xf]
    %v2039 = vld [vmem:[#allocation8 + $0x2cc] sm:$0xf]
    %v2040 = vld [vmem:[#allocation8 + $0x2d0] sm:$0xf]
    %v2041 = vld [vmem:[#allocation8 + $0x2d4] sm:$0xf]
    %v2042 = vld [vmem:[#allocation8 + $0x2d8] sm:$0xf]
    %v2043 = vld [vmem:[#allocation8 + $0x2dc] sm:$0xf]
    %v2044 = vld [vmem:[#allocation8 + $0x2e0] sm:$0xf]
    %v2045 = vld [vmem:[#allocation8 + $0x2e4] sm:$0xf]
    %v2046 = vld [vmem:[#allocation8 + $0x2e8] sm:$0xf]
    %v2047 = vld [vmem:[#allocation8 + $0x2ec] sm:$0xf]
    %v2048 = vld [vmem:[#allocation8 + $0x2f0] sm:$0xf]
    %v2049 = vld [vmem:[#allocation8 + $0x2f4] sm:$0xf]
    %v2050 = vld [vmem:[#allocation8 + $0x2f8] sm:$0xf]
    %v2051 = vld [vmem:[#allocation8 + $0x2fc] sm:$0xf]
    %v2052 = vld [vmem:[#allocation8 + $0x300] sm:$0xf]
    %v2053 = vld [vmem:[#allocation8 + $0x304] sm:$0xf]
    %v2054 = vld [vmem:[#allocation8 + $0x308] sm:$0xf]
    %v2055 = vld [vmem:[#allocation8 + $0x30c] sm:$0xf]
    %v2056 = vld [vmem:[#allocation8 + $0x310] sm:$0xf]
    %v2057 = vld [vmem:[#allocation8 + $0x314] sm:$0xf]
    %v2058 = vld [vmem:[#allocation8 + $0x318] sm:$0xf]
    %v2059 = vld [vmem:[#allocation8 + $0x31c] sm:$0xf]
    %v2060 = vld [vmem:[#allocation8 + $0x320] sm:$0xf]
    %v2061 = vld [vmem:[#allocation8 + $0x324] sm:$0xf]
    %v2062 = vld [vmem:[#allocation8 + $0x328] sm:$0xf]
    %v2063 = vld [vmem:[#allocation8 + $0x32c] sm:$0xf]
    %v2064 = vld [vmem:[#allocation8 + $0x330] sm:$0xf]
    %v2065 = vld [vmem:[#allocation8 + $0x334] sm:$0xf]
    %v2066 = vld [vmem:[#allocation8 + $0x338] sm:$0xf]
    %v2067 = vld [vmem:[#allocation8 + $0x33c] sm:$0xf]
    %v2068 = vld [vmem:[%s5] sm:$0x1]
    %v2070 = vperm.slane %v2068, 0
    %v2100 = vunpack.c.l.b16 %v1832
    %v2101 = vunpack.c.h.b16 %v1832
    %v2102 = vunpack.c.l.b16 %v1833
    %v2103 = vunpack.c.h.b16 %v1833
    %v2104 = vunpack.c.l.b16 %v1834
    %v2105 = vunpack.c.h.b16 %v1834
    %v2106 = vunpack.c.l.b16 %v1835
    %v2107 = vunpack.c.h.b16 %v1835
    %v2108 = vunpack.c.l.b16 %v1836
    %v2109 = vunpack.c.h.b16 %v1836
    %v2110 = vunpack.c.l.b16 %v1837
    %v2111 = vunpack.c.h.b16 %v1837
    %v2112 = vunpack.c.l.b16 %v1838
    %v2113 = vunpack.c.l.b16 %v1839
    %v2114 = vunpack.c.h.b16 %v1839
    %v2115 = vunpack.c.l.b16 %v1840
    %v2116 = vunpack.c.h.b16 %v1840
    %v2117 = vunpack.c.l.b16 %v1841
    %v2118 = vunpack.c.h.b16 %v1841
    %v2119 = vunpack.c.l.b16 %v1842
    %v2120 = vunpack.c.h.b16 %v1842
    %v2121 = vunpack.c.l.b16 %v1843
    %v2122 = vunpack.c.h.b16 %v1843
    %v2123 = vunpack.c.l.b16 %v1844
    %v2124 = vunpack.c.h.b16 %v1844
    %v2125 = vunpack.c.l.b16 %v1845
    %v2126 = vunpack.c.l.b16 %v1846
    %v2127 = vunpack.c.h.b16 %v1846
    %v2128 = vunpack.c.l.b16 %v1847
    %v2129 = vunpack.c.h.b16 %v1847
    %v2130 = vunpack.c.l.b16 %v1848
    %v2131 = vunpack.c.h.b16 %v1848
    %v2132 = vunpack.c.l.b16 %v1849
    %v2133 = vunpack.c.h.b16 %v1849
    %v2134 = vunpack.c.l.b16 %v1850
    %v2135 = vunpack.c.h.b16 %v1850
    %v2136 = vunpack.c.l.b16 %v1851
    %v2137 = vunpack.c.h.b16 %v1851
    %v2138 = vunpack.c.l.b16 %v1852
    %v2139 = vunpack.c.l.b16 %v1853
    %v2140 = vunpack.c.h.b16 %v1853
    %v2141 = vunpack.c.l.b16 %v1854
    %v2142 = vunpack.c.h.b16 %v1854
    %v2143 = vunpack.c.l.b16 %v1855
    %v2144 = vunpack.c.h.b16 %v1855
    %v2145 = vunpack.c.l.b16 %v1856
    %v2146 = vunpack.c.h.b16 %v1856
    %v2147 = vunpack.c.l.b16 %v1857
    %v2148 = vunpack.c.h.b16 %v1857
    %v2149 = vunpack.c.l.b16 %v1858
    %v2150 = vunpack.c.h.b16 %v1858
    %v2151 = vunpack.c.l.b16 %v1859
    %v2152 = vpack.c.b16 %v2113, %v2100
    %v2153 = vpack.c.b16 %v2114, %v2101
    %v2154 = vpack.c.b16 %v2115, %v2102
    %v2155 = vpack.c.b16 %v2116, %v2103
    %v2156 = vpack.c.b16 %v2117, %v2104
    %v2157 = vpack.c.b16 %v2118, %v2105
    %v2158 = vpack.c.b16 %v2119, %v2106
    %v2159 = vpack.c.b16 %v2120, %v2107
    %v2160 = vpack.c.b16 %v2121, %v2108
    %v2161 = vpack.c.b16 %v2122, %v2109
    %v2162 = vpack.c.b16 %v2123, %v2110
    %v2163 = vpack.c.b16 %v2124, %v2111
    %v2164 = vpack.c.b16 %v2125, %v2112
    %v2165 = vpack.c.b16 %v2139, %v2126
    %v2166 = vpack.c.b16 %v2140, %v2127
    %v2167 = vpack.c.b16 %v2141, %v2128
    %v2168 = vpack.c.b16 %v2142, %v2129
    %v2169 = vpack.c.b16 %v2143, %v2130
    %v2170 = vpack.c.b16 %v2144, %v2131
    %v2171 = vpack.c.b16 %v2145, %v2132
    %v2172 = vpack.c.b16 %v2146, %v2133
    %v2173 = vpack.c.b16 %v2147, %v2134
    %v2174 = vpack.c.b16 %v2148, %v2135
    %v2175 = vpack.c.b16 %v2149, %v2136
    %v2176 = vpack.c.b16 %v2150, %v2137
    %v2177 = vpack.c.b16 %v2151, %v2138
    %v2412 = vunpack.c.l.b16 %v1860
    %v2413 = vunpack.c.l.b16 %v1861
    %v2414 = vunpack.c.l.b16 %v1862
    %v2415 = vunpack.c.l.b16 %v1863
    %v2416 = vunpack.c.l.b16 %v1864
    %v2417 = vunpack.c.l.b16 %v1865
    %v2418 = vunpack.c.l.b16 %v1866
    %v2419 = vunpack.c.l.b16 %v1867
    %v2420 = vunpack.c.l.b16 %v1868
    %v2421 = vunpack.c.l.b16 %v1869
    %v2422 = vunpack.c.l.b16 %v1870
    %v2423 = vunpack.c.l.b16 %v1871
    %v2424 = vunpack.c.l.b16 %v1872
    %v2425 = vunpack.c.l.b16 %v1873
    %v2426 = vunpack.c.l.b16 %v1874
    %v2427 = vunpack.c.l.b16 %v1875
    %v2428 = vunpack.c.l.b16 %v1876
    %v2429 = vunpack.c.l.b16 %v1877
    %v2430 = vunpack.c.l.b16 %v1878
    %v2431 = vunpack.c.l.b16 %v1879
    %v2432 = vunpack.c.l.b16 %v1880
    %v2433 = vunpack.c.l.b16 %v1881
    %v2434 = vunpack.c.l.b16 %v1882
    %v2435 = vunpack.c.l.b16 %v1883
    %v2436 = vunpack.c.l.b16 %v1884
    %v2437 = vunpack.c.l.b16 %v1885
    %v2438 = vunpack.c.l.b16 %v1886
    %v2439 = vunpack.c.l.b16 %v1887
    %v2440 = vunpack.c.l.b16 %v1888
    %v2441 = vunpack.c.l.b16 %v1889
    %v2442 = vunpack.c.l.b16 %v1890
    %v2443 = vunpack.c.l.b16 %v1891
    %v2444 = vunpack.c.l.b16 %v1892
    %v2445 = vunpack.c.l.b16 %v1893
    %v2446 = vunpack.c.l.b16 %v1894
    %v2447 = vunpack.c.l.b16 %v1895
    %v2448 = vunpack.c.l.b16 %v1896
    %v2449 = vunpack.c.l.b16 %v1897
    %v2450 = vunpack.c.l.b16 %v1898
    %v2451 = vunpack.c.l.b16 %v1899
    %v2452 = vunpack.c.l.b16 %v1900
    %v2453 = vunpack.c.l.b16 %v1901
    %v2454 = vunpack.c.l.b16 %v1902
    %v2455 = vunpack.c.l.b16 %v1903
    %v2456 = vunpack.c.l.b16 %v1904
    %v2457 = vunpack.c.l.b16 %v1905
    %v2458 = vunpack.c.l.b16 %v1906
    %v2459 = vunpack.c.l.b16 %v1907
    %v2460 = vunpack.c.l.b16 %v1908
    %v2461 = vunpack.c.l.b16 %v1909
    %v2462 = vunpack.c.l.b16 %v1910
    %v2463 = vunpack.c.l.b16 %v1911
    %v2464 = vunpack.c.l.b16 %v1912
    %v2465 = vunpack.c.l.b16 %v1913
    %v2466 = vunpack.c.l.b16 %v1914
    %v2467 = vunpack.c.l.b16 %v1915
    %v2468 = vunpack.c.l.b16 %v1916
    %v2469 = vunpack.c.l.b16 %v1917
    %v2470 = vunpack.c.l.b16 %v1918
    %v2471 = vunpack.c.l.b16 %v1919
    %v2472 = vunpack.c.l.b16 %v1920
    %v2473 = vunpack.c.l.b16 %v1921
    %v2474 = vunpack.c.l.b16 %v1922
    %v2475 = vunpack.c.l.b16 %v1923
    %v2476 = vunpack.c.l.b16 %v1924
    %v2477 = vunpack.c.l.b16 %v1925
    %v2478 = vunpack.c.l.b16 %v1926
    %v2479 = vunpack.c.l.b16 %v1927
    %v2480 = vunpack.c.l.b16 %v1928
    %v2481 = vunpack.c.l.b16 %v1929
    %v2482 = vunpack.c.l.b16 %v1930
    %v2483 = vunpack.c.l.b16 %v1931
    %v2484 = vunpack.c.l.b16 %v1932
    %v2485 = vunpack.c.l.b16 %v1933
    %v2486 = vunpack.c.l.b16 %v1934
    %v2487 = vunpack.c.l.b16 %v1935
    %v2488 = vunpack.c.l.b16 %v1936
    %v2489 = vunpack.c.l.b16 %v1937
    %v2490 = vunpack.c.l.b16 %v1938
    %v2491 = vunpack.c.l.b16 %v1939
    %v2492 = vunpack.c.l.b16 %v1940
    %v2493 = vunpack.c.l.b16 %v1941
    %v2494 = vunpack.c.l.b16 %v1942
    %v2495 = vunpack.c.l.b16 %v1943
    %v2496 = vunpack.c.l.b16 %v1944
    %v2497 = vunpack.c.l.b16 %v1945
    %v2498 = vunpack.c.l.b16 %v1946
    %v2499 = vunpack.c.l.b16 %v1947
    %v2500 = vunpack.c.l.b16 %v1948
    %v2501 = vunpack.c.l.b16 %v1949
    %v2502 = vunpack.c.l.b16 %v1950
    %v2503 = vunpack.c.l.b16 %v1951
    %v2504 = vunpack.c.l.b16 %v1952
    %v2505 = vunpack.c.l.b16 %v1953
    %v2506 = vunpack.c.l.b16 %v1954
    %v2507 = vunpack.c.l.b16 %v1955
    %v2508 = vunpack.c.l.b16 %v1956
    %v2509 = vunpack.c.l.b16 %v1957
    %v2510 = vunpack.c.l.b16 %v1958
    %v2511 = vunpack.c.l.b16 %v1959
    %v2512 = vunpack.c.l.b16 %v1960
    %v2513 = vunpack.c.l.b16 %v1961
    %v2514 = vunpack.c.l.b16 %v1962
    %v2515 = vunpack.c.l.b16 %v1963
    %v2516 = vunpack.c.l.b16 %v1964
    %v2517 = vunpack.c.l.b16 %v1965
    %v2518 = vunpack.c.l.b16 %v1966
    %v2519 = vunpack.c.l.b16 %v1967
    %v2520 = vunpack.c.l.b16 %v1968
    %v2521 = vunpack.c.l.b16 %v1969
    %v2522 = vunpack.c.l.b16 %v1970
    %v2523 = vunpack.c.l.b16 %v1971
    %v2524 = vunpack.c.l.b16 %v1972
    %v2525 = vunpack.c.l.b16 %v1973
    %v2526 = vunpack.c.l.b16 %v1974
    %v2527 = vunpack.c.l.b16 %v1975
    %v2528 = vunpack.c.l.b16 %v1976
    %v2529 = vunpack.c.l.b16 %v1977
    %v2530 = vunpack.c.l.b16 %v1978
    %v2531 = vunpack.c.l.b16 %v1979
    %v2532 = vunpack.c.l.b16 %v1980
    %v2533 = vunpack.c.l.b16 %v1981
    %v2534 = vunpack.c.l.b16 %v1982
    %v2535 = vunpack.c.l.b16 %v1983
    %v2536 = vunpack.c.l.b16 %v1984
    %v2537 = vunpack.c.l.b16 %v1985
    %v2538 = vunpack.c.l.b16 %v1986
    %v2539 = vunpack.c.l.b16 %v1987
    %v2540 = vunpack.c.l.b16 %v1988
    %v2541 = vunpack.c.l.b16 %v1989
    %v2542 = vunpack.c.l.b16 %v1990
    %v2543 = vunpack.c.l.b16 %v1991
    %v2544 = vunpack.c.l.b16 %v1992
    %v2545 = vunpack.c.l.b16 %v1993
    %v2546 = vunpack.c.l.b16 %v1994
    %v2547 = vunpack.c.l.b16 %v1995
    %v2548 = vunpack.c.l.b16 %v1996
    %v2549 = vunpack.c.l.b16 %v1997
    %v2550 = vunpack.c.l.b16 %v1998
    %v2551 = vunpack.c.l.b16 %v1999
    %v2552 = vunpack.c.l.b16 %v2000
    %v2553 = vunpack.c.l.b16 %v2001
    %v2554 = vunpack.c.l.b16 %v2002
    %v2555 = vunpack.c.l.b16 %v2003
    %v2556 = vunpack.c.l.b16 %v2004
    %v2557 = vunpack.c.l.b16 %v2005
    %v2558 = vunpack.c.l.b16 %v2006
    %v2559 = vunpack.c.l.b16 %v2007
    %v2560 = vunpack.c.l.b16 %v2008
    %v2561 = vunpack.c.l.b16 %v2009
    %v2562 = vunpack.c.l.b16 %v2010
    %v2563 = vunpack.c.l.b16 %v2011
    %v2564 = vunpack.c.l.b16 %v2012
    %v2565 = vunpack.c.l.b16 %v2013
    %v2566 = vunpack.c.l.b16 %v2014
    %v2567 = vunpack.c.l.b16 %v2015
    %v2568 = vunpack.c.l.b16 %v2016
    %v2569 = vunpack.c.l.b16 %v2017
    %v2570 = vunpack.c.l.b16 %v2018
    %v2571 = vunpack.c.l.b16 %v2019
    %v2572 = vunpack.c.l.b16 %v2020
    %v2573 = vunpack.c.l.b16 %v2021
    %v2574 = vunpack.c.l.b16 %v2022
    %v2575 = vunpack.c.l.b16 %v2023
    %v2576 = vunpack.c.l.b16 %v2024
    %v2577 = vunpack.c.l.b16 %v2025
    %v2578 = vunpack.c.l.b16 %v2026
    %v2579 = vunpack.c.l.b16 %v2027
    %v2580 = vunpack.c.l.b16 %v2028
    %v2581 = vunpack.c.l.b16 %v2029
    %v2582 = vunpack.c.l.b16 %v2030
    %v2583 = vunpack.c.l.b16 %v2031
    %v2584 = vunpack.c.l.b16 %v2032
    %v2585 = vunpack.c.l.b16 %v2033
    %v2586 = vunpack.c.l.b16 %v2034
    %v2587 = vunpack.c.l.b16 %v2035
    %v2588 = vunpack.c.l.b16 %v2036
    %v2589 = vunpack.c.l.b16 %v2037
    %v2590 = vunpack.c.l.b16 %v2038
    %v2591 = vunpack.c.l.b16 %v2039
    %v2592 = vunpack.c.l.b16 %v2040
    %v2593 = vunpack.c.l.b16 %v2041
    %v2594 = vunpack.c.l.b16 %v2042
    %v2595 = vunpack.c.l.b16 %v2043
    %v2596 = vunpack.c.l.b16 %v2044
    %v2597 = vunpack.c.l.b16 %v2045
    %v2598 = vunpack.c.l.b16 %v2046
    %v2599 = vunpack.c.l.b16 %v2047
    %v2600 = vunpack.c.l.b16 %v2048
    %v2601 = vunpack.c.l.b16 %v2049
    %v2602 = vunpack.c.l.b16 %v2050
    %v2603 = vunpack.c.l.b16 %v2051
    %v2604 = vunpack.c.l.b16 %v2052
    %v2605 = vunpack.c.l.b16 %v2053
    %v2606 = vunpack.c.l.b16 %v2054
    %v2607 = vunpack.c.l.b16 %v2055
    %v2608 = vunpack.c.l.b16 %v2056
    %v2609 = vunpack.c.l.b16 %v2057
    %v2610 = vunpack.c.l.b16 %v2058
    %v2611 = vunpack.c.l.b16 %v2059
    %v2612 = vunpack.c.l.b16 %v2060
    %v2613 = vunpack.c.l.b16 %v2061
    %v2614 = vunpack.c.l.b16 %v2062
    %v2615 = vunpack.c.l.b16 %v2063
    %v2616 = vunpack.c.l.b16 %v2064
    %v2617 = vunpack.c.l.b16 %v2065
    %v2618 = vunpack.c.l.b16 %v2066
    %v2619 = vunpack.c.l.b16 %v2067
    %v2620 = vpack.c.b16 %v2413, %v2412
    %v2621 = vpack.c.b16 %v2415, %v2414
    %v2622 = vpack.c.b16 %v2417, %v2416
    %v2623 = vpack.c.b16 %v2419, %v2418
    %v2624 = vpack.c.b16 %v2421, %v2420
    %v2625 = vpack.c.b16 %v2423, %v2422
    %v2626 = vpack.c.b16 %v2425, %v2424
    %v2627 = vpack.c.b16 %v2427, %v2426
    %v2628 = vpack.c.b16 %v2429, %v2428
    %v2629 = vpack.c.b16 %v2431, %v2430
    %v2630 = vpack.c.b16 %v2433, %v2432
    %v2631 = vpack.c.b16 %v2435, %v2434
    %v2632 = vpack.c.b16 %v2437, %v2436
    %v2633 = vpack.c.b16 %v2439, %v2438
    %v2634 = vpack.c.b16 %v2441, %v2440
    %v2635 = vpack.c.b16 %v2443, %v2442
    %v2636 = vpack.c.b16 %v2445, %v2444
    %v2637 = vpack.c.b16 %v2447, %v2446
    %v2638 = vpack.c.b16 %v2449, %v2448
    %v2639 = vpack.c.b16 %v2451, %v2450
    %v2640 = vpack.c.b16 %v2453, %v2452
    %v2641 = vpack.c.b16 %v2455, %v2454
    %v2642 = vpack.c.b16 %v2457, %v2456
    %v2643 = vpack.c.b16 %v2459, %v2458
    %v2644 = vpack.c.b16 %v2461, %v2460
    %v2645 = vpack.c.b16 %v2463, %v2462
    %v2646 = vpack.c.b16 %v2465, %v2464
    %v2647 = vpack.c.b16 %v2467, %v2466
    %v2648 = vpack.c.b16 %v2469, %v2468
    %v2649 = vpack.c.b16 %v2471, %v2470
    %v2650 = vpack.c.b16 %v2473, %v2472
    %v2651 = vpack.c.b16 %v2475, %v2474
    %v2652 = vpack.c.b16 %v2477, %v2476
    %v2653 = vpack.c.b16 %v2479, %v2478
    %v2654 = vpack.c.b16 %v2481, %v2480
    %v2655 = vpack.c.b16 %v2483, %v2482
    %v2656 = vpack.c.b16 %v2485, %v2484
    %v2657 = vpack.c.b16 %v2487, %v2486
    %v2658 = vpack.c.b16 %v2489, %v2488
    %v2659 = vpack.c.b16 %v2491, %v2490
    %v2660 = vpack.c.b16 %v2493, %v2492
    %v2661 = vpack.c.b16 %v2495, %v2494
    %v2662 = vpack.c.b16 %v2497, %v2496
    %v2663 = vpack.c.b16 %v2499, %v2498
    %v2664 = vpack.c.b16 %v2501, %v2500
    %v2665 = vpack.c.b16 %v2503, %v2502
    %v2666 = vpack.c.b16 %v2505, %v2504
    %v2667 = vpack.c.b16 %v2507, %v2506
    %v2668 = vpack.c.b16 %v2509, %v2508
    %v2669 = vpack.c.b16 %v2511, %v2510
    %v2670 = vpack.c.b16 %v2513, %v2512
    %v2671 = vpack.c.b16 %v2515, %v2514
    %v2672 = vpack.c.b16 %v2517, %v2516
    %v2673 = vpack.c.b16 %v2519, %v2518
    %v2674 = vpack.c.b16 %v2521, %v2520
    %v2675 = vpack.c.b16 %v2523, %v2522
    %v2676 = vpack.c.b16 %v2525, %v2524
    %v2677 = vpack.c.b16 %v2527, %v2526
    %v2678 = vpack.c.b16 %v2529, %v2528
    %v2679 = vpack.c.b16 %v2531, %v2530
    %v2680 = vpack.c.b16 %v2533, %v2532
    %v2681 = vpack.c.b16 %v2535, %v2534
    %v2682 = vpack.c.b16 %v2537, %v2536
    %v2683 = vpack.c.b16 %v2539, %v2538
    %v2684 = vpack.c.b16 %v2541, %v2540
    %v2685 = vpack.c.b16 %v2543, %v2542
    %v2686 = vpack.c.b16 %v2545, %v2544
    %v2687 = vpack.c.b16 %v2547, %v2546
    %v2688 = vpack.c.b16 %v2549, %v2548
    %v2689 = vpack.c.b16 %v2551, %v2550
    %v2690 = vpack.c.b16 %v2553, %v2552
    %v2691 = vpack.c.b16 %v2555, %v2554
    %v2692 = vpack.c.b16 %v2557, %v2556
    %v2693 = vpack.c.b16 %v2559, %v2558
    %v2694 = vpack.c.b16 %v2561, %v2560
    %v2695 = vpack.c.b16 %v2563, %v2562
    %v2696 = vpack.c.b16 %v2565, %v2564
    %v2697 = vpack.c.b16 %v2567, %v2566
    %v2698 = vpack.c.b16 %v2569, %v2568
    %v2699 = vpack.c.b16 %v2571, %v2570
    %v2700 = vpack.c.b16 %v2573, %v2572
    %v2701 = vpack.c.b16 %v2575, %v2574
    %v2702 = vpack.c.b16 %v2577, %v2576
    %v2703 = vpack.c.b16 %v2579, %v2578
    %v2704 = vpack.c.b16 %v2581, %v2580
    %v2705 = vpack.c.b16 %v2583, %v2582
    %v2706 = vpack.c.b16 %v2585, %v2584
    %v2707 = vpack.c.b16 %v2587, %v2586
    %v2708 = vpack.c.b16 %v2589, %v2588
    %v2709 = vpack.c.b16 %v2591, %v2590
    %v2710 = vpack.c.b16 %v2593, %v2592
    %v2711 = vpack.c.b16 %v2595, %v2594
    %v2712 = vpack.c.b16 %v2597, %v2596
    %v2713 = vpack.c.b16 %v2599, %v2598
    %v2714 = vpack.c.b16 %v2601, %v2600
    %v2715 = vpack.c.b16 %v2603, %v2602
    %v2716 = vpack.c.b16 %v2605, %v2604
    %v2717 = vpack.c.b16 %v2607, %v2606
    %v2718 = vpack.c.b16 %v2609, %v2608
    %v2719 = vpack.c.b16 %v2611, %v2610
    %v2720 = vpack.c.b16 %v2613, %v2612
    %v2721 = vpack.c.b16 %v2615, %v2614
    %v2722 = vpack.c.b16 %v2617, %v2616
    %v2723 = vpack.c.b16 %v2619, %v2618
    %2828 = vmatpush.bf16.msra.mxu0 %v2627
    %2829 = vmatpush.bf16.msra.mxu0 %v2626
    %2830 = vmatpush.bf16.msra.mxu0 %v2625
    %2831 = vmatpush.bf16.msra.mxu0 %v2624
    %2832 = vmatpush.bf16.msra.mxu0 %v2623
    %2833 = vmatpush.bf16.msra.mxu0 %v2622
    %2834 = vmatpush.bf16.msra.mxu0 %v2621
    %2835 = vmatpush.bf16.msra.mxu0 %v2620
    %2836 = vmatmul.bf16.gmra.mxu0 %v2152
    %v2837 = vpop.f32.mrf.mxu0
    %v2838 = vadd.f32 %v2070, %v2837
    %v2839 = vpop.f32.mrf.mxu0
    %v2840 = vadd.f32 %v2070, %v2839
    %2841 = vmatmul.bf16.gmra.mxu0 %v2165
    %v2842 = vpop.f32.mrf.mxu0
    %v2843 = vadd.f32 %v2070, %v2842
    %v2844 = vpop.f32.mrf.mxu0
    %v2845 = vadd.f32 %v2070, %v2844
    %2846 = vdwg.mxu0
    %2847 = vmatpush.bf16.msra.mxu0 %v2635
    %2848 = vmatpush.bf16.msra.mxu0 %v2634
    %2849 = vmatpush.bf16.msra.mxu0 %v2633
    %2850 = vmatpush.bf16.msra.mxu0 %v2632
    %2851 = vmatpush.bf16.msra.mxu0 %v2631
    %2852 = vmatpush.bf16.msra.mxu0 %v2630
    %2853 = vmatpush.bf16.msra.mxu0 %v2629
    %2854 = vmatpush.bf16.msra.mxu0 %v2628
    %2855 = vmatmul.bf16.gmra.mxu0 %v2153
    %v2856 = vpop.f32.mrf.mxu0
    %v2857 = vadd.f32 %v2838, %v2856
    %v2858 = vpop.f32.mrf.mxu0
    %v2859 = vadd.f32 %v2840, %v2858
    %2860 = vmatmul.bf16.gmra.mxu0 %v2166
    %v2861 = vpop.f32.mrf.mxu0
    %v2862 = vadd.f32 %v2843, %v2861
    %v2863 = vpop.f32.mrf.mxu0
    %v2864 = vadd.f32 %v2845, %v2863
    %2865 = vdwg.mxu0
    %2866 = vmatpush.bf16.msra.mxu0 %v2643
    %2867 = vmatpush.bf16.msra.mxu0 %v2642
    %2868 = vmatpush.bf16.msra.mxu0 %v2641
    %2869 = vmatpush.bf16.msra.mxu0 %v2640
    %2870 = vmatpush.bf16.msra.mxu0 %v2639
    %2871 = vmatpush.bf16.msra.mxu0 %v2638
    %2872 = vmatpush.bf16.msra.mxu0 %v2637
    %2873 = vmatpush.bf16.msra.mxu0 %v2636
    %2874 = vmatmul.bf16.gmra.mxu0 %v2154
    %v2875 = vpop.f32.mrf.mxu0
    %v2876 = vadd.f32 %v2857, %v2875
    %v2877 = vpop.f32.mrf.mxu0
    %v2878 = vadd.f32 %v2859, %v2877
    %2879 = vmatmul.bf16.gmra.mxu0 %v2167
    %v2880 = vpop.f32.mrf.mxu0
    %v2881 = vadd.f32 %v2862, %v2880
    %v2882 = vpop.f32.mrf.mxu0
    %v2883 = vadd.f32 %v2864, %v2882
    %2884 = vdwg.mxu0
    %2885 = vmatpush.bf16.msra.mxu0 %v2651
    %2886 = vmatpush.bf16.msra.mxu0 %v2650
    %2887 = vmatpush.bf16.msra.mxu0 %v2649
    %2888 = vmatpush.bf16.msra.mxu0 %v2648
    %2889 = vmatpush.bf16.msra.mxu0 %v2647
    %2890 = vmatpush.bf16.msra.mxu0 %v2646
    %2891 = vmatpush.bf16.msra.mxu0 %v2645
    %2892 = vmatpush.bf16.msra.mxu0 %v2644
    %2893 = vmatmul.bf16.gmra.mxu0 %v2155
    %v2894 = vpop.f32.mrf.mxu0
    %v2895 = vadd.f32 %v2876, %v2894
    %v2896 = vpop.f32.mrf.mxu0
    %v2897 = vadd.f32 %v2878, %v2896
    %2898 = vmatmul.bf16.gmra.mxu0 %v2168
    %v2899 = vpop.f32.mrf.mxu0
    %v2900 = vadd.f32 %v2881, %v2899
    %v2901 = vpop.f32.mrf.mxu0
    %v2902 = vadd.f32 %v2883, %v2901
    %2903 = vdwg.mxu0
    %2904 = vmatpush.bf16.msra.mxu0 %v2659
    %2905 = vmatpush.bf16.msra.mxu0 %v2658
    %2906 = vmatpush.bf16.msra.mxu0 %v2657
    %2907 = vmatpush.bf16.msra.mxu0 %v2656
    %2908 = vmatpush.bf16.msra.mxu0 %v2655
    %2909 = vmatpush.bf16.msra.mxu0 %v2654
    %2910 = vmatpush.bf16.msra.mxu0 %v2653
    %2911 = vmatpush.bf16.msra.mxu0 %v2652
    %2912 = vmatmul.bf16.gmra.mxu0 %v2156
    %v2913 = vpop.f32.mrf.mxu0
    %v2914 = vadd.f32 %v2895, %v2913
    %v2915 = vpop.f32.mrf.mxu0
    %v2916 = vadd.f32 %v2897, %v2915
    %2917 = vmatmul.bf16.gmra.mxu0 %v2169
    %v2918 = vpop.f32.mrf.mxu0
    %v2919 = vadd.f32 %v2900, %v2918
    %v2920 = vpop.f32.mrf.mxu0
    %v2921 = vadd.f32 %v2902, %v2920
    %2922 = vdwg.mxu0
    %2923 = vmatpush.bf16.msra.mxu0 %v2667
    %2924 = vmatpush.bf16.msra.mxu0 %v2666
    %2925 = vmatpush.bf16.msra.mxu0 %v2665
    %2926 = vmatpush.bf16.msra.mxu0 %v2664
    %2927 = vmatpush.bf16.msra.mxu0 %v2663
    %2928 = vmatpush.bf16.msra.mxu0 %v2662
    %2929 = vmatpush.bf16.msra.mxu0 %v2661
    %2930 = vmatpush.bf16.msra.mxu0 %v2660
    %2931 = vmatmul.bf16.gmra.mxu0 %v2157
    %v2932 = vpop.f32.mrf.mxu0
    %v2933 = vadd.f32 %v2914, %v2932
    %v2934 = vpop.f32.mrf.mxu0
    %v2935 = vadd.f32 %v2916, %v2934
    %2936 = vmatmul.bf16.gmra.mxu0 %v2170
    %v2937 = vpop.f32.mrf.mxu0
    %v2938 = vadd.f32 %v2919, %v2937
    %v2939 = vpop.f32.mrf.mxu0
    %v2940 = vadd.f32 %v2921, %v2939
    %2941 = vdwg.mxu0
    %2942 = vmatpush.bf16.msra.mxu0 %v2675
    %2943 = vmatpush.bf16.msra.mxu0 %v2674
    %2944 = vmatpush.bf16.msra.mxu0 %v2673
    %2945 = vmatpush.bf16.msra.mxu0 %v2672
    %2946 = vmatpush.bf16.msra.mxu0 %v2671
    %2947 = vmatpush.bf16.msra.mxu0 %v2670
    %2948 = vmatpush.bf16.msra.mxu0 %v2669
    %2949 = vmatpush.bf16.msra.mxu0 %v2668
    %2950 = vmatmul.bf16.gmra.mxu0 %v2158
    %v2951 = vpop.f32.mrf.mxu0
    %v2952 = vadd.f32 %v2933, %v2951
    %v2953 = vpop.f32.mrf.mxu0
    %v2954 = vadd.f32 %v2935, %v2953
    %2955 = vmatmul.bf16.gmra.mxu0 %v2171
    %v2956 = vpop.f32.mrf.mxu0
    %v2957 = vadd.f32 %v2938, %v2956
    %v2958 = vpop.f32.mrf.mxu0
    %v2959 = vadd.f32 %v2940, %v2958
    %2960 = vdwg.mxu0
    %2961 = vmatpush.bf16.msra.mxu0 %v2683
    %2962 = vmatpush.bf16.msra.mxu0 %v2682
    %2963 = vmatpush.bf16.msra.mxu0 %v2681
    %2964 = vmatpush.bf16.msra.mxu0 %v2680
    %2965 = vmatpush.bf16.msra.mxu0 %v2679
    %2966 = vmatpush.bf16.msra.mxu0 %v2678
    %2967 = vmatpush.bf16.msra.mxu0 %v2677
    %2968 = vmatpush.bf16.msra.mxu0 %v2676
    %2969 = vmatmul.bf16.gmra.mxu0 %v2159
    %v2970 = vpop.f32.mrf.mxu0
    %v2971 = vadd.f32 %v2952, %v2970
    %v2972 = vpop.f32.mrf.mxu0
    %v2973 = vadd.f32 %v2954, %v2972
    %2974 = vmatmul.bf16.gmra.mxu0 %v2172
    %v2975 = vpop.f32.mrf.mxu0
    %v2976 = vadd.f32 %v2957, %v2975
    %v2977 = vpop.f32.mrf.mxu0
    %v2978 = vadd.f32 %v2959, %v2977
    %2979 = vdwg.mxu0
    %2980 = vmatpush.bf16.msra.mxu0 %v2691
    %2981 = vmatpush.bf16.msra.mxu0 %v2690
    %2982 = vmatpush.bf16.msra.mxu0 %v2689
    %2983 = vmatpush.bf16.msra.mxu0 %v2688
    %2984 = vmatpush.bf16.msra.mxu0 %v2687
    %2985 = vmatpush.bf16.msra.mxu0 %v2686
    %2986 = vmatpush.bf16.msra.mxu0 %v2685
    %2987 = vmatpush.bf16.msra.mxu0 %v2684
    %2988 = vmatmul.bf16.gmra.mxu0 %v2160
    %v2989 = vpop.f32.mrf.mxu0
    %v2990 = vadd.f32 %v2971, %v2989
    %v2991 = vpop.f32.mrf.mxu0
    %v2992 = vadd.f32 %v2973, %v2991
    %2993 = vmatmul.bf16.gmra.mxu0 %v2173
    %v2994 = vpop.f32.mrf.mxu0
    %v2995 = vadd.f32 %v2976, %v2994
    %v2996 = vpop.f32.mrf.mxu0
    %v2997 = vadd.f32 %v2978, %v2996
    %2998 = vdwg.mxu0
    %2999 = vmatpush.bf16.msra.mxu0 %v2699
    %3000 = vmatpush.bf16.msra.mxu0 %v2698
    %3001 = vmatpush.bf16.msra.mxu0 %v2697
    %3002 = vmatpush.bf16.msra.mxu0 %v2696
    %3003 = vmatpush.bf16.msra.mxu0 %v2695
    %3004 = vmatpush.bf16.msra.mxu0 %v2694
    %3005 = vmatpush.bf16.msra.mxu0 %v2693
    %3006 = vmatpush.bf16.msra.mxu0 %v2692
    %3007 = vmatmul.bf16.gmra.mxu0 %v2161
    %v3008 = vpop.f32.mrf.mxu0
    %v3009 = vadd.f32 %v2990, %v3008
    %v3010 = vpop.f32.mrf.mxu0
    %v3011 = vadd.f32 %v2992, %v3010
    %3012 = vmatmul.bf16.gmra.mxu0 %v2174
    %v3013 = vpop.f32.mrf.mxu0
    %v3014 = vadd.f32 %v2995, %v3013
    %v3015 = vpop.f32.mrf.mxu0
    %v3016 = vadd.f32 %v2997, %v3015
    %3017 = vdwg.mxu0
    %3018 = vmatpush.bf16.msra.mxu0 %v2707
    %3019 = vmatpush.bf16.msra.mxu0 %v2706
    %3020 = vmatpush.bf16.msra.mxu0 %v2705
    %3021 = vmatpush.bf16.msra.mxu0 %v2704
    %3022 = vmatpush.bf16.msra.mxu0 %v2703
    %3023 = vmatpush.bf16.msra.mxu0 %v2702
    %3024 = vmatpush.bf16.msra.mxu0 %v2701
    %3025 = vmatpush.bf16.msra.mxu0 %v2700
    %3026 = vmatmul.bf16.gmra.mxu0 %v2162
    %v3027 = vpop.f32.mrf.mxu0
    %v3028 = vadd.f32 %v3009, %v3027
    %v3029 = vpop.f32.mrf.mxu0
    %v3030 = vadd.f32 %v3011, %v3029
    %3031 = vmatmul.bf16.gmra.mxu0 %v2175
    %v3032 = vpop.f32.mrf.mxu0
    %v3033 = vadd.f32 %v3014, %v3032
    %v3034 = vpop.f32.mrf.mxu0
    %v3035 = vadd.f32 %v3016, %v3034
    %3036 = vdwg.mxu0
    %3037 = vmatpush.bf16.msra.mxu0 %v2715
    %3038 = vmatpush.bf16.msra.mxu0 %v2714
    %3039 = vmatpush.bf16.msra.mxu0 %v2713
    %3040 = vmatpush.bf16.msra.mxu0 %v2712
    %3041 = vmatpush.bf16.msra.mxu0 %v2711
    %3042 = vmatpush.bf16.msra.mxu0 %v2710
    %3043 = vmatpush.bf16.msra.mxu0 %v2709
    %3044 = vmatpush.bf16.msra.mxu0 %v2708
    %3045 = vmatmul.bf16.gmra.mxu0 %v2163
    %v3046 = vpop.f32.mrf.mxu0
    %v3047 = vadd.f32 %v3028, %v3046
    %v3048 = vpop.f32.mrf.mxu0
    %v3049 = vadd.f32 %v3030, %v3048
    %3050 = vmatmul.bf16.gmra.mxu0 %v2176
    %v3051 = vpop.f32.mrf.mxu0
    %v3052 = vadd.f32 %v3033, %v3051
    %v3053 = vpop.f32.mrf.mxu0
    %v3054 = vadd.f32 %v3035, %v3053
    %3055 = vdwg.mxu0
    %3056 = vmatpush.bf16.msra.mxu0 %v2723
    %3057 = vmatpush.bf16.msra.mxu0 %v2722
    %3058 = vmatpush.bf16.msra.mxu0 %v2721
    %3059 = vmatpush.bf16.msra.mxu0 %v2720
    %3060 = vmatpush.bf16.msra.mxu0 %v2719
    %3061 = vmatpush.bf16.msra.mxu0 %v2718
    %3062 = vmatpush.bf16.msra.mxu0 %v2717
    %3063 = vmatpush.bf16.msra.mxu0 %v2716
    %3064 = vmatmul.bf16.gmra.mxu0 %v2164
    %v3065 = vpop.f32.mrf.mxu0
    %v3066 = vadd.f32 %v3047, %v3065
    %v3067 = vpop.f32.mrf.mxu0
    %v3068 = vadd.f32 %v3049, %v3067
    %3069 = vmatmul.bf16.gmra.mxu0 %v2177
    %v3070 = vpop.f32.mrf.mxu0
    %v3071 = vadd.f32 %v3052, %v3070
    %v3072 = vpop.f32.mrf.mxu0
    %v3073 = vadd.f32 %v3054, %v3072
    %3074 = vdwg.mxu0
    %v3075 = vld [vmem:[%s6] sm:$0x1]
    %vm3076 = vcmp.ge.f32.partialorder %v3066, 0.0
    %vm3077 = vcmp.ge.f32.partialorder %v3068, 0.0
    %vm3078 = vcmp.ge.f32.partialorder %v3071, 0.0
    %vm3079 = vcmp.ge.f32.partialorder %v3073, 0.0
    %v3081 = vperm.slane %v3075, 0
    %v3083 = vmul.f32 %v3081, %v3066
    %v3084 = vmul.f32 %v3081, %v3068
    %v3085 = vmul.f32 %v3081, %v3071
    %v3086 = vmul.f32 %v3081, %v3073
    %v3087 = vsel %vm3076, %v3066, %v3083
    %v3088 = vsel %vm3077, %v3068, %v3084
    %v3089 = vsel %vm3078, %v3071, %v3085
    %v3090 = vsel %vm3079, %v3073, %v3086
    %v3091 = vadd.f32 %v3087, %v127
    %v3092 = vadd.f32 %v3088, %v128
    %v3093 = vadd.f32 %v3089, %v129
    %v3094 = vadd.f32 %v3090, %v130
    %3095 = vst [vmem:[#allocation9] sm:$0xff] %v3091
    %3096 = vst [vmem:[#allocation9 + $0x8] sm:$0xff] %v3092
    %3097 = vst [vmem:[#allocation9 + $0x10] sm:$0xff] %v3093
    %3098 = vst [vmem:[#allocation9 + $0x18] sm:$0xff] %v3094
    // Predicated region
    $region42: #{tpu_custom_call.1} parent=1 // pred_check
      _
    $region43: #{tpu_custom_call.1} parent=1 // pred_check_branch
      %3100 = sbr.rel (0) target = $region45
    $region44: #{tpu_custom_call.1} parent=1 // pred_region
      %3102 = vsyncadd [#allocation5], 0
      %s3103 = sshll.u32 [#allocation9], 4
      %s3104 = int_to_ptr.vmem [resolvable:$true] %s3103
      %s3105 = sshll.u32 %s7, 4
      %s3106 = int_to_ptr.hbm [resolvable:$true] %s3105
      %3111 = dma.vmem_to_hbm [thread:$0]  %s3104, 512, %s3106, [#allocation5], 128, 128, 8
    $region45: #{tpu_custom_call.1} parent=1 // pred_fallthru
      _
    // Predicated region
    $region46: #{tpu_custom_call.1} parent=1 // pred_check
      _
    $region47: #{tpu_custom_call.1} parent=1 // pred_check_branch
      %3113 = sbr.rel (0) target = $region49
    $region48: #{tpu_custom_call.1} parent=1 // pred_region
      %3115 = dma.done [#allocation5], 512
    $region49: #{tpu_custom_call.1} parent=1 // pred_fallthru
      _
    %3116 = vsyncpa [#allocation4], 1
    %3117 = vsyncpa [#allocation7], 1
    %3118 = vsyncpa [#allocation5], 1

</llo_original>
